<compile_context>
chip_gen: v7x
topology: tpu7x:2x2x1
jax: 0.10.0
libtpu: 0.0.40
codegen_flags: <defaults>
</compile_context>

<pallas_src>
import functools
import math

import jax
import jax.numpy as jnp
from jax import lax
from jax.experimental import pallas as pl
from jax.experimental.pallas import tpu as pltpu


LANE = 128                       # channel dims are zero-padded to this
_VMEM_LIMIT = 32 * 1024 * 1024   # raise scoped VMEM above v5e's 16 MiB default


def _round_up(x, m):
    return (x + m - 1) // m * m


def _largest_divisor_leq(n, cap):
    for d in range(min(n, cap), 0, -1):
        if n % d == 0:
            return d
    return 1


# ----------------------------- fused kernels ------------------------------- #

def _fused_s1_kernel(x_ref, w1_ref, b1_ref, wdw_ref, b2_ref, w2_ref, b3_ref,
                     o_ref, h_ref, *, th, h_img, w_img, use_res):
    """stride=1 fused InvertedResidual.  Grid = (batch, output-row tile)."""
    th_in = th + 2                        # rows needed incl. 1-px halo
    row0 = pl.program_id(1) * th          # first padded input row of the tile
    wp = x_ref.shape[2]                   # padded width (multiple of 8)
    wo = w_img                            # stride 1 -> output width == W

    w1 = w1_ref[...]                      # (Cin_p, Hd_p), BN1 scale folded in
    b1 = b1_ref[...]                      # (1, Hd_p)
    b2 = b2_ref[...]                      # (1, Hd_p)
    w2 = w2_ref[...]                      # (Hd_p, Cout_p), BN3 scale folded in
    b3 = b3_ref[...]                      # (1, Cout_p)
    taps = [wdw_ref[k] for k in range(9)]  # 3x3 dw taps (1, Hd_p), BN2 folded
    hd_p = b2.shape[-1]

    # interior mask along padded width (real pixels are cols 1..W)
    col = lax.broadcasted_iota(jnp.int32, (wp, 1), 0)
    col_ok = jnp.logical_and(col >= 1, col <= w_img)

    # Stage 1: 1x1 expand + BN + ReLU6, row by row, kept in VMEM scratch.
    # Padded positions are forced to 0 (the depthwise zero-padding).
    for i in range(th_in):
        gr = row0 + i                                     # padded-row coord
        xrow = x_ref[0, gr]                               # (wp, Cin_p)
        hrow = jnp.dot(xrow, w1, preferred_element_type=jnp.float32) + b1
        hrow = jnp.clip(hrow, 0.0, 6.0)
        row_ok = jnp.logical_and(gr >= 1, gr <= h_img)
        hrow = jnp.where(jnp.logical_and(col_ok, row_ok), hrow, 0.0)
        h_ref[i] = hrow

    # Stages 2+3: 3x3 depthwise + BN + ReLU6, then 1x1 project + BN (+res),
    # one output row at a time.  All slices are static & unit-stride.
    for t in range(th):
        acc = jnp.zeros((wo, hd_p), jnp.float32)
        for kh in range(3):
            hrow = h_ref[t + kh]                          # (wp, Hd_p)
            for kw in range(3):
                acc = acc + hrow[kw:kw + wo, :] * taps[kh * 3 + kw]
        acc = jnp.clip(acc + b2, 0.0, 6.0)
        y = jnp.dot(acc, w2, preferred_element_type=jnp.float32) + b3
        if use_res:
            y = y + x_ref[0, row0 + 1 + t, pl.ds(1, wo), :].astype(jnp.float32)
        o_ref[0, t] = y.astype(o_ref.dtype)


def _fused_s2_kernel(xe_ref, xo_ref, w1_ref, b1_ref, wdw_ref, b2_ref, w2_ref,
                     b3_ref, o_ref, he_ref, hod_ref, *, th, h_img, w_img, wo):
    """stride=2 fused InvertedResidual; even/odd column phases from wrapper."""
    th_in = 2 * th + 1
    row0 = pl.program_id(1) * (2 * th)

    w1 = w1_ref[...]
    b1 = b1_ref[...]
    b2 = b2_ref[...]
    w2 = w2_ref[...]
    b3 = b3_ref[...]
    taps = [wdw_ref[k] for k in range(9)]
    hd_p = b2.shape[-1]

    we = xe_ref.shape[2]
    wod = xo_ref.shape[2]
    # even phase index e holds padded col 2e; odd phase index o holds 2o+1;
    # real pixels are padded cols 1..W.
    ce = lax.broadcasted_iota(jnp.int32, (we, 1), 0)
    co = lax.broadcasted_iota(jnp.int32, (wod, 1), 0)
    e_ok = jnp.logical_and(ce >= 1, ce <= w_img // 2)
    o_ok = co <= (w_img - 1) // 2

    # Stage 1: expand both column phases into VMEM.
    for i in range(th_in):
        gr = row0 + i
        row_ok = jnp.logical_and(gr >= 1, gr <= h_img)
        for x_ref, h_ref, c_ok in ((xe_ref, he_ref, e_ok),
                                   (xo_ref, hod_ref, o_ok)):
            xrow = x_ref[0, gr]
            hrow = jnp.dot(xrow, w1, preferred_element_type=jnp.float32) + b1
            hrow = jnp.clip(hrow, 0.0, 6.0)
            hrow = jnp.where(jnp.logical_and(c_ok, row_ok), hrow, 0.0)
            h_ref[i] = hrow

    # Stages 2+3: output col j needs padded cols 2j (even j), 2j+1 (odd j),
    # 2j+2 (even j+1); output row t needs padded rows 2t+kh.
    for t in range(th):
        acc = jnp.zeros((wo, hd_p), jnp.float32)
        for kh in range(3):
            he = he_ref[2 * t + kh]                       # (we, Hd_p)
            hodd = hod_ref[2 * t + kh]                    # (wod, Hd_p)
            acc = acc + he[0:wo, :] * taps[kh * 3 + 0]
            acc = acc + hodd[0:wo, :] * taps[kh * 3 + 1]
            acc = acc + he[1:wo + 1, :] * taps[kh * 3 + 2]
        acc = jnp.clip(acc + b2, 0.0, 6.0)
        y = jnp.dot(acc, w2, preferred_element_type=jnp.float32) + b3
        o_ref[0, t] = y.astype(o_ref.dtype)


# ------------------------------ kernel wrappers ----------------------------- #

def _const_spec(shape):
    return pl.BlockSpec(shape, lambda b, r: (0,) * len(shape))


def _weight_specs(cin_p, hd_p, cout_p):
    return [
        _const_spec((cin_p, hd_p)),    # w1 (expand, BN1 folded)
        _const_spec((1, hd_p)),        # b1
        _const_spec((9, 1, hd_p)),     # depthwise taps (BN2 folded)
        _const_spec((1, hd_p)),        # b2
        _const_spec((hd_p, cout_p)),   # w2 (project, BN3 folded)
        _const_spec((1, cout_p)),      # b3
    ]


def _run_stride1(x_pad, params, *, h_img, w_img, use_res):
    w1f, b1, wdwf, b2, w2f, b3 = params
    n, hp, wp, cin_p = x_pad.shape
    hd_p = w1f.shape[1]
    cout_p = w2f.shape[1]
    ho, wo = h_img, w_img
    th = _largest_divisor_leq(ho, 8)
    kernel = functools.partial(_fused_s1_kernel, th=th, h_img=h_img,
                               w_img=w_img, use_res=use_res)
    return pl.pallas_call(
        kernel,
        grid=(n, ho // th),
        in_specs=[pl.BlockSpec((1, hp, wp, cin_p), lambda b, r: (b, 0, 0, 0))]
                 + _weight_specs(cin_p, hd_p, cout_p),
        out_specs=pl.BlockSpec((1, th, wo, cout_p), lambda b, r: (b, r, 0, 0)),
        out_shape=jax.ShapeDtypeStruct((n, ho, wo, cout_p), x_pad.dtype),
        scratch_shapes=[pltpu.VMEM((th + 2, wp, hd_p), jnp.float32)],
        compiler_params=pltpu.CompilerParams(
            dimension_semantics=("parallel", "parallel"),
            vmem_limit_bytes=_VMEM_LIMIT),
    )(x_pad, *params)


def _run_stride2(x_even, x_odd, params, *, h_img, w_img):
    w1f, b1, wdwf, b2, w2f, b3 = params
    n, hp, we, cin_p = x_even.shape
    wod = x_odd.shape[2]
    hd_p = w1f.shape[1]
    cout_p = w2f.shape[1]
    ho = (h_img - 1) // 2 + 1
    wo = (w_img - 1) // 2 + 1
    th = _largest_divisor_leq(ho, 8)
    kernel = functools.partial(_fused_s2_kernel, th=th, h_img=h_img,
                               w_img=w_img, wo=wo)
    return pl.pallas_call(
        kernel,
        grid=(n, ho // th),
        in_specs=[pl.BlockSpec((1, hp, we, cin_p), lambda b, r: (b, 0, 0, 0)),
                  pl.BlockSpec((1, hp, wod, cin_p), lambda b, r: (b, 0, 0, 0))]
                 + _weight_specs(cin_p, hd_p, cout_p),
        out_specs=pl.BlockSpec((1, th, wo, cout_p), lambda b, r: (b, r, 0, 0)),
        out_shape=jax.ShapeDtypeStruct((n, ho, wo, cout_p), x_even.dtype),
        scratch_shapes=[pltpu.VMEM((2 * th + 1, we, hd_p), jnp.float32),
                        pltpu.VMEM((2 * th + 1, wod, hd_p), jnp.float32)],
        compiler_params=pltpu.CompilerParams(
            dimension_semantics=("parallel", "parallel"),
            vmem_limit_bytes=_VMEM_LIMIT),
    )(x_even, x_odd, *params)


# ------------------------------ the module ---------------------------------- #

class InvertedResidualPallas:
    def __init__(self, inp, oup, stride, expand_ratio, key, dtype=jnp.float32):
        assert stride in (1, 2)
        self.inp, self.oup, self.stride = inp, oup, stride
        hidden = int(round(inp * expand_ratio))
        self.hidden = hidden
        self.use_res_connect = (stride == 1 and inp == oup)

        ks = jax.random.split(key, 15)
        eps = 1e-5

        # Conv weights in kernel-friendly layouts:
        #   pw1: (Cin, hidden), dw: (3,3,hidden), pw2: (hidden, Cout)
        self.w1 = (jax.random.normal(ks[0], (inp, hidden), dtype)
                   * math.sqrt(2.0 / inp))
        self.w_dw = (jax.random.normal(ks[1], (3, 3, hidden), dtype)
                     * math.sqrt(2.0 / 9.0))
        self.w2 = (jax.random.normal(ks[2], (hidden, oup), dtype)
                   * math.sqrt(2.0 / hidden))

        def bn(kg, kb, km, kv, c):
            gamma = 1.0 + 0.1 * jax.random.normal(kg, (c,), dtype)
            beta = 0.1 * jax.random.normal(kb, (c,), dtype)
            mean = 0.1 * jax.random.normal(km, (c,), dtype)
            var = jax.nn.softplus(jax.random.normal(kv, (c,), dtype)) + 0.5
            scale = gamma / jnp.sqrt(var + eps)
            bias = beta - mean * scale
            return scale, bias

        self.s1, self.b1 = bn(ks[3], ks[4], ks[5], ks[6], hidden)
        self.s2, self.b2 = bn(ks[7], ks[8], ks[9], ks[10], hidden)
        self.s3, self.b3 = bn(ks[11], ks[12], ks[13], ks[14], oup)

        # Kernel-side parameters: BN scales folded into the conv weights and
        # channel dims zero-padded to 128 lanes (lane-dense loads/stores and
        # full-width MXU K/N dims).
        self.cin_p = _round_up(inp, LANE)
        self.hd_p = _round_up(hidden, LANE)
        self.cout_p = _round_up(oup, LANE)

        w1f = jnp.zeros((self.cin_p, self.hd_p), dtype)
        w1f = w1f.at[:inp, :hidden].set(self.w1 * self.s1[None, :])
        b1p = jnp.zeros((1, self.hd_p), dtype).at[0, :hidden].set(self.b1)

        wdw_f = (self.w_dw * self.s2[None, None, :]).reshape(9, hidden)
        wdwp = jnp.zeros((9, 1, self.hd_p), dtype).at[:, 0, :hidden].set(wdw_f)
        b2p = jnp.zeros((1, self.hd_p), dtype).at[0, :hidden].set(self.b2)

        w2f = jnp.zeros((self.hd_p, self.cout_p), dtype)
        w2f = w2f.at[:hidden, :oup].set(self.w2 * self.s3[None, :])
        b3p = jnp.zeros((1, self.cout_p), dtype).at[0, :oup].set(self.b3)

        self._params = (w1f, b1p, wdwp, b2p, w2f, b3p)

    def __call__(self, x_nchw):
        n, c, h, w = x_nchw.shape
        assert c == self.inp
        # NCHW -> NHWC; 1-px spatial halo + channel pad on the SMALL input only.
        # TODO(synk): in a full network keep activations NHWC / channel-padded
        # end-to-end instead of transposing and padding at every block edge.
        x = jnp.transpose(x_nchw, (0, 2, 3, 1))
        wp = _round_up(w + 2, 8)
        x_pad = jnp.pad(x, ((0, 0), (1, 1), (1, wp - w - 1),
                            (0, self.cin_p - c)))

        if self.stride == 1:
            out_p = _run_stride1(x_pad, self._params, h_img=h, w_img=w,
                                 use_res=self.use_res_connect)
        else:
            x_even = x_pad[:, :, 0::2, :]    # padded cols 0,2,4,...
            x_odd = x_pad[:, :, 1::2, :]     # padded cols 1,3,5,...
            out_p = _run_stride2(x_even, x_odd, self._params,
                                 h_img=h, w_img=w)

        out = out_p[:, :, :, :self.oup]
        return jnp.transpose(out, (0, 3, 1, 2))


# ----------------------------- pure-JAX reference --------------------------- #

def reference(x_nchw, mod):
    x = jnp.transpose(x_nchw, (0, 2, 3, 1))
    dn = ("NHWC", "HWIO", "NHWC")
    y = lax.conv_general_dilated(x, mod.w1.reshape(1, 1, mod.inp, mod.hidden),
                                 (1, 1), "VALID", dimension_numbers=dn)
    y = jnp.clip(y * mod.s1 + mod.b1, 0.0, 6.0)
    y = lax.conv_general_dilated(y, mod.w_dw.reshape(3, 3, 1, mod.hidden),
                                 (mod.stride, mod.stride), ((1, 1), (1, 1)),
                                 dimension_numbers=dn,
                                 feature_group_count=mod.hidden)
    y = jnp.clip(y * mod.s2 + mod.b2, 0.0, 6.0)
    y = lax.conv_general_dilated(y, mod.w2.reshape(1, 1, mod.hidden, mod.oup),
                                 (1, 1), "VALID", dimension_numbers=dn)
    y = y * mod.s3 + mod.b3
    if mod.use_res_connect:
        y = y + x
    return jnp.transpose(y, (0, 3, 1, 2))


if __name__ == "__main__":
    key = jax.random.PRNGKey(0)
    kx, kp1, kp2 = jax.random.split(key, 3)
    x = jax.random.normal(kx, (2, 4, 16, 16), jnp.float32)  # NCHW like PyTorch

    # stride=1, inp==oup -> residual path
    mod1 = InvertedResidualPallas(inp=4, oup=4, stride=1, expand_ratio=6,
                                  key=kp1)
    out1 = jax.block_until_ready(mod1(x))
    ref1 = reference(x, mod1)
    assert out1.shape == (2, 4, 16, 16), out1.shape
    assert jnp.allclose(out1, ref1, atol=2e-4, rtol=2e-4), \
        float(jnp.max(jnp.abs(out1 - ref1)))

    # stride=2, channel change -> no residual, even/odd phase path
    mod2 = InvertedResidualPallas(inp=4, oup=8, stride=2, expand_ratio=6,
                                  key=kp2)
    out2 = jax.block_until_ready(mod2(x))
    ref2 = reference(x, mod2)
    assert out2.shape == (2, 8, 8, 8), out2.shape
    assert jnp.allclose(out2, ref2, atol=2e-4, rtol=2e-4), \
        float(jnp.max(jnp.abs(out2 - ref2)))

    print("KERNEL_OK")
</pallas_src>

<mosaic_0001>
module attributes {stable_mosaic.version = 11 : i64} {
  func.func @_fused_s1_kernel(%arg0: i32, %arg1: i32, %arg2: memref<1x18x24x128xf32, #tpu.memory_space<vmem>>, %arg3: memref<128x128xf32, #tpu.memory_space<vmem>>, %arg4: memref<1x128xf32, #tpu.memory_space<vmem>>, %arg5: memref<9x1x128xf32, #tpu.memory_space<vmem>>, %arg6: memref<1x128xf32, #tpu.memory_space<vmem>>, %arg7: memref<128x128xf32, #tpu.memory_space<vmem>>, %arg8: memref<1x128xf32, #tpu.memory_space<vmem>>, %arg9: memref<1x8x16x128xf32, #tpu.memory_space<vmem>>, %arg10: memref<10x24x128xf32, #tpu.memory_space<vmem>>) attributes {dimension_semantics = [#tpu.dimension_semantics<parallel>, #tpu.dimension_semantics<parallel>], iteration_bounds = array<i64: 2, 2>, scalar_prefetch = 0 : i64, scratch_operands = 1 : i64, tpu.core_type = #tpu.core_type<tc>, window_params = [{transform_indices = @transform_0, window_bounds = array<i64: 1, 18, 24, 128>}, {pipeline_mode = #tpu.pipeline_mode<synchronous>, transform_indices = @transform_1, window_bounds = array<i64: 128, 128>}, {pipeline_mode = #tpu.pipeline_mode<synchronous>, transform_indices = @transform_2, window_bounds = array<i64: 1, 128>}, {pipeline_mode = #tpu.pipeline_mode<synchronous>, transform_indices = @transform_3, window_bounds = array<i64: 9, 1, 128>}, {pipeline_mode = #tpu.pipeline_mode<synchronous>, transform_indices = @transform_4, window_bounds = array<i64: 1, 128>}, {pipeline_mode = #tpu.pipeline_mode<synchronous>, transform_indices = @transform_5, window_bounds = array<i64: 128, 128>}, {pipeline_mode = #tpu.pipeline_mode<synchronous>, transform_indices = @transform_6, window_bounds = array<i64: 1, 128>}, {transform_indices = @transform_7, window_bounds = array<i64: 1, 8, 16, 128>}]} {
    %c8_i32 = arith.constant 8 : i32
    %0 = arith.muli %arg1, %c8_i32 : i32
    %c0 = arith.constant 0 : index
    %c0_0 = arith.constant 0 : index
    %1 = vector.load %arg3[%c0, %c0_0] : memref<128x128xf32, #tpu.memory_space<vmem>>, vector<128x128xf32>
    %c0_1 = arith.constant 0 : index
    %c0_2 = arith.constant 0 : index
    %2 = vector.load %arg4[%c0_1, %c0_2] : memref<1x128xf32, #tpu.memory_space<vmem>>, vector<1x128xf32>
    %c0_3 = arith.constant 0 : index
    %c0_4 = arith.constant 0 : index
    %3 = vector.load %arg6[%c0_3, %c0_4] : memref<1x128xf32, #tpu.memory_space<vmem>>, vector<1x128xf32>
    %c0_5 = arith.constant 0 : index
    %c0_6 = arith.constant 0 : index
    %4 = vector.load %arg7[%c0_5, %c0_6] : memref<128x128xf32, #tpu.memory_space<vmem>>, vector<128x128xf32>
    %c0_7 = arith.constant 0 : index
    %c0_8 = arith.constant 0 : index
    %5 = vector.load %arg8[%c0_7, %c0_8] : memref<1x128xf32, #tpu.memory_space<vmem>>, vector<1x128xf32>
    %c0_9 = arith.constant 0 : index
    %c0_10 = arith.constant 0 : index
    %c0_11 = arith.constant 0 : index
    %6 = vector.load %arg5[%c0_9, %c0_10, %c0_11] : memref<9x1x128xf32, #tpu.memory_space<vmem>>, vector<1x1x128xf32>
    %7 = vector.shape_cast %6 : vector<1x1x128xf32> to vector<1x128xf32>
    %c1 = arith.constant 1 : index
    %c0_12 = arith.constant 0 : index
    %c0_13 = arith.constant 0 : index
    %8 = vector.load %arg5[%c1, %c0_12, %c0_13] : memref<9x1x128xf32, #tpu.memory_space<vmem>>, vector<1x1x128xf32>
    %9 = vector.shape_cast %8 : vector<1x1x128xf32> to vector<1x128xf32>
    %c2 = arith.constant 2 : index
    %c0_14 = arith.constant 0 : index
    %c0_15 = arith.constant 0 : index
    %10 = vector.load %arg5[%c2, %c0_14, %c0_15] : memref<9x1x128xf32, #tpu.memory_space<vmem>>, vector<1x1x128xf32>
    %11 = vector.shape_cast %10 : vector<1x1x128xf32> to vector<1x128xf32>
    %c3 = arith.constant 3 : index
    %c0_16 = arith.constant 0 : index
    %c0_17 = arith.constant 0 : index
    %12 = vector.load %arg5[%c3, %c0_16, %c0_17] : memref<9x1x128xf32, #tpu.memory_space<vmem>>, vector<1x1x128xf32>
    %13 = vector.shape_cast %12 : vector<1x1x128xf32> to vector<1x128xf32>
    %c4 = arith.constant 4 : index
    %c0_18 = arith.constant 0 : index
    %c0_19 = arith.constant 0 : index
    %14 = vector.load %arg5[%c4, %c0_18, %c0_19] : memref<9x1x128xf32, #tpu.memory_space<vmem>>, vector<1x1x128xf32>
    %15 = vector.shape_cast %14 : vector<1x1x128xf32> to vector<1x128xf32>
    %c5 = arith.constant 5 : index
    %c0_20 = arith.constant 0 : index
    %c0_21 = arith.constant 0 : index
    %16 = vector.load %arg5[%c5, %c0_20, %c0_21] : memref<9x1x128xf32, #tpu.memory_space<vmem>>, vector<1x1x128xf32>
    %17 = vector.shape_cast %16 : vector<1x1x128xf32> to vector<1x128xf32>
    %c6 = arith.constant 6 : index
    %c0_22 = arith.constant 0 : index
    %c0_23 = arith.constant 0 : index
    %18 = vector.load %arg5[%c6, %c0_22, %c0_23] : memref<9x1x128xf32, #tpu.memory_space<vmem>>, vector<1x1x128xf32>
    %19 = vector.shape_cast %18 : vector<1x1x128xf32> to vector<1x128xf32>
    %c7 = arith.constant 7 : index
    %c0_24 = arith.constant 0 : index
    %c0_25 = arith.constant 0 : index
    %20 = vector.load %arg5[%c7, %c0_24, %c0_25] : memref<9x1x128xf32, #tpu.memory_space<vmem>>, vector<1x1x128xf32>
    %21 = vector.shape_cast %20 : vector<1x1x128xf32> to vector<1x128xf32>
    %c8 = arith.constant 8 : index
    %c0_26 = arith.constant 0 : index
    %c0_27 = arith.constant 0 : index
    %22 = vector.load %arg5[%c8, %c0_26, %c0_27] : memref<9x1x128xf32, #tpu.memory_space<vmem>>, vector<1x1x128xf32>
    %23 = vector.shape_cast %22 : vector<1x1x128xf32> to vector<1x128xf32>
    %24 = tpu.iota {dimensions = array<i32: 0>} : vector<24x1xi32>
    %c1_i32 = arith.constant 1 : i32
    %25 = vector.broadcast %c1_i32 : i32 to vector<24x1xi32>
    %26 = arith.cmpi sge, %24, %25 : vector<24x1xi32>
    %c16_i32 = arith.constant 16 : i32
    %27 = vector.broadcast %c16_i32 : i32 to vector<24x1xi32>
    %28 = arith.cmpi sle, %24, %27 : vector<24x1xi32>
    %29 = arith.andi %26, %28 : vector<24x1xi1>
    %c0_i32 = arith.constant 0 : i32
    %30 = arith.addi %0, %c0_i32 : i32
    %c0_28 = arith.constant 0 : index
    %31 = arith.index_cast %30 : i32 to index
    %c0_29 = arith.constant 0 : index
    %c0_30 = arith.constant 0 : index
    %32 = vector.load %arg2[%c0_28, %31, %c0_29, %c0_30] : memref<1x18x24x128xf32, #tpu.memory_space<vmem>>, vector<1x1x24x128xf32>
    %33 = vector.shape_cast %32 : vector<1x1x24x128xf32> to vector<24x128xf32>
    %cst = arith.constant dense<0.000000e+00> : vector<24x128xf32>
    %34 = tpu.matmul %33, %1, %cst {dimension_numbers = #tpu.dot_dimension_numbers<[1], [0], [0], [1], [0, 0, 1, 1], [], []>} : vector<24x128xf32>, vector<128x128xf32>, vector<24x128xf32> -> vector<24x128xf32>
    %35 = vector.broadcast %2 : vector<1x128xf32> to vector<24x128xf32>
    %36 = arith.addf %34, %35 : vector<24x128xf32>
    %cst_31 = arith.constant 0.000000e+00 : f32
    %cst_32 = arith.constant 6.000000e+00 : f32
    %37 = vector.broadcast %cst_31 : f32 to vector<24x128xf32>
    %38 = arith.maximumf %37, %36 : vector<24x128xf32>
    %39 = vector.broadcast %cst_32 : f32 to vector<24x128xf32>
    %40 = arith.minimumf %39, %38 : vector<24x128xf32>
    %c1_i32_33 = arith.constant 1 : i32
    %41 = arith.cmpi sge, %30, %c1_i32_33 : i32
    %c16_i32_34 = arith.constant 16 : i32
    %42 = arith.cmpi sle, %30, %c16_i32_34 : i32
    %43 = arith.andi %41, %42 : i1
    %44 = vector.broadcast %43 : i1 to vector<24x1xi1>
    %45 = arith.andi %29, %44 : vector<24x1xi1>
    %cst_35 = arith.constant 0.000000e+00 : f32
    %46 = vector.shape_cast %45 : vector<24x1xi1> to vector<24x1xi1>
    %47 = vector.broadcast %46 : vector<24x1xi1> to vector<24x128xi1>
    %48 = vector.broadcast %cst_35 : f32 to vector<24x128xf32>
    %49 = arith.select %47, %40, %48 : vector<24x128xi1>, vector<24x128xf32>
    %c0_36 = arith.constant 0 : index
    %c0_37 = arith.constant 0 : index
    %c0_38 = arith.constant 0 : index
    %50 = vector.load %arg10[%c0_36, %c0_37, %c0_38] : memref<10x24x128xf32, #tpu.memory_space<vmem>>, vector<1x24x128xf32>
    %51 = vector.shape_cast %50 : vector<1x24x128xf32> to vector<24x128xf32>
    %52 = vector.shape_cast %49 : vector<24x128xf32> to vector<1x24x128xf32>
    tpu.vector_store %arg10[%c0_36, %c0_37, %c0_38], %52 {strides = array<i32>} : memref<10x24x128xf32, #tpu.memory_space<vmem>>, vector<1x24x128xf32>,
    %c1_i32_39 = arith.constant 1 : i32
    %53 = arith.addi %0, %c1_i32_39 : i32
    %c0_40 = arith.constant 0 : index
    %54 = arith.index_cast %53 : i32 to index
    %c0_41 = arith.constant 0 : index
    %c0_42 = arith.constant 0 : index
    %55 = vector.load %arg2[%c0_40, %54, %c0_41, %c0_42] : memref<1x18x24x128xf32, #tpu.memory_space<vmem>>, vector<1x1x24x128xf32>
    %56 = vector.shape_cast %55 : vector<1x1x24x128xf32> to vector<24x128xf32>
    %cst_43 = arith.constant dense<0.000000e+00> : vector<24x128xf32>
    %57 = tpu.matmul %56, %1, %cst_43 {dimension_numbers = #tpu.dot_dimension_numbers<[1], [0], [0], [1], [0, 0, 1, 1], [], []>} : vector<24x128xf32>, vector<128x128xf32>, vector<24x128xf32> -> vector<24x128xf32>
    %58 = vector.broadcast %2 : vector<1x128xf32> to vector<24x128xf32>
    %59 = arith.addf %57, %58 : vector<24x128xf32>
    %cst_44 = arith.constant 0.000000e+00 : f32
    %cst_45 = arith.constant 6.000000e+00 : f32
    %60 = vector.broadcast %cst_44 : f32 to vector<24x128xf32>
    %61 = arith.maximumf %60, %59 : vector<24x128xf32>
    %62 = vector.broadcast %cst_45 : f32 to vector<24x128xf32>
    %63 = arith.minimumf %62, %61 : vector<24x128xf32>
    %c1_i32_46 = arith.constant 1 : i32
    %64 = arith.cmpi sge, %53, %c1_i32_46 : i32
    %c16_i32_47 = arith.constant 16 : i32
    %65 = arith.cmpi sle, %53, %c16_i32_47 : i32
    %66 = arith.andi %64, %65 : i1
    %67 = vector.broadcast %66 : i1 to vector<24x1xi1>
    %68 = arith.andi %29, %67 : vector<24x1xi1>
    %cst_48 = arith.constant 0.000000e+00 : f32
    %69 = vector.shape_cast %68 : vector<24x1xi1> to vector<24x1xi1>
    %70 = vector.broadcast %69 : vector<24x1xi1> to vector<24x128xi1>
    %71 = vector.broadcast %cst_48 : f32 to vector<24x128xf32>
    %72 = arith.select %70, %63, %71 : vector<24x128xi1>, vector<24x128xf32>
    %c1_49 = arith.constant 1 : index
    %c0_50 = arith.constant 0 : index
    %c0_51 = arith.constant 0 : index
    %73 = vector.load %arg10[%c1_49, %c0_50, %c0_51] : memref<10x24x128xf32, #tpu.memory_space<vmem>>, vector<1x24x128xf32>
    %74 = vector.shape_cast %73 : vector<1x24x128xf32> to vector<24x128xf32>
    %75 = vector.shape_cast %72 : vector<24x128xf32> to vector<1x24x128xf32>
    tpu.vector_store %arg10[%c1_49, %c0_50, %c0_51], %75 {strides = array<i32>} : memref<10x24x128xf32, #tpu.memory_space<vmem>>, vector<1x24x128xf32>,
    %c2_i32 = arith.constant 2 : i32
    %76 = arith.addi %0, %c2_i32 : i32
    %c0_52 = arith.constant 0 : index
    %77 = arith.index_cast %76 : i32 to index
    %c0_53 = arith.constant 0 : index
    %c0_54 = arith.constant 0 : index
    %78 = vector.load %arg2[%c0_52, %77, %c0_53, %c0_54] : memref<1x18x24x128xf32, #tpu.memory_space<vmem>>, vector<1x1x24x128xf32>
    %79 = vector.shape_cast %78 : vector<1x1x24x128xf32> to vector<24x128xf32>
    %cst_55 = arith.constant dense<0.000000e+00> : vector<24x128xf32>
    %80 = tpu.matmul %79, %1, %cst_55 {dimension_numbers = #tpu.dot_dimension_numbers<[1], [0], [0], [1], [0, 0, 1, 1], [], []>} : vector<24x128xf32>, vector<128x128xf32>, vector<24x128xf32> -> vector<24x128xf32>
    %81 = vector.broadcast %2 : vector<1x128xf32> to vector<24x128xf32>
    %82 = arith.addf %80, %81 : vector<24x128xf32>
    %cst_56 = arith.constant 0.000000e+00 : f32
    %cst_57 = arith.constant 6.000000e+00 : f32
    %83 = vector.broadcast %cst_56 : f32 to vector<24x128xf32>
    %84 = arith.maximumf %83, %82 : vector<24x128xf32>
    %85 = vector.broadcast %cst_57 : f32 to vector<24x128xf32>
    %86 = arith.minimumf %85, %84 : vector<24x128xf32>
    %c1_i32_58 = arith.constant 1 : i32
    %87 = arith.cmpi sge, %76, %c1_i32_58 : i32
    %c16_i32_59 = arith.constant 16 : i32
    %88 = arith.cmpi sle, %76, %c16_i32_59 : i32
    %89 = arith.andi %87, %88 : i1
    %90 = vector.broadcast %89 : i1 to vector<24x1xi1>
    %91 = arith.andi %29, %90 : vector<24x1xi1>
    %cst_60 = arith.constant 0.000000e+00 : f32
    %92 = vector.shape_cast %91 : vector<24x1xi1> to vector<24x1xi1>
    %93 = vector.broadcast %92 : vector<24x1xi1> to vector<24x128xi1>
    %94 = vector.broadcast %cst_60 : f32 to vector<24x128xf32>
    %95 = arith.select %93, %86, %94 : vector<24x128xi1>, vector<24x128xf32>
    %c2_61 = arith.constant 2 : index
    %c0_62 = arith.constant 0 : index
    %c0_63 = arith.constant 0 : index
    %96 = vector.load %arg10[%c2_61, %c0_62, %c0_63] : memref<10x24x128xf32, #tpu.memory_space<vmem>>, vector<1x24x128xf32>
    %97 = vector.shape_cast %96 : vector<1x24x128xf32> to vector<24x128xf32>
    %98 = vector.shape_cast %95 : vector<24x128xf32> to vector<1x24x128xf32>
    tpu.vector_store %arg10[%c2_61, %c0_62, %c0_63], %98 {strides = array<i32>} : memref<10x24x128xf32, #tpu.memory_space<vmem>>, vector<1x24x128xf32>,
    %c3_i32 = arith.constant 3 : i32
    %99 = arith.addi %0, %c3_i32 : i32
    %c0_64 = arith.constant 0 : index
    %100 = arith.index_cast %99 : i32 to index
    %c0_65 = arith.constant 0 : index
    %c0_66 = arith.constant 0 : index
    %101 = vector.load %arg2[%c0_64, %100, %c0_65, %c0_66] : memref<1x18x24x128xf32, #tpu.memory_space<vmem>>, vector<1x1x24x128xf32>
    %102 = vector.shape_cast %101 : vector<1x1x24x128xf32> to vector<24x128xf32>
    %cst_67 = arith.constant dense<0.000000e+00> : vector<24x128xf32>
    %103 = tpu.matmul %102, %1, %cst_67 {dimension_numbers = #tpu.dot_dimension_numbers<[1], [0], [0], [1], [0, 0, 1, 1], [], []>} : vector<24x128xf32>, vector<128x128xf32>, vector<24x128xf32> -> vector<24x128xf32>
    %104 = vector.broadcast %2 : vector<1x128xf32> to vector<24x128xf32>
    %105 = arith.addf %103, %104 : vector<24x128xf32>
    %cst_68 = arith.constant 0.000000e+00 : f32
    %cst_69 = arith.constant 6.000000e+00 : f32
    %106 = vector.broadcast %cst_68 : f32 to vector<24x128xf32>
    %107 = arith.maximumf %106, %105 : vector<24x128xf32>
    %108 = vector.broadcast %cst_69 : f32 to vector<24x128xf32>
    %109 = arith.minimumf %108, %107 : vector<24x128xf32>
    %c1_i32_70 = arith.constant 1 : i32
    %110 = arith.cmpi sge, %99, %c1_i32_70 : i32
    %c16_i32_71 = arith.constant 16 : i32
    %111 = arith.cmpi sle, %99, %c16_i32_71 : i32
    %112 = arith.andi %110, %111 : i1
    %113 = vector.broadcast %112 : i1 to vector<24x1xi1>
    %114 = arith.andi %29, %113 : vector<24x1xi1>
    %cst_72 = arith.constant 0.000000e+00 : f32
    %115 = vector.shape_cast %114 : vector<24x1xi1> to vector<24x1xi1>
    %116 = vector.broadcast %115 : vector<24x1xi1> to vector<24x128xi1>
    %117 = vector.broadcast %cst_72 : f32 to vector<24x128xf32>
    %118 = arith.select %116, %109, %117 : vector<24x128xi1>, vector<24x128xf32>
    %c3_73 = arith.constant 3 : index
    %c0_74 = arith.constant 0 : index
    %c0_75 = arith.constant 0 : index
    %119 = vector.load %arg10[%c3_73, %c0_74, %c0_75] : memref<10x24x128xf32, #tpu.memory_space<vmem>>, vector<1x24x128xf32>
    %120 = vector.shape_cast %119 : vector<1x24x128xf32> to vector<24x128xf32>
    %121 = vector.shape_cast %118 : vector<24x128xf32> to vector<1x24x128xf32>
    tpu.vector_store %arg10[%c3_73, %c0_74, %c0_75], %121 {strides = array<i32>} : memref<10x24x128xf32, #tpu.memory_space<vmem>>, vector<1x24x128xf32>,
    %c4_i32 = arith.constant 4 : i32
    %122 = arith.addi %0, %c4_i32 : i32
    %c0_76 = arith.constant 0 : index
    %123 = arith.index_cast %122 : i32 to index
    %c0_77 = arith.constant 0 : index
    %c0_78 = arith.constant 0 : index
    %124 = vector.load %arg2[%c0_76, %123, %c0_77, %c0_78] : memref<1x18x24x128xf32, #tpu.memory_space<vmem>>, vector<1x1x24x128xf32>
    %125 = vector.shape_cast %124 : vector<1x1x24x128xf32> to vector<24x128xf32>
    %cst_79 = arith.constant dense<0.000000e+00> : vector<24x128xf32>
    %126 = tpu.matmul %125, %1, %cst_79 {dimension_numbers = #tpu.dot_dimension_numbers<[1], [0], [0], [1], [0, 0, 1, 1], [], []>} : vector<24x128xf32>, vector<128x128xf32>, vector<24x128xf32> -> vector<24x128xf32>
    %127 = vector.broadcast %2 : vector<1x128xf32> to vector<24x128xf32>
    %128 = arith.addf %126, %127 : vector<24x128xf32>
    %cst_80 = arith.constant 0.000000e+00 : f32
    %cst_81 = arith.constant 6.000000e+00 : f32
    %129 = vector.broadcast %cst_80 : f32 to vector<24x128xf32>
    %130 = arith.maximumf %129, %128 : vector<24x128xf32>
    %131 = vector.broadcast %cst_81 : f32 to vector<24x128xf32>
    %132 = arith.minimumf %131, %130 : vector<24x128xf32>
    %c1_i32_82 = arith.constant 1 : i32
    %133 = arith.cmpi sge, %122, %c1_i32_82 : i32
    %c16_i32_83 = arith.constant 16 : i32
    %134 = arith.cmpi sle, %122, %c16_i32_83 : i32
    %135 = arith.andi %133, %134 : i1
    %136 = vector.broadcast %135 : i1 to vector<24x1xi1>
    %137 = arith.andi %29, %136 : vector<24x1xi1>
    %cst_84 = arith.constant 0.000000e+00 : f32
    %138 = vector.shape_cast %137 : vector<24x1xi1> to vector<24x1xi1>
    %139 = vector.broadcast %138 : vector<24x1xi1> to vector<24x128xi1>
    %140 = vector.broadcast %cst_84 : f32 to vector<24x128xf32>
    %141 = arith.select %139, %132, %140 : vector<24x128xi1>, vector<24x128xf32>
    %c4_85 = arith.constant 4 : index
    %c0_86 = arith.constant 0 : index
    %c0_87 = arith.constant 0 : index
    %142 = vector.load %arg10[%c4_85, %c0_86, %c0_87] : memref<10x24x128xf32, #tpu.memory_space<vmem>>, vector<1x24x128xf32>
    %143 = vector.shape_cast %142 : vector<1x24x128xf32> to vector<24x128xf32>
    %144 = vector.shape_cast %141 : vector<24x128xf32> to vector<1x24x128xf32>
    tpu.vector_store %arg10[%c4_85, %c0_86, %c0_87], %144 {strides = array<i32>} : memref<10x24x128xf32, #tpu.memory_space<vmem>>, vector<1x24x128xf32>,
    %c5_i32 = arith.constant 5 : i32
    %145 = arith.addi %0, %c5_i32 : i32
    %c0_88 = arith.constant 0 : index
    %146 = arith.index_cast %145 : i32 to index
    %c0_89 = arith.constant 0 : index
    %c0_90 = arith.constant 0 : index
    %147 = vector.load %arg2[%c0_88, %146, %c0_89, %c0_90] : memref<1x18x24x128xf32, #tpu.memory_space<vmem>>, vector<1x1x24x128xf32>
    %148 = vector.shape_cast %147 : vector<1x1x24x128xf32> to vector<24x128xf32>
    %cst_91 = arith.constant dense<0.000000e+00> : vector<24x128xf32>
    %149 = tpu.matmul %148, %1, %cst_91 {dimension_numbers = #tpu.dot_dimension_numbers<[1], [0], [0], [1], [0, 0, 1, 1], [], []>} : vector<24x128xf32>, vector<128x128xf32>, vector<24x128xf32> -> vector<24x128xf32>
    %150 = vector.broadcast %2 : vector<1x128xf32> to vector<24x128xf32>
    %151 = arith.addf %149, %150 : vector<24x128xf32>
    %cst_92 = arith.constant 0.000000e+00 : f32
    %cst_93 = arith.constant 6.000000e+00 : f32
    %152 = vector.broadcast %cst_92 : f32 to vector<24x128xf32>
    %153 = arith.maximumf %152, %151 : vector<24x128xf32>
    %154 = vector.broadcast %cst_93 : f32 to vector<24x128xf32>
    %155 = arith.minimumf %154, %153 : vector<24x128xf32>
    %c1_i32_94 = arith.constant 1 : i32
    %156 = arith.cmpi sge, %145, %c1_i32_94 : i32
    %c16_i32_95 = arith.constant 16 : i32
    %157 = arith.cmpi sle, %145, %c16_i32_95 : i32
    %158 = arith.andi %156, %157 : i1
    %159 = vector.broadcast %158 : i1 to vector<24x1xi1>
    %160 = arith.andi %29, %159 : vector<24x1xi1>
    %cst_96 = arith.constant 0.000000e+00 : f32
    %161 = vector.shape_cast %160 : vector<24x1xi1> to vector<24x1xi1>
    %162 = vector.broadcast %161 : vector<24x1xi1> to vector<24x128xi1>
    %163 = vector.broadcast %cst_96 : f32 to vector<24x128xf32>
    %164 = arith.select %162, %155, %163 : vector<24x128xi1>, vector<24x128xf32>
    %c5_97 = arith.constant 5 : index
    %c0_98 = arith.constant 0 : index
    %c0_99 = arith.constant 0 : index
    %165 = vector.load %arg10[%c5_97, %c0_98, %c0_99] : memref<10x24x128xf32, #tpu.memory_space<vmem>>, vector<1x24x128xf32>
    %166 = vector.shape_cast %165 : vector<1x24x128xf32> to vector<24x128xf32>
    %167 = vector.shape_cast %164 : vector<24x128xf32> to vector<1x24x128xf32>
    tpu.vector_store %arg10[%c5_97, %c0_98, %c0_99], %167 {strides = array<i32>} : memref<10x24x128xf32, #tpu.memory_space<vmem>>, vector<1x24x128xf32>,
    %c6_i32 = arith.constant 6 : i32
    %168 = arith.addi %0, %c6_i32 : i32
    %c0_100 = arith.constant 0 : index
    %169 = arith.index_cast %168 : i32 to index
    %c0_101 = arith.constant 0 : index
    %c0_102 = arith.constant 0 : index
    %170 = vector.load %arg2[%c0_100, %169, %c0_101, %c0_102] : memref<1x18x24x128xf32, #tpu.memory_space<vmem>>, vector<1x1x24x128xf32>
    %171 = vector.shape_cast %170 : vector<1x1x24x128xf32> to vector<24x128xf32>
    %cst_103 = arith.constant dense<0.000000e+00> : vector<24x128xf32>
    %172 = tpu.matmul %171, %1, %cst_103 {dimension_numbers = #tpu.dot_dimension_numbers<[1], [0], [0], [1], [0, 0, 1, 1], [], []>} : vector<24x128xf32>, vector<128x128xf32>, vector<24x128xf32> -> vector<24x128xf32>
    %173 = vector.broadcast %2 : vector<1x128xf32> to vector<24x128xf32>
    %174 = arith.addf %172, %173 : vector<24x128xf32>
    %cst_104 = arith.constant 0.000000e+00 : f32
    %cst_105 = arith.constant 6.000000e+00 : f32
    %175 = vector.broadcast %cst_104 : f32 to vector<24x128xf32>
    %176 = arith.maximumf %175, %174 : vector<24x128xf32>
    %177 = vector.broadcast %cst_105 : f32 to vector<24x128xf32>
    %178 = arith.minimumf %177, %176 : vector<24x128xf32>
    %c1_i32_106 = arith.constant 1 : i32
    %179 = arith.cmpi sge, %168, %c1_i32_106 : i32
    %c16_i32_107 = arith.constant 16 : i32
    %180 = arith.cmpi sle, %168, %c16_i32_107 : i32
    %181 = arith.andi %179, %180 : i1
    %182 = vector.broadcast %181 : i1 to vector<24x1xi1>
    %183 = arith.andi %29, %182 : vector<24x1xi1>
    %cst_108 = arith.constant 0.000000e+00 : f32
    %184 = vector.shape_cast %183 : vector<24x1xi1> to vector<24x1xi1>
    %185 = vector.broadcast %184 : vector<24x1xi1> to vector<24x128xi1>
    %186 = vector.broadcast %cst_108 : f32 to vector<24x128xf32>
    %187 = arith.select %185, %178, %186 : vector<24x128xi1>, vector<24x128xf32>
    %c6_109 = arith.constant 6 : index
    %c0_110 = arith.constant 0 : index
    %c0_111 = arith.constant 0 : index
    %188 = vector.load %arg10[%c6_109, %c0_110, %c0_111] : memref<10x24x128xf32, #tpu.memory_space<vmem>>, vector<1x24x128xf32>
    %189 = vector.shape_cast %188 : vector<1x24x128xf32> to vector<24x128xf32>
    %190 = vector.shape_cast %187 : vector<24x128xf32> to vector<1x24x128xf32>
    tpu.vector_store %arg10[%c6_109, %c0_110, %c0_111], %190 {strides = array<i32>} : memref<10x24x128xf32, #tpu.memory_space<vmem>>, vector<1x24x128xf32>,
    %c7_i32 = arith.constant 7 : i32
    %191 = arith.addi %0, %c7_i32 : i32
    %c0_112 = arith.constant 0 : index
    %192 = arith.index_cast %191 : i32 to index
    %c0_113 = arith.constant 0 : index
    %c0_114 = arith.constant 0 : index
    %193 = vector.load %arg2[%c0_112, %192, %c0_113, %c0_114] : memref<1x18x24x128xf32, #tpu.memory_space<vmem>>, vector<1x1x24x128xf32>
    %194 = vector.shape_cast %193 : vector<1x1x24x128xf32> to vector<24x128xf32>
    %cst_115 = arith.constant dense<0.000000e+00> : vector<24x128xf32>
    %195 = tpu.matmul %194, %1, %cst_115 {dimension_numbers = #tpu.dot_dimension_numbers<[1], [0], [0], [1], [0, 0, 1, 1], [], []>} : vector<24x128xf32>, vector<128x128xf32>, vector<24x128xf32> -> vector<24x128xf32>
    %196 = vector.broadcast %2 : vector<1x128xf32> to vector<24x128xf32>
    %197 = arith.addf %195, %196 : vector<24x128xf32>
    %cst_116 = arith.constant 0.000000e+00 : f32
    %cst_117 = arith.constant 6.000000e+00 : f32
    %198 = vector.broadcast %cst_116 : f32 to vector<24x128xf32>
    %199 = arith.maximumf %198, %197 : vector<24x128xf32>
    %200 = vector.broadcast %cst_117 : f32 to vector<24x128xf32>
    %201 = arith.minimumf %200, %199 : vector<24x128xf32>
    %c1_i32_118 = arith.constant 1 : i32
    %202 = arith.cmpi sge, %191, %c1_i32_118 : i32
    %c16_i32_119 = arith.constant 16 : i32
    %203 = arith.cmpi sle, %191, %c16_i32_119 : i32
    %204 = arith.andi %202, %203 : i1
    %205 = vector.broadcast %204 : i1 to vector<24x1xi1>
    %206 = arith.andi %29, %205 : vector<24x1xi1>
    %cst_120 = arith.constant 0.000000e+00 : f32
    %207 = vector.shape_cast %206 : vector<24x1xi1> to vector<24x1xi1>
    %208 = vector.broadcast %207 : vector<24x1xi1> to vector<24x128xi1>
    %209 = vector.broadcast %cst_120 : f32 to vector<24x128xf32>
    %210 = arith.select %208, %201, %209 : vector<24x128xi1>, vector<24x128xf32>
    %c7_121 = arith.constant 7 : index
    %c0_122 = arith.constant 0 : index
    %c0_123 = arith.constant 0 : index
    %211 = vector.load %arg10[%c7_121, %c0_122, %c0_123] : memref<10x24x128xf32, #tpu.memory_space<vmem>>, vector<1x24x128xf32>
    %212 = vector.shape_cast %211 : vector<1x24x128xf32> to vector<24x128xf32>
    %213 = vector.shape_cast %210 : vector<24x128xf32> to vector<1x24x128xf32>
    tpu.vector_store %arg10[%c7_121, %c0_122, %c0_123], %213 {strides = array<i32>} : memref<10x24x128xf32, #tpu.memory_space<vmem>>, vector<1x24x128xf32>,
    %c8_i32_124 = arith.constant 8 : i32
    %214 = arith.addi %0, %c8_i32_124 : i32
    %c0_125 = arith.constant 0 : index
    %215 = arith.index_cast %214 : i32 to index
    %c0_126 = arith.constant 0 : index
    %c0_127 = arith.constant 0 : index
    %216 = vector.load %arg2[%c0_125, %215, %c0_126, %c0_127] : memref<1x18x24x128xf32, #tpu.memory_space<vmem>>, vector<1x1x24x128xf32>
    %217 = vector.shape_cast %216 : vector<1x1x24x128xf32> to vector<24x128xf32>
    %cst_128 = arith.constant dense<0.000000e+00> : vector<24x128xf32>
    %218 = tpu.matmul %217, %1, %cst_128 {dimension_numbers = #tpu.dot_dimension_numbers<[1], [0], [0], [1], [0, 0, 1, 1], [], []>} : vector<24x128xf32>, vector<128x128xf32>, vector<24x128xf32> -> vector<24x128xf32>
    %219 = vector.broadcast %2 : vector<1x128xf32> to vector<24x128xf32>
    %220 = arith.addf %218, %219 : vector<24x128xf32>
    %cst_129 = arith.constant 0.000000e+00 : f32
    %cst_130 = arith.constant 6.000000e+00 : f32
    %221 = vector.broadcast %cst_129 : f32 to vector<24x128xf32>
    %222 = arith.maximumf %221, %220 : vector<24x128xf32>
    %223 = vector.broadcast %cst_130 : f32 to vector<24x128xf32>
    %224 = arith.minimumf %223, %222 : vector<24x128xf32>
    %c1_i32_131 = arith.constant 1 : i32
    %225 = arith.cmpi sge, %214, %c1_i32_131 : i32
    %c16_i32_132 = arith.constant 16 : i32
    %226 = arith.cmpi sle, %214, %c16_i32_132 : i32
    %227 = arith.andi %225, %226 : i1
    %228 = vector.broadcast %227 : i1 to vector<24x1xi1>
    %229 = arith.andi %29, %228 : vector<24x1xi1>
    %cst_133 = arith.constant 0.000000e+00 : f32
    %230 = vector.shape_cast %229 : vector<24x1xi1> to vector<24x1xi1>
    %231 = vector.broadcast %230 : vector<24x1xi1> to vector<24x128xi1>
    %232 = vector.broadcast %cst_133 : f32 to vector<24x128xf32>
    %233 = arith.select %231, %224, %232 : vector<24x128xi1>, vector<24x128xf32>
    %c8_134 = arith.constant 8 : index
    %c0_135 = arith.constant 0 : index
    %c0_136 = arith.constant 0 : index
    %234 = vector.load %arg10[%c8_134, %c0_135, %c0_136] : memref<10x24x128xf32, #tpu.memory_space<vmem>>, vector<1x24x128xf32>
    %235 = vector.shape_cast %234 : vector<1x24x128xf32> to vector<24x128xf32>
    %236 = vector.shape_cast %233 : vector<24x128xf32> to vector<1x24x128xf32>
    tpu.vector_store %arg10[%c8_134, %c0_135, %c0_136], %236 {strides = array<i32>} : memref<10x24x128xf32, #tpu.memory_space<vmem>>, vector<1x24x128xf32>,
    %c9_i32 = arith.constant 9 : i32
    %237 = arith.addi %0, %c9_i32 : i32
    %c0_137 = arith.constant 0 : index
    %238 = arith.index_cast %237 : i32 to index
    %c0_138 = arith.constant 0 : index
    %c0_139 = arith.constant 0 : index
    %239 = vector.load %arg2[%c0_137, %238, %c0_138, %c0_139] : memref<1x18x24x128xf32, #tpu.memory_space<vmem>>, vector<1x1x24x128xf32>
    %240 = vector.shape_cast %239 : vector<1x1x24x128xf32> to vector<24x128xf32>
    %cst_140 = arith.constant dense<0.000000e+00> : vector<24x128xf32>
    %241 = tpu.matmul %240, %1, %cst_140 {dimension_numbers = #tpu.dot_dimension_numbers<[1], [0], [0], [1], [0, 0, 1, 1], [], []>} : vector<24x128xf32>, vector<128x128xf32>, vector<24x128xf32> -> vector<24x128xf32>
    %242 = vector.broadcast %2 : vector<1x128xf32> to vector<24x128xf32>
    %243 = arith.addf %241, %242 : vector<24x128xf32>
    %cst_141 = arith.constant 0.000000e+00 : f32
    %cst_142 = arith.constant 6.000000e+00 : f32
    %244 = vector.broadcast %cst_141 : f32 to vector<24x128xf32>
    %245 = arith.maximumf %244, %243 : vector<24x128xf32>
    %246 = vector.broadcast %cst_142 : f32 to vector<24x128xf32>
    %247 = arith.minimumf %246, %245 : vector<24x128xf32>
    %c1_i32_143 = arith.constant 1 : i32
    %248 = arith.cmpi sge, %237, %c1_i32_143 : i32
    %c16_i32_144 = arith.constant 16 : i32
    %249 = arith.cmpi sle, %237, %c16_i32_144 : i32
    %250 = arith.andi %248, %249 : i1
    %251 = vector.broadcast %250 : i1 to vector<24x1xi1>
    %252 = arith.andi %29, %251 : vector<24x1xi1>
    %cst_145 = arith.constant 0.000000e+00 : f32
    %253 = vector.shape_cast %252 : vector<24x1xi1> to vector<24x1xi1>
    %254 = vector.broadcast %253 : vector<24x1xi1> to vector<24x128xi1>
    %255 = vector.broadcast %cst_145 : f32 to vector<24x128xf32>
    %256 = arith.select %254, %247, %255 : vector<24x128xi1>, vector<24x128xf32>
    %c9 = arith.constant 9 : index
    %c0_146 = arith.constant 0 : index
    %c0_147 = arith.constant 0 : index
    %257 = vector.load %arg10[%c9, %c0_146, %c0_147] : memref<10x24x128xf32, #tpu.memory_space<vmem>>, vector<1x24x128xf32>
    %258 = vector.shape_cast %257 : vector<1x24x128xf32> to vector<24x128xf32>
    %259 = vector.shape_cast %256 : vector<24x128xf32> to vector<1x24x128xf32>
    tpu.vector_store %arg10[%c9, %c0_146, %c0_147], %259 {strides = array<i32>} : memref<10x24x128xf32, #tpu.memory_space<vmem>>, vector<1x24x128xf32>,
    %cst_148 = arith.constant 0.000000e+00 : f32
    %260 = vector.broadcast %cst_148 : f32 to vector<16x128xf32>
    %c0_149 = arith.constant 0 : index
    %c0_150 = arith.constant 0 : index
    %c0_151 = arith.constant 0 : index
    %261 = vector.load %arg10[%c0_149, %c0_150, %c0_151] : memref<10x24x128xf32, #tpu.memory_space<vmem>>, vector<1x24x128xf32>
    %262 = vector.shape_cast %261 : vector<1x24x128xf32> to vector<24x128xf32>
    %263 = vector.extract_strided_slice %262 {offsets = [0, 0], sizes = [16, 128], strides = [1, 1]} : vector<24x128xf32> to vector<16x128xf32>
    %264 = vector.broadcast %7 : vector<1x128xf32> to vector<16x128xf32>
    %265 = arith.mulf %263, %264 : vector<16x128xf32>
    %266 = arith.addf %260, %265 : vector<16x128xf32>
    %267 = vector.extract_strided_slice %262 {offsets = [1, 0], sizes = [16, 128], strides = [1, 1]} : vector<24x128xf32> to vector<16x128xf32>
    %268 = vector.broadcast %9 : vector<1x128xf32> to vector<16x128xf32>
    %269 = arith.mulf %267, %268 : vector<16x128xf32>
    %270 = arith.addf %266, %269 : vector<16x128xf32>
    %271 = vector.extract_strided_slice %262 {offsets = [2, 0], sizes = [16, 128], strides = [1, 1]} : vector<24x128xf32> to vector<16x128xf32>
    %272 = vector.broadcast %11 : vector<1x128xf32> to vector<16x128xf32>
    %273 = arith.mulf %271, %272 : vector<16x128xf32>
    %274 = arith.addf %270, %273 : vector<16x128xf32>
    %c1_152 = arith.constant 1 : index
    %c0_153 = arith.constant 0 : index
    %c0_154 = arith.constant 0 : index
    %275 = vector.load %arg10[%c1_152, %c0_153, %c0_154] : memref<10x24x128xf32, #tpu.memory_space<vmem>>, vector<1x24x128xf32>
    %276 = vector.shape_cast %275 : vector<1x24x128xf32> to vector<24x128xf32>
    %277 = vector.extract_strided_slice %276 {offsets = [0, 0], sizes = [16, 128], strides = [1, 1]} : vector<24x128xf32> to vector<16x128xf32>
    %278 = vector.broadcast %13 : vector<1x128xf32> to vector<16x128xf32>
    %279 = arith.mulf %277, %278 : vector<16x128xf32>
    %280 = arith.addf %274, %279 : vector<16x128xf32>
    %281 = vector.extract_strided_slice %276 {offsets = [1, 0], sizes = [16, 128], strides = [1, 1]} : vector<24x128xf32> to vector<16x128xf32>
    %282 = vector.broadcast %15 : vector<1x128xf32> to vector<16x128xf32>
    %283 = arith.mulf %281, %282 : vector<16x128xf32>
    %284 = arith.addf %280, %283 : vector<16x128xf32>
    %285 = vector.extract_strided_slice %276 {offsets = [2, 0], sizes = [16, 128], strides = [1, 1]} : vector<24x128xf32> to vector<16x128xf32>
    %286 = vector.broadcast %17 : vector<1x128xf32> to vector<16x128xf32>
    %287 = arith.mulf %285, %286 : vector<16x128xf32>
    %288 = arith.addf %284, %287 : vector<16x128xf32>
    %c2_155 = arith.constant 2 : index
    %c0_156 = arith.constant 0 : index
    %c0_157 = arith.constant 0 : index
    %289 = vector.load %arg10[%c2_155, %c0_156, %c0_157] : memref<10x24x128xf32, #tpu.memory_space<vmem>>, vector<1x24x128xf32>
    %290 = vector.shape_cast %289 : vector<1x24x128xf32> to vector<24x128xf32>
    %291 = vector.extract_strided_slice %290 {offsets = [0, 0], sizes = [16, 128], strides = [1, 1]} : vector<24x128xf32> to vector<16x128xf32>
    %292 = vector.broadcast %19 : vector<1x128xf32> to vector<16x128xf32>
    %293 = arith.mulf %291, %292 : vector<16x128xf32>
    %294 = arith.addf %288, %293 : vector<16x128xf32>
    %295 = vector.extract_strided_slice %290 {offsets = [1, 0], sizes = [16, 128], strides = [1, 1]} : vector<24x128xf32> to vector<16x128xf32>
    %296 = vector.broadcast %21 : vector<1x128xf32> to vector<16x128xf32>
    %297 = arith.mulf %295, %296 : vector<16x128xf32>
    %298 = arith.addf %294, %297 : vector<16x128xf32>
    %299 = vector.extract_strided_slice %290 {offsets = [2, 0], sizes = [16, 128], strides = [1, 1]} : vector<24x128xf32> to vector<16x128xf32>
    %300 = vector.broadcast %23 : vector<1x128xf32> to vector<16x128xf32>
    %301 = arith.mulf %299, %300 : vector<16x128xf32>
    %302 = arith.addf %298, %301 : vector<16x128xf32>
    %303 = vector.broadcast %3 : vector<1x128xf32> to vector<16x128xf32>
    %304 = arith.addf %302, %303 : vector<16x128xf32>
    %cst_158 = arith.constant 0.000000e+00 : f32
    %cst_159 = arith.constant 6.000000e+00 : f32
    %305 = vector.broadcast %cst_158 : f32 to vector<16x128xf32>
    %306 = arith.maximumf %305, %304 : vector<16x128xf32>
    %307 = vector.broadcast %cst_159 : f32 to vector<16x128xf32>
    %308 = arith.minimumf %307, %306 : vector<16x128xf32>
    %cst_160 = arith.constant dense<0.000000e+00> : vector<16x128xf32>
    %309 = tpu.matmul %308, %4, %cst_160 {dimension_numbers = #tpu.dot_dimension_numbers<[1], [0], [0], [1], [0, 0, 1, 1], [], []>} : vector<16x128xf32>, vector<128x128xf32>, vector<16x128xf32> -> vector<16x128xf32>
    %310 = vector.broadcast %5 : vector<1x128xf32> to vector<16x128xf32>
    %311 = arith.addf %309, %310 : vector<16x128xf32>
    %c1_i32_161 = arith.constant 1 : i32
    %312 = arith.addi %0, %c1_i32_161 : i32
    %c0_i32_162 = arith.constant 0 : i32
    %313 = arith.addi %312, %c0_i32_162 : i32
    %c0_163 = arith.constant 0 : index
    %314 = arith.index_cast %313 : i32 to index
    %c1_164 = arith.constant 1 : index
    %c0_165 = arith.constant 0 : index
    %315 = vector.load %arg2[%c0_163, %314, %c1_164, %c0_165] : memref<1x18x24x128xf32, #tpu.memory_space<vmem>>, vector<1x1x16x128xf32>
    %316 = vector.shape_cast %315 : vector<1x1x16x128xf32> to vector<16x128xf32>
    %317 = arith.addf %311, %316 : vector<16x128xf32>
    %c0_166 = arith.constant 0 : index
    %c0_167 = arith.constant 0 : index
    %c0_168 = arith.constant 0 : index
    %c0_169 = arith.constant 0 : index
    %318 = vector.load %arg9[%c0_166, %c0_167, %c0_168, %c0_169] : memref<1x8x16x128xf32, #tpu.memory_space<vmem>>, vector<1x1x16x128xf32>
    %319 = vector.shape_cast %318 : vector<1x1x16x128xf32> to vector<16x128xf32>
    %320 = vector.shape_cast %317 : vector<16x128xf32> to vector<1x1x16x128xf32>
    tpu.vector_store %arg9[%c0_166, %c0_167, %c0_168, %c0_169], %320 {strides = array<i32>} : memref<1x8x16x128xf32, #tpu.memory_space<vmem>>, vector<1x1x16x128xf32>,
    %cst_170 = arith.constant 0.000000e+00 : f32
    %321 = vector.broadcast %cst_170 : f32 to vector<16x128xf32>
    %c1_171 = arith.constant 1 : index
    %c0_172 = arith.constant 0 : index
    %c0_173 = arith.constant 0 : index
    %322 = vector.load %arg10[%c1_171, %c0_172, %c0_173] : memref<10x24x128xf32, #tpu.memory_space<vmem>>, vector<1x24x128xf32>
    %323 = vector.shape_cast %322 : vector<1x24x128xf32> to vector<24x128xf32>
    %324 = vector.extract_strided_slice %323 {offsets = [0, 0], sizes = [16, 128], strides = [1, 1]} : vector<24x128xf32> to vector<16x128xf32>
    %325 = vector.broadcast %7 : vector<1x128xf32> to vector<16x128xf32>
    %326 = arith.mulf %324, %325 : vector<16x128xf32>
    %327 = arith.addf %321, %326 : vector<16x128xf32>
    %328 = vector.extract_strided_slice %323 {offsets = [1, 0], sizes = [16, 128], strides = [1, 1]} : vector<24x128xf32> to vector<16x128xf32>
    %329 = vector.broadcast %9 : vector<1x128xf32> to vector<16x128xf32>
    %330 = arith.mulf %328, %329 : vector<16x128xf32>
    %331 = arith.addf %327, %330 : vector<16x128xf32>
    %332 = vector.extract_strided_slice %323 {offsets = [2, 0], sizes = [16, 128], strides = [1, 1]} : vector<24x128xf32> to vector<16x128xf32>
    %333 = vector.broadcast %11 : vector<1x128xf32> to vector<16x128xf32>
    %334 = arith.mulf %332, %333 : vector<16x128xf32>
    %335 = arith.addf %331, %334 : vector<16x128xf32>
    %c2_174 = arith.constant 2 : index
    %c0_175 = arith.constant 0 : index
    %c0_176 = arith.constant 0 : index
    %336 = vector.load %arg10[%c2_174, %c0_175, %c0_176] : memref<10x24x128xf32, #tpu.memory_space<vmem>>, vector<1x24x128xf32>
    %337 = vector.shape_cast %336 : vector<1x24x128xf32> to vector<24x128xf32>
    %338 = vector.extract_strided_slice %337 {offsets = [0, 0], sizes = [16, 128], strides = [1, 1]} : vector<24x128xf32> to vector<16x128xf32>
    %339 = vector.broadcast %13 : vector<1x128xf32> to vector<16x128xf32>
    %340 = arith.mulf %338, %339 : vector<16x128xf32>
    %341 = arith.addf %335, %340 : vector<16x128xf32>
    %342 = vector.extract_strided_slice %337 {offsets = [1, 0], sizes = [16, 128], strides = [1, 1]} : vector<24x128xf32> to vector<16x128xf32>
    %343 = vector.broadcast %15 : vector<1x128xf32> to vector<16x128xf32>
    %344 = arith.mulf %342, %343 : vector<16x128xf32>
    %345 = arith.addf %341, %344 : vector<16x128xf32>
    %346 = vector.extract_strided_slice %337 {offsets = [2, 0], sizes = [16, 128], strides = [1, 1]} : vector<24x128xf32> to vector<16x128xf32>
    %347 = vector.broadcast %17 : vector<1x128xf32> to vector<16x128xf32>
    %348 = arith.mulf %346, %347 : vector<16x128xf32>
    %349 = arith.addf %345, %348 : vector<16x128xf32>
    %c3_177 = arith.constant 3 : index
    %c0_178 = arith.constant 0 : index
    %c0_179 = arith.constant 0 : index
    %350 = vector.load %arg10[%c3_177, %c0_178, %c0_179] : memref<10x24x128xf32, #tpu.memory_space<vmem>>, vector<1x24x128xf32>
    %351 = vector.shape_cast %350 : vector<1x24x128xf32> to vector<24x128xf32>
    %352 = vector.extract_strided_slice %351 {offsets = [0, 0], sizes = [16, 128], strides = [1, 1]} : vector<24x128xf32> to vector<16x128xf32>
    %353 = vector.broadcast %19 : vector<1x128xf32> to vector<16x128xf32>
    %354 = arith.mulf %352, %353 : vector<16x128xf32>
    %355 = arith.addf %349, %354 : vector<16x128xf32>
    %356 = vector.extract_strided_slice %351 {offsets = [1, 0], sizes = [16, 128], strides = [1, 1]} : vector<24x128xf32> to vector<16x128xf32>
    %357 = vector.broadcast %21 : vector<1x128xf32> to vector<16x128xf32>
    %358 = arith.mulf %356, %357 : vector<16x128xf32>
    %359 = arith.addf %355, %358 : vector<16x128xf32>
    %360 = vector.extract_strided_slice %351 {offsets = [2, 0], sizes = [16, 128], strides = [1, 1]} : vector<24x128xf32> to vector<16x128xf32>
    %361 = vector.broadcast %23 : vector<1x128xf32> to vector<16x128xf32>
    %362 = arith.mulf %360, %361 : vector<16x128xf32>
    %363 = arith.addf %359, %362 : vector<16x128xf32>
    %364 = vector.broadcast %3 : vector<1x128xf32> to vector<16x128xf32>
    %365 = arith.addf %363, %364 : vector<16x128xf32>
    %cst_180 = arith.constant 0.000000e+00 : f32
    %cst_181 = arith.constant 6.000000e+00 : f32
    %366 = vector.broadcast %cst_180 : f32 to vector<16x128xf32>
    %367 = arith.maximumf %366, %365 : vector<16x128xf32>
    %368 = vector.broadcast %cst_181 : f32 to vector<16x128xf32>
    %369 = arith.minimumf %368, %367 : vector<16x128xf32>
    %cst_182 = arith.constant dense<0.000000e+00> : vector<16x128xf32>
    %370 = tpu.matmul %369, %4, %cst_182 {dimension_numbers = #tpu.dot_dimension_numbers<[1], [0], [0], [1], [0, 0, 1, 1], [], []>} : vector<16x128xf32>, vector<128x128xf32>, vector<16x128xf32> -> vector<16x128xf32>
    %371 = vector.broadcast %5 : vector<1x128xf32> to vector<16x128xf32>
    %372 = arith.addf %370, %371 : vector<16x128xf32>
    %c1_i32_183 = arith.constant 1 : i32
    %373 = arith.addi %0, %c1_i32_183 : i32
    %c1_i32_184 = arith.constant 1 : i32
    %374 = arith.addi %373, %c1_i32_184 : i32
    %c0_185 = arith.constant 0 : index
    %375 = arith.index_cast %374 : i32 to index
    %c1_186 = arith.constant 1 : index
    %c0_187 = arith.constant 0 : index
    %376 = vector.load %arg2[%c0_185, %375, %c1_186, %c0_187] : memref<1x18x24x128xf32, #tpu.memory_space<vmem>>, vector<1x1x16x128xf32>
    %377 = vector.shape_cast %376 : vector<1x1x16x128xf32> to vector<16x128xf32>
    %378 = arith.addf %372, %377 : vector<16x128xf32>
    %c0_188 = arith.constant 0 : index
    %c1_189 = arith.constant 1 : index
    %c0_190 = arith.constant 0 : index
    %c0_191 = arith.constant 0 : index
    %379 = vector.load %arg9[%c0_188, %c1_189, %c0_190, %c0_191] : memref<1x8x16x128xf32, #tpu.memory_space<vmem>>, vector<1x1x16x128xf32>
    %380 = vector.shape_cast %379 : vector<1x1x16x128xf32> to vector<16x128xf32>
    %381 = vector.shape_cast %378 : vector<16x128xf32> to vector<1x1x16x128xf32>
    tpu.vector_store %arg9[%c0_188, %c1_189, %c0_190, %c0_191], %381 {strides = array<i32>} : memref<1x8x16x128xf32, #tpu.memory_space<vmem>>, vector<1x1x16x128xf32>,
    %cst_192 = arith.constant 0.000000e+00 : f32
    %382 = vector.broadcast %cst_192 : f32 to vector<16x128xf32>
    %c2_193 = arith.constant 2 : index
    %c0_194 = arith.constant 0 : index
    %c0_195 = arith.constant 0 : index
    %383 = vector.load %arg10[%c2_193, %c0_194, %c0_195] : memref<10x24x128xf32, #tpu.memory_space<vmem>>, vector<1x24x128xf32>
    %384 = vector.shape_cast %383 : vector<1x24x128xf32> to vector<24x128xf32>
    %385 = vector.extract_strided_slice %384 {offsets = [0, 0], sizes = [16, 128], strides = [1, 1]} : vector<24x128xf32> to vector<16x128xf32>
    %386 = vector.broadcast %7 : vector<1x128xf32> to vector<16x128xf32>
    %387 = arith.mulf %385, %386 : vector<16x128xf32>
    %388 = arith.addf %382, %387 : vector<16x128xf32>
    %389 = vector.extract_strided_slice %384 {offsets = [1, 0], sizes = [16, 128], strides = [1, 1]} : vector<24x128xf32> to vector<16x128xf32>
    %390 = vector.broadcast %9 : vector<1x128xf32> to vector<16x128xf32>
    %391 = arith.mulf %389, %390 : vector<16x128xf32>
    %392 = arith.addf %388, %391 : vector<16x128xf32>
    %393 = vector.extract_strided_slice %384 {offsets = [2, 0], sizes = [16, 128], strides = [1, 1]} : vector<24x128xf32> to vector<16x128xf32>
    %394 = vector.broadcast %11 : vector<1x128xf32> to vector<16x128xf32>
    %395 = arith.mulf %393, %394 : vector<16x128xf32>
    %396 = arith.addf %392, %395 : vector<16x128xf32>
    %c3_196 = arith.constant 3 : index
    %c0_197 = arith.constant 0 : index
    %c0_198 = arith.constant 0 : index
    %397 = vector.load %arg10[%c3_196, %c0_197, %c0_198] : memref<10x24x128xf32, #tpu.memory_space<vmem>>, vector<1x24x128xf32>
    %398 = vector.shape_cast %397 : vector<1x24x128xf32> to vector<24x128xf32>
    %399 = vector.extract_strided_slice %398 {offsets = [0, 0], sizes = [16, 128], strides = [1, 1]} : vector<24x128xf32> to vector<16x128xf32>
    %400 = vector.broadcast %13 : vector<1x128xf32> to vector<16x128xf32>
    %401 = arith.mulf %399, %400 : vector<16x128xf32>
    %402 = arith.addf %396, %401 : vector<16x128xf32>
    %403 = vector.extract_strided_slice %398 {offsets = [1, 0], sizes = [16, 128], strides = [1, 1]} : vector<24x128xf32> to vector<16x128xf32>
    %404 = vector.broadcast %15 : vector<1x128xf32> to vector<16x128xf32>
    %405 = arith.mulf %403, %404 : vector<16x128xf32>
    %406 = arith.addf %402, %405 : vector<16x128xf32>
    %407 = vector.extract_strided_slice %398 {offsets = [2, 0], sizes = [16, 128], strides = [1, 1]} : vector<24x128xf32> to vector<16x128xf32>
    %408 = vector.broadcast %17 : vector<1x128xf32> to vector<16x128xf32>
    %409 = arith.mulf %407, %408 : vector<16x128xf32>
    %410 = arith.addf %406, %409 : vector<16x128xf32>
    %c4_199 = arith.constant 4 : index
    %c0_200 = arith.constant 0 : index
    %c0_201 = arith.constant 0 : index
    %411 = vector.load %arg10[%c4_199, %c0_200, %c0_201] : memref<10x24x128xf32, #tpu.memory_space<vmem>>, vector<1x24x128xf32>
    %412 = vector.shape_cast %411 : vector<1x24x128xf32> to vector<24x128xf32>
    %413 = vector.extract_strided_slice %412 {offsets = [0, 0], sizes = [16, 128], strides = [1, 1]} : vector<24x128xf32> to vector<16x128xf32>
    %414 = vector.broadcast %19 : vector<1x128xf32> to vector<16x128xf32>
    %415 = arith.mulf %413, %414 : vector<16x128xf32>
    %416 = arith.addf %410, %415 : vector<16x128xf32>
    %417 = vector.extract_strided_slice %412 {offsets = [1, 0], sizes = [16, 128], strides = [1, 1]} : vector<24x128xf32> to vector<16x128xf32>
    %418 = vector.broadcast %21 : vector<1x128xf32> to vector<16x128xf32>
    %419 = arith.mulf %417, %418 : vector<16x128xf32>
    %420 = arith.addf %416, %419 : vector<16x128xf32>
    %421 = vector.extract_strided_slice %412 {offsets = [2, 0], sizes = [16, 128], strides = [1, 1]} : vector<24x128xf32> to vector<16x128xf32>
    %422 = vector.broadcast %23 : vector<1x128xf32> to vector<16x128xf32>
    %423 = arith.mulf %421, %422 : vector<16x128xf32>
    %424 = arith.addf %420, %423 : vector<16x128xf32>
    %425 = vector.broadcast %3 : vector<1x128xf32> to vector<16x128xf32>
    %426 = arith.addf %424, %425 : vector<16x128xf32>
    %cst_202 = arith.constant 0.000000e+00 : f32
    %cst_203 = arith.constant 6.000000e+00 : f32
    %427 = vector.broadcast %cst_202 : f32 to vector<16x128xf32>
    %428 = arith.maximumf %427, %426 : vector<16x128xf32>
    %429 = vector.broadcast %cst_203 : f32 to vector<16x128xf32>
    %430 = arith.minimumf %429, %428 : vector<16x128xf32>
    %cst_204 = arith.constant dense<0.000000e+00> : vector<16x128xf32>
    %431 = tpu.matmul %430, %4, %cst_204 {dimension_numbers = #tpu.dot_dimension_numbers<[1], [0], [0], [1], [0, 0, 1, 1], [], []>} : vector<16x128xf32>, vector<128x128xf32>, vector<16x128xf32> -> vector<16x128xf32>
    %432 = vector.broadcast %5 : vector<1x128xf32> to vector<16x128xf32>
    %433 = arith.addf %431, %432 : vector<16x128xf32>
    %c1_i32_205 = arith.constant 1 : i32
    %434 = arith.addi %0, %c1_i32_205 : i32
    %c2_i32_206 = arith.constant 2 : i32
    %435 = arith.addi %434, %c2_i32_206 : i32
    %c0_207 = arith.constant 0 : index
    %436 = arith.index_cast %435 : i32 to index
    %c1_208 = arith.constant 1 : index
    %c0_209 = arith.constant 0 : index
    %437 = vector.load %arg2[%c0_207, %436, %c1_208, %c0_209] : memref<1x18x24x128xf32, #tpu.memory_space<vmem>>, vector<1x1x16x128xf32>
    %438 = vector.shape_cast %437 : vector<1x1x16x128xf32> to vector<16x128xf32>
    %439 = arith.addf %433, %438 : vector<16x128xf32>
    %c0_210 = arith.constant 0 : index
    %c2_211 = arith.constant 2 : index
    %c0_212 = arith.constant 0 : index
    %c0_213 = arith.constant 0 : index
    %440 = vector.load %arg9[%c0_210, %c2_211, %c0_212, %c0_213] : memref<1x8x16x128xf32, #tpu.memory_space<vmem>>, vector<1x1x16x128xf32>
    %441 = vector.shape_cast %440 : vector<1x1x16x128xf32> to vector<16x128xf32>
    %442 = vector.shape_cast %439 : vector<16x128xf32> to vector<1x1x16x128xf32>
    tpu.vector_store %arg9[%c0_210, %c2_211, %c0_212, %c0_213], %442 {strides = array<i32>} : memref<1x8x16x128xf32, #tpu.memory_space<vmem>>, vector<1x1x16x128xf32>,
    %cst_214 = arith.constant 0.000000e+00 : f32
    %443 = vector.broadcast %cst_214 : f32 to vector<16x128xf32>
    %c3_215 = arith.constant 3 : index
    %c0_216 = arith.constant 0 : index
    %c0_217 = arith.constant 0 : index
    %444 = vector.load %arg10[%c3_215, %c0_216, %c0_217] : memref<10x24x128xf32, #tpu.memory_space<vmem>>, vector<1x24x128xf32>
    %445 = vector.shape_cast %444 : vector<1x24x128xf32> to vector<24x128xf32>
    %446 = vector.extract_strided_slice %445 {offsets = [0, 0], sizes = [16, 128], strides = [1, 1]} : vector<24x128xf32> to vector<16x128xf32>
    %447 = vector.broadcast %7 : vector<1x128xf32> to vector<16x128xf32>
    %448 = arith.mulf %446, %447 : vector<16x128xf32>
    %449 = arith.addf %443, %448 : vector<16x128xf32>
    %450 = vector.extract_strided_slice %445 {offsets = [1, 0], sizes = [16, 128], strides = [1, 1]} : vector<24x128xf32> to vector<16x128xf32>
    %451 = vector.broadcast %9 : vector<1x128xf32> to vector<16x128xf32>
    %452 = arith.mulf %450, %451 : vector<16x128xf32>
    %453 = arith.addf %449, %452 : vector<16x128xf32>
    %454 = vector.extract_strided_slice %445 {offsets = [2, 0], sizes = [16, 128], strides = [1, 1]} : vector<24x128xf32> to vector<16x128xf32>
    %455 = vector.broadcast %11 : vector<1x128xf32> to vector<16x128xf32>
    %456 = arith.mulf %454, %455 : vector<16x128xf32>
    %457 = arith.addf %453, %456 : vector<16x128xf32>
    %c4_218 = arith.constant 4 : index
    %c0_219 = arith.constant 0 : index
    %c0_220 = arith.constant 0 : index
    %458 = vector.load %arg10[%c4_218, %c0_219, %c0_220] : memref<10x24x128xf32, #tpu.memory_space<vmem>>, vector<1x24x128xf32>
    %459 = vector.shape_cast %458 : vector<1x24x128xf32> to vector<24x128xf32>
    %460 = vector.extract_strided_slice %459 {offsets = [0, 0], sizes = [16, 128], strides = [1, 1]} : vector<24x128xf32> to vector<16x128xf32>
    %461 = vector.broadcast %13 : vector<1x128xf32> to vector<16x128xf32>
    %462 = arith.mulf %460, %461 : vector<16x128xf32>
    %463 = arith.addf %457, %462 : vector<16x128xf32>
    %464 = vector.extract_strided_slice %459 {offsets = [1, 0], sizes = [16, 128], strides = [1, 1]} : vector<24x128xf32> to vector<16x128xf32>
    %465 = vector.broadcast %15 : vector<1x128xf32> to vector<16x128xf32>
    %466 = arith.mulf %464, %465 : vector<16x128xf32>
    %467 = arith.addf %463, %466 : vector<16x128xf32>
    %468 = vector.extract_strided_slice %459 {offsets = [2, 0], sizes = [16, 128], strides = [1, 1]} : vector<24x128xf32> to vector<16x128xf32>
    %469 = vector.broadcast %17 : vector<1x128xf32> to vector<16x128xf32>
    %470 = arith.mulf %468, %469 : vector<16x128xf32>
    %471 = arith.addf %467, %470 : vector<16x128xf32>
    %c5_221 = arith.constant 5 : index
    %c0_222 = arith.constant 0 : index
    %c0_223 = arith.constant 0 : index
    %472 = vector.load %arg10[%c5_221, %c0_222, %c0_223] : memref<10x24x128xf32, #tpu.memory_space<vmem>>, vector<1x24x128xf32>
    %473 = vector.shape_cast %472 : vector<1x24x128xf32> to vector<24x128xf32>
    %474 = vector.extract_strided_slice %473 {offsets = [0, 0], sizes = [16, 128], strides = [1, 1]} : vector<24x128xf32> to vector<16x128xf32>
    %475 = vector.broadcast %19 : vector<1x128xf32> to vector<16x128xf32>
    %476 = arith.mulf %474, %475 : vector<16x128xf32>
    %477 = arith.addf %471, %476 : vector<16x128xf32>
    %478 = vector.extract_strided_slice %473 {offsets = [1, 0], sizes = [16, 128], strides = [1, 1]} : vector<24x128xf32> to vector<16x128xf32>
    %479 = vector.broadcast %21 : vector<1x128xf32> to vector<16x128xf32>
    %480 = arith.mulf %478, %479 : vector<16x128xf32>
    %481 = arith.addf %477, %480 : vector<16x128xf32>
    %482 = vector.extract_strided_slice %473 {offsets = [2, 0], sizes = [16, 128], strides = [1, 1]} : vector<24x128xf32> to vector<16x128xf32>
    %483 = vector.broadcast %23 : vector<1x128xf32> to vector<16x128xf32>
    %484 = arith.mulf %482, %483 : vector<16x128xf32>
    %485 = arith.addf %481, %484 : vector<16x128xf32>
    %486 = vector.broadcast %3 : vector<1x128xf32> to vector<16x128xf32>
    %487 = arith.addf %485, %486 : vector<16x128xf32>
    %cst_224 = arith.constant 0.000000e+00 : f32
    %cst_225 = arith.constant 6.000000e+00 : f32
    %488 = vector.broadcast %cst_224 : f32 to vector<16x128xf32>
    %489 = arith.maximumf %488, %487 : vector<16x128xf32>
    %490 = vector.broadcast %cst_225 : f32 to vector<16x128xf32>
    %491 = arith.minimumf %490, %489 : vector<16x128xf32>
    %cst_226 = arith.constant dense<0.000000e+00> : vector<16x128xf32>
    %492 = tpu.matmul %491, %4, %cst_226 {dimension_numbers = #tpu.dot_dimension_numbers<[1], [0], [0], [1], [0, 0, 1, 1], [], []>} : vector<16x128xf32>, vector<128x128xf32>, vector<16x128xf32> -> vector<16x128xf32>
    %493 = vector.broadcast %5 : vector<1x128xf32> to vector<16x128xf32>
    %494 = arith.addf %492, %493 : vector<16x128xf32>
    %c1_i32_227 = arith.constant 1 : i32
    %495 = arith.addi %0, %c1_i32_227 : i32
    %c3_i32_228 = arith.constant 3 : i32
    %496 = arith.addi %495, %c3_i32_228 : i32
    %c0_229 = arith.constant 0 : index
    %497 = arith.index_cast %496 : i32 to index
    %c1_230 = arith.constant 1 : index
    %c0_231 = arith.constant 0 : index
    %498 = vector.load %arg2[%c0_229, %497, %c1_230, %c0_231] : memref<1x18x24x128xf32, #tpu.memory_space<vmem>>, vector<1x1x16x128xf32>
    %499 = vector.shape_cast %498 : vector<1x1x16x128xf32> to vector<16x128xf32>
    %500 = arith.addf %494, %499 : vector<16x128xf32>
    %c0_232 = arith.constant 0 : index
    %c3_233 = arith.constant 3 : index
    %c0_234 = arith.constant 0 : index
    %c0_235 = arith.constant 0 : index
    %501 = vector.load %arg9[%c0_232, %c3_233, %c0_234, %c0_235] : memref<1x8x16x128xf32, #tpu.memory_space<vmem>>, vector<1x1x16x128xf32>
    %502 = vector.shape_cast %501 : vector<1x1x16x128xf32> to vector<16x128xf32>
    %503 = vector.shape_cast %500 : vector<16x128xf32> to vector<1x1x16x128xf32>
    tpu.vector_store %arg9[%c0_232, %c3_233, %c0_234, %c0_235], %503 {strides = array<i32>} : memref<1x8x16x128xf32, #tpu.memory_space<vmem>>, vector<1x1x16x128xf32>,
    %cst_236 = arith.constant 0.000000e+00 : f32
    %504 = vector.broadcast %cst_236 : f32 to vector<16x128xf32>
    %c4_237 = arith.constant 4 : index
    %c0_238 = arith.constant 0 : index
    %c0_239 = arith.constant 0 : index
    %505 = vector.load %arg10[%c4_237, %c0_238, %c0_239] : memref<10x24x128xf32, #tpu.memory_space<vmem>>, vector<1x24x128xf32>
    %506 = vector.shape_cast %505 : vector<1x24x128xf32> to vector<24x128xf32>
    %507 = vector.extract_strided_slice %506 {offsets = [0, 0], sizes = [16, 128], strides = [1, 1]} : vector<24x128xf32> to vector<16x128xf32>
    %508 = vector.broadcast %7 : vector<1x128xf32> to vector<16x128xf32>
    %509 = arith.mulf %507, %508 : vector<16x128xf32>
    %510 = arith.addf %504, %509 : vector<16x128xf32>
    %511 = vector.extract_strided_slice %506 {offsets = [1, 0], sizes = [16, 128], strides = [1, 1]} : vector<24x128xf32> to vector<16x128xf32>
    %512 = vector.broadcast %9 : vector<1x128xf32> to vector<16x128xf32>
    %513 = arith.mulf %511, %512 : vector<16x128xf32>
    %514 = arith.addf %510, %513 : vector<16x128xf32>
    %515 = vector.extract_strided_slice %506 {offsets = [2, 0], sizes = [16, 128], strides = [1, 1]} : vector<24x128xf32> to vector<16x128xf32>
    %516 = vector.broadcast %11 : vector<1x128xf32> to vector<16x128xf32>
    %517 = arith.mulf %515, %516 : vector<16x128xf32>
    %518 = arith.addf %514, %517 : vector<16x128xf32>
    %c5_240 = arith.constant 5 : index
    %c0_241 = arith.constant 0 : index
    %c0_242 = arith.constant 0 : index
    %519 = vector.load %arg10[%c5_240, %c0_241, %c0_242] : memref<10x24x128xf32, #tpu.memory_space<vmem>>, vector<1x24x128xf32>
    %520 = vector.shape_cast %519 : vector<1x24x128xf32> to vector<24x128xf32>
    %521 = vector.extract_strided_slice %520 {offsets = [0, 0], sizes = [16, 128], strides = [1, 1]} : vector<24x128xf32> to vector<16x128xf32>
    %522 = vector.broadcast %13 : vector<1x128xf32> to vector<16x128xf32>
    %523 = arith.mulf %521, %522 : vector<16x128xf32>
    %524 = arith.addf %518, %523 : vector<16x128xf32>
    %525 = vector.extract_strided_slice %520 {offsets = [1, 0], sizes = [16, 128], strides = [1, 1]} : vector<24x128xf32> to vector<16x128xf32>
    %526 = vector.broadcast %15 : vector<1x128xf32> to vector<16x128xf32>
    %527 = arith.mulf %525, %526 : vector<16x128xf32>
    %528 = arith.addf %524, %527 : vector<16x128xf32>
    %529 = vector.extract_strided_slice %520 {offsets = [2, 0], sizes = [16, 128], strides = [1, 1]} : vector<24x128xf32> to vector<16x128xf32>
    %530 = vector.broadcast %17 : vector<1x128xf32> to vector<16x128xf32>
    %531 = arith.mulf %529, %530 : vector<16x128xf32>
    %532 = arith.addf %528, %531 : vector<16x128xf32>
    %c6_243 = arith.constant 6 : index
    %c0_244 = arith.constant 0 : index
    %c0_245 = arith.constant 0 : index
    %533 = vector.load %arg10[%c6_243, %c0_244, %c0_245] : memref<10x24x128xf32, #tpu.memory_space<vmem>>, vector<1x24x128xf32>
    %534 = vector.shape_cast %533 : vector<1x24x128xf32> to vector<24x128xf32>
    %535 = vector.extract_strided_slice %534 {offsets = [0, 0], sizes = [16, 128], strides = [1, 1]} : vector<24x128xf32> to vector<16x128xf32>
    %536 = vector.broadcast %19 : vector<1x128xf32> to vector<16x128xf32>
    %537 = arith.mulf %535, %536 : vector<16x128xf32>
    %538 = arith.addf %532, %537 : vector<16x128xf32>
    %539 = vector.extract_strided_slice %534 {offsets = [1, 0], sizes = [16, 128], strides = [1, 1]} : vector<24x128xf32> to vector<16x128xf32>
    %540 = vector.broadcast %21 : vector<1x128xf32> to vector<16x128xf32>
    %541 = arith.mulf %539, %540 : vector<16x128xf32>
    %542 = arith.addf %538, %541 : vector<16x128xf32>
    %543 = vector.extract_strided_slice %534 {offsets = [2, 0], sizes = [16, 128], strides = [1, 1]} : vector<24x128xf32> to vector<16x128xf32>
    %544 = vector.broadcast %23 : vector<1x128xf32> to vector<16x128xf32>
    %545 = arith.mulf %543, %544 : vector<16x128xf32>
    %546 = arith.addf %542, %545 : vector<16x128xf32>
    %547 = vector.broadcast %3 : vector<1x128xf32> to vector<16x128xf32>
    %548 = arith.addf %546, %547 : vector<16x128xf32>
    %cst_246 = arith.constant 0.000000e+00 : f32
    %cst_247 = arith.constant 6.000000e+00 : f32
    %549 = vector.broadcast %cst_246 : f32 to vector<16x128xf32>
    %550 = arith.maximumf %549, %548 : vector<16x128xf32>
    %551 = vector.broadcast %cst_247 : f32 to vector<16x128xf32>
    %552 = arith.minimumf %551, %550 : vector<16x128xf32>
    %cst_248 = arith.constant dense<0.000000e+00> : vector<16x128xf32>
    %553 = tpu.matmul %552, %4, %cst_248 {dimension_numbers = #tpu.dot_dimension_numbers<[1], [0], [0], [1], [0, 0, 1, 1], [], []>} : vector<16x128xf32>, vector<128x128xf32>, vector<16x128xf32> -> vector<16x128xf32>
    %554 = vector.broadcast %5 : vector<1x128xf32> to vector<16x128xf32>
    %555 = arith.addf %553, %554 : vector<16x128xf32>
    %c1_i32_249 = arith.constant 1 : i32
    %556 = arith.addi %0, %c1_i32_249 : i32
    %c4_i32_250 = arith.constant 4 : i32
    %557 = arith.addi %556, %c4_i32_250 : i32
    %c0_251 = arith.constant 0 : index
    %558 = arith.index_cast %557 : i32 to index
    %c1_252 = arith.constant 1 : index
    %c0_253 = arith.constant 0 : index
    %559 = vector.load %arg2[%c0_251, %558, %c1_252, %c0_253] : memref<1x18x24x128xf32, #tpu.memory_space<vmem>>, vector<1x1x16x128xf32>
    %560 = vector.shape_cast %559 : vector<1x1x16x128xf32> to vector<16x128xf32>
    %561 = arith.addf %555, %560 : vector<16x128xf32>
    %c0_254 = arith.constant 0 : index
    %c4_255 = arith.constant 4 : index
    %c0_256 = arith.constant 0 : index
    %c0_257 = arith.constant 0 : index
    %562 = vector.load %arg9[%c0_254, %c4_255, %c0_256, %c0_257] : memref<1x8x16x128xf32, #tpu.memory_space<vmem>>, vector<1x1x16x128xf32>
    %563 = vector.shape_cast %562 : vector<1x1x16x128xf32> to vector<16x128xf32>
    %564 = vector.shape_cast %561 : vector<16x128xf32> to vector<1x1x16x128xf32>
    tpu.vector_store %arg9[%c0_254, %c4_255, %c0_256, %c0_257], %564 {strides = array<i32>} : memref<1x8x16x128xf32, #tpu.memory_space<vmem>>, vector<1x1x16x128xf32>,
    %cst_258 = arith.constant 0.000000e+00 : f32
    %565 = vector.broadcast %cst_258 : f32 to vector<16x128xf32>
    %c5_259 = arith.constant 5 : index
    %c0_260 = arith.constant 0 : index
    %c0_261 = arith.constant 0 : index
    %566 = vector.load %arg10[%c5_259, %c0_260, %c0_261] : memref<10x24x128xf32, #tpu.memory_space<vmem>>, vector<1x24x128xf32>
    %567 = vector.shape_cast %566 : vector<1x24x128xf32> to vector<24x128xf32>
    %568 = vector.extract_strided_slice %567 {offsets = [0, 0], sizes = [16, 128], strides = [1, 1]} : vector<24x128xf32> to vector<16x128xf32>
    %569 = vector.broadcast %7 : vector<1x128xf32> to vector<16x128xf32>
    %570 = arith.mulf %568, %569 : vector<16x128xf32>
    %571 = arith.addf %565, %570 : vector<16x128xf32>
    %572 = vector.extract_strided_slice %567 {offsets = [1, 0], sizes = [16, 128], strides = [1, 1]} : vector<24x128xf32> to vector<16x128xf32>
    %573 = vector.broadcast %9 : vector<1x128xf32> to vector<16x128xf32>
    %574 = arith.mulf %572, %573 : vector<16x128xf32>
    %575 = arith.addf %571, %574 : vector<16x128xf32>
    %576 = vector.extract_strided_slice %567 {offsets = [2, 0], sizes = [16, 128], strides = [1, 1]} : vector<24x128xf32> to vector<16x128xf32>
    %577 = vector.broadcast %11 : vector<1x128xf32> to vector<16x128xf32>
    %578 = arith.mulf %576, %577 : vector<16x128xf32>
    %579 = arith.addf %575, %578 : vector<16x128xf32>
    %c6_262 = arith.constant 6 : index
    %c0_263 = arith.constant 0 : index
    %c0_264 = arith.constant 0 : index
    %580 = vector.load %arg10[%c6_262, %c0_263, %c0_264] : memref<10x24x128xf32, #tpu.memory_space<vmem>>, vector<1x24x128xf32>
    %581 = vector.shape_cast %580 : vector<1x24x128xf32> to vector<24x128xf32>
    %582 = vector.extract_strided_slice %581 {offsets = [0, 0], sizes = [16, 128], strides = [1, 1]} : vector<24x128xf32> to vector<16x128xf32>
    %583 = vector.broadcast %13 : vector<1x128xf32> to vector<16x128xf32>
    %584 = arith.mulf %582, %583 : vector<16x128xf32>
    %585 = arith.addf %579, %584 : vector<16x128xf32>
    %586 = vector.extract_strided_slice %581 {offsets = [1, 0], sizes = [16, 128], strides = [1, 1]} : vector<24x128xf32> to vector<16x128xf32>
    %587 = vector.broadcast %15 : vector<1x128xf32> to vector<16x128xf32>
    %588 = arith.mulf %586, %587 : vector<16x128xf32>
    %589 = arith.addf %585, %588 : vector<16x128xf32>
    %590 = vector.extract_strided_slice %581 {offsets = [2, 0], sizes = [16, 128], strides = [1, 1]} : vector<24x128xf32> to vector<16x128xf32>
    %591 = vector.broadcast %17 : vector<1x128xf32> to vector<16x128xf32>
    %592 = arith.mulf %590, %591 : vector<16x128xf32>
    %593 = arith.addf %589, %592 : vector<16x128xf32>
    %c7_265 = arith.constant 7 : index
    %c0_266 = arith.constant 0 : index
    %c0_267 = arith.constant 0 : index
    %594 = vector.load %arg10[%c7_265, %c0_266, %c0_267] : memref<10x24x128xf32, #tpu.memory_space<vmem>>, vector<1x24x128xf32>
    %595 = vector.shape_cast %594 : vector<1x24x128xf32> to vector<24x128xf32>
    %596 = vector.extract_strided_slice %595 {offsets = [0, 0], sizes = [16, 128], strides = [1, 1]} : vector<24x128xf32> to vector<16x128xf32>
    %597 = vector.broadcast %19 : vector<1x128xf32> to vector<16x128xf32>
    %598 = arith.mulf %596, %597 : vector<16x128xf32>
    %599 = arith.addf %593, %598 : vector<16x128xf32>
    %600 = vector.extract_strided_slice %595 {offsets = [1, 0], sizes = [16, 128], strides = [1, 1]} : vector<24x128xf32> to vector<16x128xf32>
    %601 = vector.broadcast %21 : vector<1x128xf32> to vector<16x128xf32>
    %602 = arith.mulf %600, %601 : vector<16x128xf32>
    %603 = arith.addf %599, %602 : vector<16x128xf32>
    %604 = vector.extract_strided_slice %595 {offsets = [2, 0], sizes = [16, 128], strides = [1, 1]} : vector<24x128xf32> to vector<16x128xf32>
    %605 = vector.broadcast %23 : vector<1x128xf32> to vector<16x128xf32>
    %606 = arith.mulf %604, %605 : vector<16x128xf32>
    %607 = arith.addf %603, %606 : vector<16x128xf32>
    %608 = vector.broadcast %3 : vector<1x128xf32> to vector<16x128xf32>
    %609 = arith.addf %607, %608 : vector<16x128xf32>
    %cst_268 = arith.constant 0.000000e+00 : f32
    %cst_269 = arith.constant 6.000000e+00 : f32
    %610 = vector.broadcast %cst_268 : f32 to vector<16x128xf32>
    %611 = arith.maximumf %610, %609 : vector<16x128xf32>
    %612 = vector.broadcast %cst_269 : f32 to vector<16x128xf32>
    %613 = arith.minimumf %612, %611 : vector<16x128xf32>
    %cst_270 = arith.constant dense<0.000000e+00> : vector<16x128xf32>
    %614 = tpu.matmul %613, %4, %cst_270 {dimension_numbers = #tpu.dot_dimension_numbers<[1], [0], [0], [1], [0, 0, 1, 1], [], []>} : vector<16x128xf32>, vector<128x128xf32>, vector<16x128xf32> -> vector<16x128xf32>
    %615 = vector.broadcast %5 : vector<1x128xf32> to vector<16x128xf32>
    %616 = arith.addf %614, %615 : vector<16x128xf32>
    %c1_i32_271 = arith.constant 1 : i32
    %617 = arith.addi %0, %c1_i32_271 : i32
    %c5_i32_272 = arith.constant 5 : i32
    %618 = arith.addi %617, %c5_i32_272 : i32
    %c0_273 = arith.constant 0 : index
    %619 = arith.index_cast %618 : i32 to index
    %c1_274 = arith.constant 1 : index
    %c0_275 = arith.constant 0 : index
    %620 = vector.load %arg2[%c0_273, %619, %c1_274, %c0_275] : memref<1x18x24x128xf32, #tpu.memory_space<vmem>>, vector<1x1x16x128xf32>
    %621 = vector.shape_cast %620 : vector<1x1x16x128xf32> to vector<16x128xf32>
    %622 = arith.addf %616, %621 : vector<16x128xf32>
    %c0_276 = arith.constant 0 : index
    %c5_277 = arith.constant 5 : index
    %c0_278 = arith.constant 0 : index
    %c0_279 = arith.constant 0 : index
    %623 = vector.load %arg9[%c0_276, %c5_277, %c0_278, %c0_279] : memref<1x8x16x128xf32, #tpu.memory_space<vmem>>, vector<1x1x16x128xf32>
    %624 = vector.shape_cast %623 : vector<1x1x16x128xf32> to vector<16x128xf32>
    %625 = vector.shape_cast %622 : vector<16x128xf32> to vector<1x1x16x128xf32>
    tpu.vector_store %arg9[%c0_276, %c5_277, %c0_278, %c0_279], %625 {strides = array<i32>} : memref<1x8x16x128xf32, #tpu.memory_space<vmem>>, vector<1x1x16x128xf32>,
    %cst_280 = arith.constant 0.000000e+00 : f32
    %626 = vector.broadcast %cst_280 : f32 to vector<16x128xf32>
    %c6_281 = arith.constant 6 : index
    %c0_282 = arith.constant 0 : index
    %c0_283 = arith.constant 0 : index
    %627 = vector.load %arg10[%c6_281, %c0_282, %c0_283] : memref<10x24x128xf32, #tpu.memory_space<vmem>>, vector<1x24x128xf32>
    %628 = vector.shape_cast %627 : vector<1x24x128xf32> to vector<24x128xf32>
    %629 = vector.extract_strided_slice %628 {offsets = [0, 0], sizes = [16, 128], strides = [1, 1]} : vector<24x128xf32> to vector<16x128xf32>
    %630 = vector.broadcast %7 : vector<1x128xf32> to vector<16x128xf32>
    %631 = arith.mulf %629, %630 : vector<16x128xf32>
    %632 = arith.addf %626, %631 : vector<16x128xf32>
    %633 = vector.extract_strided_slice %628 {offsets = [1, 0], sizes = [16, 128], strides = [1, 1]} : vector<24x128xf32> to vector<16x128xf32>
    %634 = vector.broadcast %9 : vector<1x128xf32> to vector<16x128xf32>
    %635 = arith.mulf %633, %634 : vector<16x128xf32>
    %636 = arith.addf %632, %635 : vector<16x128xf32>
    %637 = vector.extract_strided_slice %628 {offsets = [2, 0], sizes = [16, 128], strides = [1, 1]} : vector<24x128xf32> to vector<16x128xf32>
    %638 = vector.broadcast %11 : vector<1x128xf32> to vector<16x128xf32>
    %639 = arith.mulf %637, %638 : vector<16x128xf32>
    %640 = arith.addf %636, %639 : vector<16x128xf32>
    %c7_284 = arith.constant 7 : index
    %c0_285 = arith.constant 0 : index
    %c0_286 = arith.constant 0 : index
    %641 = vector.load %arg10[%c7_284, %c0_285, %c0_286] : memref<10x24x128xf32, #tpu.memory_space<vmem>>, vector<1x24x128xf32>
    %642 = vector.shape_cast %641 : vector<1x24x128xf32> to vector<24x128xf32>
    %643 = vector.extract_strided_slice %642 {offsets = [0, 0], sizes = [16, 128], strides = [1, 1]} : vector<24x128xf32> to vector<16x128xf32>
    %644 = vector.broadcast %13 : vector<1x128xf32> to vector<16x128xf32>
    %645 = arith.mulf %643, %644 : vector<16x128xf32>
    %646 = arith.addf %640, %645 : vector<16x128xf32>
    %647 = vector.extract_strided_slice %642 {offsets = [1, 0], sizes = [16, 128], strides = [1, 1]} : vector<24x128xf32> to vector<16x128xf32>
    %648 = vector.broadcast %15 : vector<1x128xf32> to vector<16x128xf32>
    %649 = arith.mulf %647, %648 : vector<16x128xf32>
    %650 = arith.addf %646, %649 : vector<16x128xf32>
    %651 = vector.extract_strided_slice %642 {offsets = [2, 0], sizes = [16, 128], strides = [1, 1]} : vector<24x128xf32> to vector<16x128xf32>
    %652 = vector.broadcast %17 : vector<1x128xf32> to vector<16x128xf32>
    %653 = arith.mulf %651, %652 : vector<16x128xf32>
    %654 = arith.addf %650, %653 : vector<16x128xf32>
    %c8_287 = arith.constant 8 : index
    %c0_288 = arith.constant 0 : index
    %c0_289 = arith.constant 0 : index
    %655 = vector.load %arg10[%c8_287, %c0_288, %c0_289] : memref<10x24x128xf32, #tpu.memory_space<vmem>>, vector<1x24x128xf32>
    %656 = vector.shape_cast %655 : vector<1x24x128xf32> to vector<24x128xf32>
    %657 = vector.extract_strided_slice %656 {offsets = [0, 0], sizes = [16, 128], strides = [1, 1]} : vector<24x128xf32> to vector<16x128xf32>
    %658 = vector.broadcast %19 : vector<1x128xf32> to vector<16x128xf32>
    %659 = arith.mulf %657, %658 : vector<16x128xf32>
    %660 = arith.addf %654, %659 : vector<16x128xf32>
    %661 = vector.extract_strided_slice %656 {offsets = [1, 0], sizes = [16, 128], strides = [1, 1]} : vector<24x128xf32> to vector<16x128xf32>
    %662 = vector.broadcast %21 : vector<1x128xf32> to vector<16x128xf32>
    %663 = arith.mulf %661, %662 : vector<16x128xf32>
    %664 = arith.addf %660, %663 : vector<16x128xf32>
    %665 = vector.extract_strided_slice %656 {offsets = [2, 0], sizes = [16, 128], strides = [1, 1]} : vector<24x128xf32> to vector<16x128xf32>
    %666 = vector.broadcast %23 : vector<1x128xf32> to vector<16x128xf32>
    %667 = arith.mulf %665, %666 : vector<16x128xf32>
    %668 = arith.addf %664, %667 : vector<16x128xf32>
    %669 = vector.broadcast %3 : vector<1x128xf32> to vector<16x128xf32>
    %670 = arith.addf %668, %669 : vector<16x128xf32>
    %cst_290 = arith.constant 0.000000e+00 : f32
    %cst_291 = arith.constant 6.000000e+00 : f32
    %671 = vector.broadcast %cst_290 : f32 to vector<16x128xf32>
    %672 = arith.maximumf %671, %670 : vector<16x128xf32>
    %673 = vector.broadcast %cst_291 : f32 to vector<16x128xf32>
    %674 = arith.minimumf %673, %672 : vector<16x128xf32>
    %cst_292 = arith.constant dense<0.000000e+00> : vector<16x128xf32>
    %675 = tpu.matmul %674, %4, %cst_292 {dimension_numbers = #tpu.dot_dimension_numbers<[1], [0], [0], [1], [0, 0, 1, 1], [], []>} : vector<16x128xf32>, vector<128x128xf32>, vector<16x128xf32> -> vector<16x128xf32>
    %676 = vector.broadcast %5 : vector<1x128xf32> to vector<16x128xf32>
    %677 = arith.addf %675, %676 : vector<16x128xf32>
    %c1_i32_293 = arith.constant 1 : i32
    %678 = arith.addi %0, %c1_i32_293 : i32
    %c6_i32_294 = arith.constant 6 : i32
    %679 = arith.addi %678, %c6_i32_294 : i32
    %c0_295 = arith.constant 0 : index
    %680 = arith.index_cast %679 : i32 to index
    %c1_296 = arith.constant 1 : index
    %c0_297 = arith.constant 0 : index
    %681 = vector.load %arg2[%c0_295, %680, %c1_296, %c0_297] : memref<1x18x24x128xf32, #tpu.memory_space<vmem>>, vector<1x1x16x128xf32>
    %682 = vector.shape_cast %681 : vector<1x1x16x128xf32> to vector<16x128xf32>
    %683 = arith.addf %677, %682 : vector<16x128xf32>
    %c0_298 = arith.constant 0 : index
    %c6_299 = arith.constant 6 : index
    %c0_300 = arith.constant 0 : index
    %c0_301 = arith.constant 0 : index
    %684 = vector.load %arg9[%c0_298, %c6_299, %c0_300, %c0_301] : memref<1x8x16x128xf32, #tpu.memory_space<vmem>>, vector<1x1x16x128xf32>
    %685 = vector.shape_cast %684 : vector<1x1x16x128xf32> to vector<16x128xf32>
    %686 = vector.shape_cast %683 : vector<16x128xf32> to vector<1x1x16x128xf32>
    tpu.vector_store %arg9[%c0_298, %c6_299, %c0_300, %c0_301], %686 {strides = array<i32>} : memref<1x8x16x128xf32, #tpu.memory_space<vmem>>, vector<1x1x16x128xf32>,
    %cst_302 = arith.constant 0.000000e+00 : f32
    %687 = vector.broadcast %cst_302 : f32 to vector<16x128xf32>
    %c7_303 = arith.constant 7 : index
    %c0_304 = arith.constant 0 : index
    %c0_305 = arith.constant 0 : index
    %688 = vector.load %arg10[%c7_303, %c0_304, %c0_305] : memref<10x24x128xf32, #tpu.memory_space<vmem>>, vector<1x24x128xf32>
    %689 = vector.shape_cast %688 : vector<1x24x128xf32> to vector<24x128xf32>
    %690 = vector.extract_strided_slice %689 {offsets = [0, 0], sizes = [16, 128], strides = [1, 1]} : vector<24x128xf32> to vector<16x128xf32>
    %691 = vector.broadcast %7 : vector<1x128xf32> to vector<16x128xf32>
    %692 = arith.mulf %690, %691 : vector<16x128xf32>
    %693 = arith.addf %687, %692 : vector<16x128xf32>
    %694 = vector.extract_strided_slice %689 {offsets = [1, 0], sizes = [16, 128], strides = [1, 1]} : vector<24x128xf32> to vector<16x128xf32>
    %695 = vector.broadcast %9 : vector<1x128xf32> to vector<16x128xf32>
    %696 = arith.mulf %694, %695 : vector<16x128xf32>
    %697 = arith.addf %693, %696 : vector<16x128xf32>
    %698 = vector.extract_strided_slice %689 {offsets = [2, 0], sizes = [16, 128], strides = [1, 1]} : vector<24x128xf32> to vector<16x128xf32>
    %699 = vector.broadcast %11 : vector<1x128xf32> to vector<16x128xf32>
    %700 = arith.mulf %698, %699 : vector<16x128xf32>
    %701 = arith.addf %697, %700 : vector<16x128xf32>
    %c8_306 = arith.constant 8 : index
    %c0_307 = arith.constant 0 : index
    %c0_308 = arith.constant 0 : index
    %702 = vector.load %arg10[%c8_306, %c0_307, %c0_308] : memref<10x24x128xf32, #tpu.memory_space<vmem>>, vector<1x24x128xf32>
    %703 = vector.shape_cast %702 : vector<1x24x128xf32> to vector<24x128xf32>
    %704 = vector.extract_strided_slice %703 {offsets = [0, 0], sizes = [16, 128], strides = [1, 1]} : vector<24x128xf32> to vector<16x128xf32>
    %705 = vector.broadcast %13 : vector<1x128xf32> to vector<16x128xf32>
    %706 = arith.mulf %704, %705 : vector<16x128xf32>
    %707 = arith.addf %701, %706 : vector<16x128xf32>
    %708 = vector.extract_strided_slice %703 {offsets = [1, 0], sizes = [16, 128], strides = [1, 1]} : vector<24x128xf32> to vector<16x128xf32>
    %709 = vector.broadcast %15 : vector<1x128xf32> to vector<16x128xf32>
    %710 = arith.mulf %708, %709 : vector<16x128xf32>
    %711 = arith.addf %707, %710 : vector<16x128xf32>
    %712 = vector.extract_strided_slice %703 {offsets = [2, 0], sizes = [16, 128], strides = [1, 1]} : vector<24x128xf32> to vector<16x128xf32>
    %713 = vector.broadcast %17 : vector<1x128xf32> to vector<16x128xf32>
    %714 = arith.mulf %712, %713 : vector<16x128xf32>
    %715 = arith.addf %711, %714 : vector<16x128xf32>
    %c9_309 = arith.constant 9 : index
    %c0_310 = arith.constant 0 : index
    %c0_311 = arith.constant 0 : index
    %716 = vector.load %arg10[%c9_309, %c0_310, %c0_311] : memref<10x24x128xf32, #tpu.memory_space<vmem>>, vector<1x24x128xf32>
    %717 = vector.shape_cast %716 : vector<1x24x128xf32> to vector<24x128xf32>
    %718 = vector.extract_strided_slice %717 {offsets = [0, 0], sizes = [16, 128], strides = [1, 1]} : vector<24x128xf32> to vector<16x128xf32>
    %719 = vector.broadcast %19 : vector<1x128xf32> to vector<16x128xf32>
    %720 = arith.mulf %718, %719 : vector<16x128xf32>
    %721 = arith.addf %715, %720 : vector<16x128xf32>
    %722 = vector.extract_strided_slice %717 {offsets = [1, 0], sizes = [16, 128], strides = [1, 1]} : vector<24x128xf32> to vector<16x128xf32>
    %723 = vector.broadcast %21 : vector<1x128xf32> to vector<16x128xf32>
    %724 = arith.mulf %722, %723 : vector<16x128xf32>
    %725 = arith.addf %721, %724 : vector<16x128xf32>
    %726 = vector.extract_strided_slice %717 {offsets = [2, 0], sizes = [16, 128], strides = [1, 1]} : vector<24x128xf32> to vector<16x128xf32>
    %727 = vector.broadcast %23 : vector<1x128xf32> to vector<16x128xf32>
    %728 = arith.mulf %726, %727 : vector<16x128xf32>
    %729 = arith.addf %725, %728 : vector<16x128xf32>
    %730 = vector.broadcast %3 : vector<1x128xf32> to vector<16x128xf32>
    %731 = arith.addf %729, %730 : vector<16x128xf32>
    %cst_312 = arith.constant 0.000000e+00 : f32
    %cst_313 = arith.constant 6.000000e+00 : f32
    %732 = vector.broadcast %cst_312 : f32 to vector<16x128xf32>
    %733 = arith.maximumf %732, %731 : vector<16x128xf32>
    %734 = vector.broadcast %cst_313 : f32 to vector<16x128xf32>
    %735 = arith.minimumf %734, %733 : vector<16x128xf32>
    %cst_314 = arith.constant dense<0.000000e+00> : vector<16x128xf32>
    %736 = tpu.matmul %735, %4, %cst_314 {dimension_numbers = #tpu.dot_dimension_numbers<[1], [0], [0], [1], [0, 0, 1, 1], [], []>} : vector<16x128xf32>, vector<128x128xf32>, vector<16x128xf32> -> vector<16x128xf32>
    %737 = vector.broadcast %5 : vector<1x128xf32> to vector<16x128xf32>
    %738 = arith.addf %736, %737 : vector<16x128xf32>
    %c1_i32_315 = arith.constant 1 : i32
    %739 = arith.addi %0, %c1_i32_315 : i32
    %c7_i32_316 = arith.constant 7 : i32
    %740 = arith.addi %739, %c7_i32_316 : i32
    %c0_317 = arith.constant 0 : index
    %741 = arith.index_cast %740 : i32 to index
    %c1_318 = arith.constant 1 : index
    %c0_319 = arith.constant 0 : index
    %742 = vector.load %arg2[%c0_317, %741, %c1_318, %c0_319] : memref<1x18x24x128xf32, #tpu.memory_space<vmem>>, vector<1x1x16x128xf32>
    %743 = vector.shape_cast %742 : vector<1x1x16x128xf32> to vector<16x128xf32>
    %744 = arith.addf %738, %743 : vector<16x128xf32>
    %c0_320 = arith.constant 0 : index
    %c7_321 = arith.constant 7 : index
    %c0_322 = arith.constant 0 : index
    %c0_323 = arith.constant 0 : index
    %745 = vector.load %arg9[%c0_320, %c7_321, %c0_322, %c0_323] : memref<1x8x16x128xf32, #tpu.memory_space<vmem>>, vector<1x1x16x128xf32>
    %746 = vector.shape_cast %745 : vector<1x1x16x128xf32> to vector<16x128xf32>
    %747 = vector.shape_cast %744 : vector<16x128xf32> to vector<1x1x16x128xf32>
    tpu.vector_store %arg9[%c0_320, %c7_321, %c0_322, %c0_323], %747 {strides = array<i32>} : memref<1x8x16x128xf32, #tpu.memory_space<vmem>>, vector<1x1x16x128xf32>,
    return
  }
  func.func @transform_0(%arg0: i32, %arg1: i32) -> (i32, i32, i32, i32) {
    %c0_i32 = arith.constant 0 : i32
    %c0_i32_0 = arith.constant 0 : i32
    %c0_i32_1 = arith.constant 0 : i32
    %c0_i32_2 = arith.constant 0 : i32
    return %arg0, %c0_i32, %c0_i32_0, %c0_i32_1 : i32, i32, i32, i32
  }
  func.func @transform_1(%arg0: i32, %arg1: i32) -> (i32, i32) {
    %c0_i32 = arith.constant 0 : i32
    %c0_i32_0 = arith.constant 0 : i32
    %c0_i32_1 = arith.constant 0 : i32
    return %c0_i32, %c0_i32_0 : i32, i32
  }
  func.func @transform_2(%arg0: i32, %arg1: i32) -> (i32, i32) {
    %c0_i32 = arith.constant 0 : i32
    %c0_i32_0 = arith.constant 0 : i32
    %c0_i32_1 = arith.constant 0 : i32
    return %c0_i32, %c0_i32_0 : i32, i32
  }
  func.func @transform_3(%arg0: i32, %arg1: i32) -> (i32, i32, i32) {
    %c0_i32 = arith.constant 0 : i32
    %c0_i32_0 = arith.constant 0 : i32
    %c0_i32_1 = arith.constant 0 : i32
    %c0_i32_2 = arith.constant 0 : i32
    return %c0_i32, %c0_i32_0, %c0_i32_1 : i32, i32, i32
  }
  func.func @transform_4(%arg0: i32, %arg1: i32) -> (i32, i32) {
    %c0_i32 = arith.constant 0 : i32
    %c0_i32_0 = arith.constant 0 : i32
    %c0_i32_1 = arith.constant 0 : i32
    return %c0_i32, %c0_i32_0 : i32, i32
  }
  func.func @transform_5(%arg0: i32, %arg1: i32) -> (i32, i32) {
    %c0_i32 = arith.constant 0 : i32
    %c0_i32_0 = arith.constant 0 : i32
    %c0_i32_1 = arith.constant 0 : i32
    return %c0_i32, %c0_i32_0 : i32, i32
  }
  func.func @transform_6(%arg0: i32, %arg1: i32) -> (i32, i32) {
    %c0_i32 = arith.constant 0 : i32
    %c0_i32_0 = arith.constant 0 : i32
    %c0_i32_1 = arith.constant 0 : i32
    return %c0_i32, %c0_i32_0 : i32, i32
  }
  func.func @transform_7(%arg0: i32, %arg1: i32) -> (i32, i32, i32, i32) {
    %c0_i32 = arith.constant 0 : i32
    %c0_i32_0 = arith.constant 0 : i32
    %c0_i32_1 = arith.constant 0 : i32
    return %arg0, %arg1, %c0_i32, %c0_i32_0 : i32, i32, i32, i32
  }
}

</mosaic_0001>

<llo_original>
// kernel: tpu_custom_call.1
$region0: #{tpu_custom_call.1}
  #allocation0 [shape = 'u32[]', space=smem, size = 0x4, offset = 0x4, fixed_abs, tag = 'smem constant byte address 0x4 - core index']
  #allocation1 [shape = 'u32[144,128]{1,0:T(1,128)}', space=vmem, size = 0x12000, scoped, tag = 'internal scratch']
  #allocation2 [shape = 'f32[10,24,128]{2,1,0:T(8,128)}', space=vmem, size = 0x1e000, scoped, tag = 'scratch operand']
  %s0 = inlined_call_operand.hbm [shape: f32[2,18,24,128], index: 0, kind: input, shape index: {}]
  %s1 = inlined_call_operand.hbm [shape: f32[128,128], index: 1, kind: input, shape index: {}]
  %s2 = inlined_call_operand.vmem [shape: f32[1,128], index: 2, kind: input, shape index: {}]
  %s3 = inlined_call_operand.vmem [shape: f32[9,1,128], index: 3, kind: input, shape index: {}]
  %s4 = inlined_call_operand.vmem [shape: f32[1,128], index: 4, kind: input, shape index: {}]
  %s5 = inlined_call_operand.hbm [shape: f32[128,128], index: 5, kind: input, shape index: {}]
  %s6 = inlined_call_operand.vmem [shape: f32[1,128], index: 6, kind: input, shape index: {}]
  %s7 = inlined_call_operand.hbm [shape: f32[2,16,16,128], index: 7, kind: output, shape index: {}]
  %s8 = sld [smem:[#allocation0]]
  $region73: #{tpu_custom_call.1} parent=0
    _
  %s10 = ssub.s32 1, %s8
  %s11 = scalar_select 0, %s10, %s8
  $region1: #{tpu_custom_call.1} parent=0
    #allocation3 [shape = 'u8[442368]{0}', space=vmem, size = 0x6c000, scoped, tag = 'input window, operand 0']
    #allocation4 [shape = 's32[2]{0}', space=sflag, size = 0x8, scoped, tag = 'scoped memory for tpu_custom_call.1']
    #allocation5 [shape = 's32[2]{0}', space=sflag, size = 0x8, scoped, tag = 'scoped memory for tpu_custom_call.1']
    #allocation6 [shape = 'u8[65536]{0}', space=vmem, size = 0x10000, scoped, tag = 'input window, operand 1, single buffered']
    #allocation7 [shape = 's32[1]{0}', space=sflag, size = 0x4, scoped, tag = 'scoped memory for tpu_custom_call.1']
    #allocation8 [shape = 'u8[65536]{0}', space=vmem, size = 0x10000, scoped, tag = 'input window, operand 5, single buffered']
    #allocation9 [shape = 'u8[131072]{0}', space=vmem, size = 0x20000, scoped, tag = 'output window, operand 0']
    %12 = vsyncpa [#allocation4], 0
    %s13 = scalar_lea.sflag [#allocation4], 1
    %14 = vsyncpa %s13, 0
    %15 = vsyncpa [#allocation7], 0
    %16 = vsyncpa [#allocation5], 0
    %s17 = scalar_lea.sflag [#allocation5], 1
    %18 = vsyncpa %s17, 0
    loop: start=0, step=1, limit=6
    $region2: #{tpu_custom_call.1} parent=1 // loop_pre_header
      _
    $region3: #{tpu_custom_call.1} parent=1 // loop_header
      %s20 = sphi 0, %s24
      %p21 = scmp.ge.s32.totalorder %s20, 6
      %s27 = sphi 0, %s39
      %s28 = sphi 0, %s35
      %s29 = sphi 0, %s27
      %s30 = sphi 0, %s28
      %s31 = sphi 0, %s29
      %s32 = sphi 0, %s30
      %s42 = sphi 0, %s44
      %s45 = sphi 0, %s42
      %s46 = sphi 0, %s45
      %s62 = sphi 0, %s46
      %s66 = sphi 0, %s66
      %s68 = sphi 0, %s66
      %s69 = sphi 0, %s68
      %s83 = sphi 0, %s69
      %s87 = sphi 0, %s87
      %s89 = sphi 0, %s87
      %s90 = sphi 0, %s89
      %s104 = sphi 0, %s90
      %s108 = sphi 0, %s108
      %s110 = sphi 0, %s108
      %s111 = sphi 0, %s110
      %s125 = sphi 0, %s111
      %s129 = sphi 0, %s129
      %s131 = sphi 0, %s129
      %s132 = sphi 0, %s131
      %s146 = sphi 0, %s132
      %s150 = sphi 0, %s150
      %s152 = sphi 0, %s150
      %s153 = sphi 0, %s152
      %s167 = sphi 0, %s153
      %s171 = sphi 0, %s171
      %s173 = sphi 0, %s171
      %s174 = sphi 0, %s173
      %s188 = sphi 0, %s174
      %s196 = sphi 0, %s198
      %s199 = sphi 0, %s196
      %s200 = sphi 0, %s199
      %s216 = sphi 0, %s200
    $region4: #{tpu_custom_call.1} parent=1 // loop_header_branch
      %23 = sbr.rel (%p21) target = $region8
    $region5: #{tpu_custom_call.1} parent=1 // loop_body
      %s25 = ssub.s32 %s20, 1
      %s26 = ssub.s32 %s20, 2
      %s33 = sadd.s32 1, %s28
      %p34 = scmp.ge.s32.totalorder %s33, 2
      %s35 = scalar_select %p34, 0, %s33
      %s36 = sadd.s32 1, %s27
      %s37 = scalar_select %p34, %s36, %s27
      %p38 = scmp.ge.s32.totalorder %s37, 2
      %s39 = scalar_select %p38, 0, %s37
      %s40 = ssub.s32 %s27, %s39
      %p41 = scmp.eq.s32.totalorder %s40, 0
      %s43 = sadd.s32 %s42, 1
      %s44 = scalar_select %p41, %s42, %s43
      %p47 = pneg %p41
      %p48 = scmp.eq.s32.totalorder %s20, 3
      %p49 = por %p47, %p48
      %p50 = scmp.ne.s32.totalorder %s42, %s45
      %p51 = scmp.eq.s32.totalorder %s20, 0
      %p52 = por %p50, %p51
      %p53 = scmp.ne.s32.totalorder %s42, %s45
      %p54 = scmp.eq.s32.totalorder %s25, 3
      %p55 = por %p53, %p54
      %p56 = scmp.ne.s32.totalorder %s45, %s46
      %p57 = scmp.eq.s32.totalorder %s25, 0
      %p58 = por %p56, %p57
      %p59 = scmp.ne.s32.totalorder %s45, %s46
      %p60 = scmp.eq.s32.totalorder %s26, 3
      %p61 = por %p59, %p60
      %p63 = scmp.ne.s32.totalorder %s46, %s62
      %p64 = scmp.eq.s32.totalorder %s26, 0
      %p65 = por %p63, %p64
      %s67 = sadd.s32 %s66, 1
      %p70 = scmp.eq.s32.totalorder %s20, 3
      %p71 = scmp.ne.s32.totalorder %s66, %s68
      %p72 = scmp.eq.s32.totalorder %s20, 0
      %p73 = por %p71, %p72
      %p74 = scmp.ne.s32.totalorder %s66, %s68
      %p75 = scmp.eq.s32.totalorder %s25, 3
      %p76 = por %p74, %p75
      %p77 = scmp.ne.s32.totalorder %s68, %s69
      %p78 = scmp.eq.s32.totalorder %s25, 0
      %p79 = por %p77, %p78
      %p80 = scmp.ne.s32.totalorder %s68, %s69
      %p81 = scmp.eq.s32.totalorder %s26, 3
      %p82 = por %p80, %p81
      %p84 = scmp.ne.s32.totalorder %s69, %s83
      %p85 = scmp.eq.s32.totalorder %s26, 0
      %p86 = por %p84, %p85
      %s88 = sadd.s32 %s87, 1
      %p91 = scmp.eq.s32.totalorder %s20, 3
      %p92 = scmp.ne.s32.totalorder %s87, %s89
      %p93 = scmp.eq.s32.totalorder %s20, 0
      %p94 = por %p92, %p93
      %p95 = scmp.ne.s32.totalorder %s87, %s89
      %p96 = scmp.eq.s32.totalorder %s25, 3
      %p97 = por %p95, %p96
      %p98 = scmp.ne.s32.totalorder %s89, %s90
      %p99 = scmp.eq.s32.totalorder %s25, 0
      %p100 = por %p98, %p99
      %p101 = scmp.ne.s32.totalorder %s89, %s90
      %p102 = scmp.eq.s32.totalorder %s26, 3
      %p103 = por %p101, %p102
      %p105 = scmp.ne.s32.totalorder %s90, %s104
      %p106 = scmp.eq.s32.totalorder %s26, 0
      %p107 = por %p105, %p106
      %s109 = sadd.s32 %s108, 1
      %p112 = scmp.eq.s32.totalorder %s20, 3
      %p113 = scmp.ne.s32.totalorder %s108, %s110
      %p114 = scmp.eq.s32.totalorder %s20, 0
      %p115 = por %p113, %p114
      %p116 = scmp.ne.s32.totalorder %s108, %s110
      %p117 = scmp.eq.s32.totalorder %s25, 3
      %p118 = por %p116, %p117
      %p119 = scmp.ne.s32.totalorder %s110, %s111
      %p120 = scmp.eq.s32.totalorder %s25, 0
      %p121 = por %p119, %p120
      %p122 = scmp.ne.s32.totalorder %s110, %s111
      %p123 = scmp.eq.s32.totalorder %s26, 3
      %p124 = por %p122, %p123
      %p126 = scmp.ne.s32.totalorder %s111, %s125
      %p127 = scmp.eq.s32.totalorder %s26, 0
      %p128 = por %p126, %p127
      %s130 = sadd.s32 %s129, 1
      %p133 = scmp.eq.s32.totalorder %s20, 3
      %p134 = scmp.ne.s32.totalorder %s129, %s131
      %p135 = scmp.eq.s32.totalorder %s20, 0
      %p136 = por %p134, %p135
      %p137 = scmp.ne.s32.totalorder %s129, %s131
      %p138 = scmp.eq.s32.totalorder %s25, 3
      %p139 = por %p137, %p138
      %p140 = scmp.ne.s32.totalorder %s131, %s132
      %p141 = scmp.eq.s32.totalorder %s25, 0
      %p142 = por %p140, %p141
      %p143 = scmp.ne.s32.totalorder %s131, %s132
      %p144 = scmp.eq.s32.totalorder %s26, 3
      %p145 = por %p143, %p144
      %p147 = scmp.ne.s32.totalorder %s132, %s146
      %p148 = scmp.eq.s32.totalorder %s26, 0
      %p149 = por %p147, %p148
      %s151 = sadd.s32 %s150, 1
      %p154 = scmp.eq.s32.totalorder %s20, 3
      %p155 = scmp.ne.s32.totalorder %s150, %s152
      %p156 = scmp.eq.s32.totalorder %s20, 0
      %p157 = por %p155, %p156
      %p158 = scmp.ne.s32.totalorder %s150, %s152
      %p159 = scmp.eq.s32.totalorder %s25, 3
      %p160 = por %p158, %p159
      %p161 = scmp.ne.s32.totalorder %s152, %s153
      %p162 = scmp.eq.s32.totalorder %s25, 0
      %p163 = por %p161, %p162
      %p164 = scmp.ne.s32.totalorder %s152, %s153
      %p165 = scmp.eq.s32.totalorder %s26, 3
      %p166 = por %p164, %p165
      %p168 = scmp.ne.s32.totalorder %s153, %s167
      %p169 = scmp.eq.s32.totalorder %s26, 0
      %p170 = por %p168, %p169
      %s172 = sadd.s32 %s171, 1
      %p175 = scmp.eq.s32.totalorder %s20, 3
      %p176 = scmp.ne.s32.totalorder %s171, %s173
      %p177 = scmp.eq.s32.totalorder %s20, 0
      %p178 = por %p176, %p177
      %p179 = scmp.ne.s32.totalorder %s171, %s173
      %p180 = scmp.eq.s32.totalorder %s25, 3
      %p181 = por %p179, %p180
      %p182 = scmp.ne.s32.totalorder %s173, %s174
      %p183 = scmp.eq.s32.totalorder %s25, 0
      %p184 = por %p182, %p183
      %p185 = scmp.ne.s32.totalorder %s173, %s174
      %p186 = scmp.eq.s32.totalorder %s26, 3
      %p187 = por %p185, %p186
      %p189 = scmp.ne.s32.totalorder %s174, %s188
      %p190 = scmp.eq.s32.totalorder %s26, 0
      %p191 = por %p189, %p190
      %s192 = ssub.s32 %s27, %s39
      %s193 = ssub.s32 %s28, %s35
      %s194 = sor.u32 %s192, %s193
      %p195 = scmp.eq.s32.totalorder %s194, 0
      %s197 = sadd.s32 %s196, 1
      %s198 = scalar_select %p195, %s196, %s197
      %p201 = pneg %p195
      %p202 = scmp.eq.s32.totalorder %s20, 3
      %p203 = por %p201, %p202
      %p204 = scmp.ne.s32.totalorder %s196, %s199
      %p205 = scmp.eq.s32.totalorder %s20, 0
      %p206 = por %p204, %p205
      %p207 = scmp.ne.s32.totalorder %s196, %s199
      %p208 = scmp.eq.s32.totalorder %s25, 3
      %p209 = por %p207, %p208
      %p210 = scmp.ne.s32.totalorder %s199, %s200
      %p211 = scmp.eq.s32.totalorder %s25, 0
      %p212 = por %p210, %p211
      %p213 = scmp.ne.s32.totalorder %s199, %s200
      %p214 = scmp.eq.s32.totalorder %s26, 3
      %p215 = por %p213, %p214
      %p217 = scmp.ne.s32.totalorder %s200, %s216
      %p218 = scmp.eq.s32.totalorder %s26, 0
      %p219 = por %p217, %p218
      %p220 = scmp.le.s32.totalorder 1, %s20
      %p221 = scmp.lt.s32.totalorder %s20, 5
      %p222 = pnand %p220, %p221
      %p223 = pneg %p222
      // Predicated region
      $region9: #{tpu_custom_call.1} parent=5 // pred_check
        _
      $region10: #{tpu_custom_call.1} parent=5 // pred_check_branch
        %225 = sbr.rel (%p222) target = $region12
      $region11: #{tpu_custom_call.1} parent=5 // pred_region
        %s226 = ssub.s32 %s20, 1
        // Predicated region
        $region13: #{tpu_custom_call.1} parent=11 // pred_check
          %p227 = pneg %p79
        $region14: #{tpu_custom_call.1} parent=11 // pred_check_branch
          %229 = sbr.rel (%p227) target = $region16
        $region15: #{tpu_custom_call.1} parent=11 // pred_region
          %s231 = ssub.s32 2048, 2048
          %232 = vsyncadd [#allocation7], %s231
          %s233 = sshll.u32 [#allocation6], 4
          %s234 = int_to_ptr.vmem [resolvable:$true] %s233
          %239 = dma.hbm_to_vmem [thread:$0]  %s1, 2048, %s234, [#allocation7], 128, 128, 8
        $region16: #{tpu_custom_call.1} parent=11 // pred_fallthru
          _
        // Predicated region
        $region17: #{tpu_custom_call.1} parent=11 // pred_check
          %p240 = pneg %p100
        $region18: #{tpu_custom_call.1} parent=11 // pred_check_branch
          %242 = sbr.rel (%p240) target = $region20
        $region19: #{tpu_custom_call.1} parent=11 // pred_region
          _
        $region20: #{tpu_custom_call.1} parent=11 // pred_fallthru
          _
        // Predicated region
        $region21: #{tpu_custom_call.1} parent=11 // pred_check
          %p243 = pneg %p121
        $region22: #{tpu_custom_call.1} parent=11 // pred_check_branch
          %245 = sbr.rel (%p243) target = $region24
        $region23: #{tpu_custom_call.1} parent=11 // pred_region
          _
        $region24: #{tpu_custom_call.1} parent=11 // pred_fallthru
          _
        // Predicated region
        $region25: #{tpu_custom_call.1} parent=11 // pred_check
          %p246 = pneg %p142
        $region26: #{tpu_custom_call.1} parent=11 // pred_check_branch
          %248 = sbr.rel (%p246) target = $region28
        $region27: #{tpu_custom_call.1} parent=11 // pred_region
          _
        $region28: #{tpu_custom_call.1} parent=11 // pred_fallthru
          _
        // Predicated region
        $region29: #{tpu_custom_call.1} parent=11 // pred_check
          %p249 = pneg %p163
        $region30: #{tpu_custom_call.1} parent=11 // pred_check_branch
          %251 = sbr.rel (%p249) target = $region32
        $region31: #{tpu_custom_call.1} parent=11 // pred_region
          %s253 = ssub.s32 2048, 2048
          %254 = vsyncadd [#allocation7], %s253
          %s255 = sshll.u32 [#allocation8], 4
          %s256 = int_to_ptr.vmem [resolvable:$true] %s255
          %261 = dma.hbm_to_vmem [thread:$0]  %s5, 2048, %s256, [#allocation7], 128, 128, 8
        $region32: #{tpu_custom_call.1} parent=11 // pred_fallthru
          _
        // Predicated region
        $region33: #{tpu_custom_call.1} parent=11 // pred_check
          %p262 = pneg %p184
        $region34: #{tpu_custom_call.1} parent=11 // pred_check_branch
          %264 = sbr.rel (%p262) target = $region36
        $region35: #{tpu_custom_call.1} parent=11 // pred_region
          _
        $region36: #{tpu_custom_call.1} parent=11 // pred_fallthru
          _
      $region12: #{tpu_custom_call.1} parent=5 // pred_fallthru
        _
      %p265 = scmp.lt.s32.totalorder %s20, 4
      // Predicated region
      $region37: #{tpu_custom_call.1} parent=5 // pred_check
        %p266 = pneg %p265
      $region38: #{tpu_custom_call.1} parent=5 // pred_check_branch
        %268 = sbr.rel (%p266) target = $region40
      $region39: #{tpu_custom_call.1} parent=5 // pred_region
        // Predicated region
        $region41: #{tpu_custom_call.1} parent=39 // pred_check
          %p269 = pneg %p52
        $region42: #{tpu_custom_call.1} parent=39 // pred_check_branch
          %271 = sbr.rel (%p269) target = $region44
        $region43: #{tpu_custom_call.1} parent=39 // pred_region
          %s272 = sand.u32 %s42, 1
          %s273 = scalar_lea.sflag [#allocation4], %s272
          %s274 = sand.u32 %s42, 1
          %s275 = smul.addr %s274, 432
          %s276 = scalar_lea.vmem [#allocation3], %s275
          %s278 = ssub.s32 6912, 6912
          %279 = vsyncadd %s273, %s278
          %s280 = smul.addr %s27, 54
          %s281 = smul.addr %s280, 128
          %s282 = scalar_lea.hbm %s0, %s281
          %s283 = sshll.u32 %s276, 4
          %s284 = int_to_ptr.vmem [resolvable:$true] %s283
          %289 = dma.hbm_to_vmem [thread:$0]  %s282, 6912, %s284, %s273, 128, 128, 8
        $region44: #{tpu_custom_call.1} parent=39 // pred_fallthru
          _
      $region40: #{tpu_custom_call.1} parent=5 // pred_fallthru
        _
      %p290 = scmp.le.s32.totalorder 1, %s20
      %p291 = scmp.lt.s32.totalorder %s20, 5
      %p292 = pnand %p290, %p291
      %p293 = pneg %p292
      // Predicated region
      $region45: #{tpu_custom_call.1} parent=5 // pred_check
        _
      $region46: #{tpu_custom_call.1} parent=5 // pred_check_branch
        %295 = sbr.rel (%p292) target = $region48
      $region47: #{tpu_custom_call.1} parent=5 // pred_region
        %s296 = ssub.s32 %s20, 1
        %s297 = sand.u32 %s45, 1
        %s298 = scalar_lea.sflag [#allocation4], %s297
        %s299 = sand.u32 %s45, 1
        %s300 = smul.addr %s299, 432
        %s301 = scalar_lea.vmem [#allocation3], %s300
        // Predicated region
        $region49: #{tpu_custom_call.1} parent=47 // pred_check
          %p302 = pneg %p58
        $region50: #{tpu_custom_call.1} parent=47 // pred_check_branch
          %304 = sbr.rel (%p302) target = $region52
        $region51: #{tpu_custom_call.1} parent=47 // pred_region
          %305 = dma.done %s298, 6912
        $region52: #{tpu_custom_call.1} parent=47 // pred_fallthru
          _
        // Predicated region
        $region53: #{tpu_custom_call.1} parent=47 // pred_check
          %p306 = pneg %p79
        $region54: #{tpu_custom_call.1} parent=47 // pred_check_branch
          %308 = sbr.rel (%p306) target = $region56
        $region55: #{tpu_custom_call.1} parent=47 // pred_region
          %309 = dma.done [#allocation7], 2048
        $region56: #{tpu_custom_call.1} parent=47 // pred_fallthru
          _
        // Predicated region
        $region57: #{tpu_custom_call.1} parent=47 // pred_check
          %p310 = pneg %p163
        $region58: #{tpu_custom_call.1} parent=47 // pred_check_branch
          %312 = sbr.rel (%p310) target = $region60
        $region59: #{tpu_custom_call.1} parent=47 // pred_region
          %313 = dma.done [#allocation7], 2048
        $region60: #{tpu_custom_call.1} parent=47 // pred_fallthru
          _
        %s314 = sand.u32 %s45, 1
        %s315 = scalar_lea.sflag [#allocation4], %s314
        %s316 = sand.u32 %s45, 1
        %s317 = smul.addr %s316, 432
        %s318 = scalar_lea.vmem [#allocation3], %s317
        %p319 = pneg %p58
        %p320 = pneg %p55
        %p321 = pneg %p79
        %p322 = pneg %p76
        %p323 = pneg %p100
        %p324 = pneg %p97
        %p325 = pneg %p121
        %p326 = pneg %p118
        %p327 = pneg %p142
        %p328 = pneg %p139
        %p329 = pneg %p163
        %p330 = pneg %p160
        %p331 = pneg %p184
        %p332 = pneg %p181
        %p333 = pneg %p212
        %p334 = pneg %p209
        %s335 = sand.u32 %s199, 1
        %s336 = scalar_lea.sflag [#allocation5], %s335
        %s337 = sand.u32 %s199, 1
        %s338 = smul.addr %s337, 128
        %s339 = scalar_lea.vmem [#allocation9], %s338
        %s340 = smul.u32 8, %s30
        %s341 = smul.u32 %s30, 8
        %v342 = vld [vmem:[#allocation6] sm:$0xff]
        %v343 = vld [vmem:[#allocation6 + $0x8] sm:$0xff]
        %v344 = vld [vmem:[#allocation6 + $0x10] sm:$0xff]
        %v345 = vld [vmem:[#allocation6 + $0x18] sm:$0xff]
        %v346 = vld [vmem:[#allocation6 + $0x20] sm:$0xff]
        %v347 = vld [vmem:[#allocation6 + $0x28] sm:$0xff]
        %v348 = vld [vmem:[#allocation6 + $0x30] sm:$0xff]
        %v349 = vld [vmem:[#allocation6 + $0x38] sm:$0xff]
        %v350 = vld [vmem:[#allocation6 + $0x40] sm:$0xff]
        %v351 = vld [vmem:[#allocation6 + $0x48] sm:$0xff]
        %v352 = vld [vmem:[#allocation6 + $0x50] sm:$0xff]
        %v353 = vld [vmem:[#allocation6 + $0x58] sm:$0xff]
        %v354 = vld [vmem:[#allocation6 + $0x60] sm:$0xff]
        %v355 = vld [vmem:[#allocation6 + $0x68] sm:$0xff]
        %v356 = vld [vmem:[#allocation6 + $0x70] sm:$0xff]
        %v357 = vld [vmem:[#allocation6 + $0x78] sm:$0xff]
        %v358 = vld [vmem:[%s2] sm:$0x1]
        %v359 = vld [vmem:[%s4] sm:$0x1]
        %v360 = vld [vmem:[#allocation8] sm:$0xff]
        %v361 = vld [vmem:[#allocation8 + $0x8] sm:$0xff]
        %v362 = vld [vmem:[#allocation8 + $0x10] sm:$0xff]
        %v363 = vld [vmem:[#allocation8 + $0x18] sm:$0xff]
        %v364 = vld [vmem:[#allocation8 + $0x20] sm:$0xff]
        %v365 = vld [vmem:[#allocation8 + $0x28] sm:$0xff]
        %v366 = vld [vmem:[#allocation8 + $0x30] sm:$0xff]
        %v367 = vld [vmem:[#allocation8 + $0x38] sm:$0xff]
        %v368 = vld [vmem:[#allocation8 + $0x40] sm:$0xff]
        %v369 = vld [vmem:[#allocation8 + $0x48] sm:$0xff]
        %v370 = vld [vmem:[#allocation8 + $0x50] sm:$0xff]
        %v371 = vld [vmem:[#allocation8 + $0x58] sm:$0xff]
        %v372 = vld [vmem:[#allocation8 + $0x60] sm:$0xff]
        %v373 = vld [vmem:[#allocation8 + $0x68] sm:$0xff]
        %v374 = vld [vmem:[#allocation8 + $0x70] sm:$0xff]
        %v375 = vld [vmem:[#allocation8 + $0x78] sm:$0xff]
        %v376 = vld [vmem:[%s6] sm:$0x1]
        %v377 = vld [vmem:[%s3] sm:$0x1]
        %s378 = scalar_lea.vmem %s3, 1
        %v379 = vld [vmem:[%s378] sm:$0x1]
        %s380 = scalar_lea.vmem %s3, 2
        %v381 = vld [vmem:[%s380] sm:$0x1]
        %s382 = scalar_lea.vmem %s3, 3
        %v383 = vld [vmem:[%s382] sm:$0x1]
        %s384 = scalar_lea.vmem %s3, 4
        %v385 = vld [vmem:[%s384] sm:$0x1]
        %s386 = scalar_lea.vmem %s3, 5
        %v387 = vld [vmem:[%s386] sm:$0x1]
        %s388 = scalar_lea.vmem %s3, 6
        %v389 = vld [vmem:[%s388] sm:$0x1]
        %s390 = scalar_lea.vmem %s3, 7
        %v391 = vld [vmem:[%s390] sm:$0x1]
        %s392 = scalar_lea.vmem %s3, 8
        %v393 = vld [vmem:[%s392] sm:$0x1]
        %v394 = vlaneseq
        %v395 = vshrl.u32 %v394, 7
        %v396 = vadd.s32 %v395, 8
        %v397 = vadd.s32 %v395, 16
        %vm398 = vcmp.ge.s32.totalorder %v395, 1
        %vm399 = vcmp.ge.s32.totalorder %v396, 1
        %vm400 = vcmp.ge.s32.totalorder %v397, 1
        %vm401 = vcmp.le.s32.totalorder %v395, 16
        %vm402 = vcmp.le.s32.totalorder %v396, 16
        %vm403 = vcmp.le.s32.totalorder %v397, 16
        %vm404 = vmand %vm398, %vm401
        %vm405 = vmand %vm399, %vm402
        %vm406 = vmand %vm400, %vm403
        %s407 = smul.u32 %s341, 24
        %s408 = scalar_lea.vmem %s301, %s407 [#allocation3]
        %v409 = vld [vmem:[%s408] sm:$0xff]
        %v410 = vld [vmem:[%s408 + $0x8] sm:$0xff]
        %v411 = vld [vmem:[%s408 + $0x10] sm:$0xff]
        %v413 = vlaneseq
        %v414 = vshrl.u32 %v413, 7
        %v415 = vsub.s32 0, %v414
        %v416 = vrot.slane %v358, %v415
        %418 = vmatprep.subr.mxu0 0.0
        %419 = vmatpush1.msra.mxu0 %v342
        %420 = vmatprep.subr.mxu0 0.0
        %421 = vmatpush1.msra.mxu0 %v343
        %422 = vmatprep.subr.mxu0 0.0
        %423 = vmatpush1.msra.mxu0 %v344
        %424 = vmatprep.subr.mxu0 0.0
        %425 = vmatpush1.msra.mxu0 %v345
        %426 = vmatprep.subr.mxu0 0.0
        %427 = vmatpush1.msra.mxu0 %v346
        %428 = vmatprep.subr.mxu0 0.0
        %429 = vmatpush1.msra.mxu0 %v347
        %430 = vmatprep.subr.mxu0 0.0
        %431 = vmatpush1.msra.mxu0 %v348
        %432 = vmatprep.subr.mxu0 0.0
        %433 = vmatpush1.msra.mxu0 %v349
        %434 = vmatprep.subr.mxu0 0.0
        %435 = vmatpush1.msra.mxu0 %v350
        %436 = vmatprep.subr.mxu0 0.0
        %437 = vmatpush1.msra.mxu0 %v351
        %438 = vmatprep.subr.mxu0 0.0
        %439 = vmatpush1.msra.mxu0 %v352
        %440 = vmatprep.subr.mxu0 0.0
        %441 = vmatpush1.msra.mxu0 %v353
        %442 = vmatprep.subr.mxu0 0.0
        %443 = vmatpush1.msra.mxu0 %v354
        %444 = vmatprep.subr.mxu0 0.0
        %445 = vmatpush1.msra.mxu0 %v355
        %446 = vmatprep.subr.mxu0 0.0
        %447 = vmatpush1.msra.mxu0 %v356
        %448 = vmatprep.subr.mxu0 0.0
        %449 = vmatpush1.msra.mxu0 %v357
        %450 = vmatprep.subr.mxu0 0.0
        %451 = vmatpush1.msra.mxu0 0.0
        %452 = vmatprep.subr.mxu0 0.0
        %453 = vmatpush1.msra.mxu0 0.0
        %454 = vmatprep.subr.mxu0 0.0
        %455 = vmatpush1.msra.mxu0 0.0
        %456 = vmatprep.subr.mxu0 0.0
        %457 = vmatpush1.msra.mxu0 0.0
        %458 = vmatprep.subr.mxu0 0.0
        %459 = vmatpush1.msra.mxu0 0.0
        %460 = vmatprep.subr.mxu0 0.0
        %461 = vmatpush1.msra.mxu0 0.0
        %462 = vmatprep.subr.mxu0 0.0
        %463 = vmatpush1.msra.mxu0 0.0
        %464 = vmatprep.subr.mxu0 0.0
        %465 = vmatpush1.msra.mxu0 0.0
        %466 = vmatprep.subr.mxu0 0.0
        %467 = vmatpush1.msra.mxu0 0.0
        %468 = vmatprep.subr.mxu0 0.0
        %469 = vmatpush1.msra.mxu0 0.0
        %470 = vmatprep.subr.mxu0 0.0
        %471 = vmatpush1.msra.mxu0 0.0
        %472 = vmatprep.subr.mxu0 0.0
        %473 = vmatpush1.msra.mxu0 0.0
        %474 = vmatprep.subr.mxu0 0.0
        %475 = vmatpush1.msra.mxu0 0.0
        %476 = vmatprep.subr.mxu0 0.0
        %477 = vmatpush1.msra.mxu0 0.0
        %478 = vmatprep.subr.mxu0 0.0
        %479 = vmatpush1.msra.mxu0 0.0
        %480 = vmatprep.subr.mxu0 0.0
        %481 = vmatpush1.msra.mxu0 0.0
        %482 = vmatprep.mubr.f32.mxu0 0.0
        %483 = vmatmul.mubr.f32.gmra.mrb[0].mxu0 %v409
        %v484 = vpop.f32.mrb[0].mxu0
        %v485 = vadd.f32 %v416, %v484
        %v486 = vpop.f32.mrb[0].mxu0
        %487 = vmatprep.mubr.f32.mxu0 0.0
        %488 = vmatmul.mubr.f32.gmra.mrb[0].mxu0 %v410
        %v489 = vpop.f32.mrb[0].mxu0
        %v490 = vadd.f32 %v416, %v489
        %v491 = vpop.f32.mrb[0].mxu0
        %492 = vmatprep.mubr.f32.mxu0 0.0
        %493 = vmatmul.mubr.f32.gmra.mrb[0].mxu0 %v411
        %v494 = vpop.f32.mrb[0].mxu0
        %v495 = vadd.f32 %v416, %v494
        %v496 = vpop.f32.mrb[0].mxu0
        %497 = vdwg.mxu0
        %v498 = vmax.f32 %v485, 0.0
        %v499 = vmax.f32 %v490, 0.0
        %v500 = vmax.f32 %v495, 0.0
        %v501 = vmin.f32 %v498, 6.0
        %v502 = vmin.f32 %v499, 6.0
        %v503 = vmin.f32 %v500, 6.0
        %p504 = scmp.ge.s32.totalorder %s341, 1
        %p505 = scmp.le.s32.totalorder %s341, 16
        %p506 = pnand %p504, %p505
        %p507 = pneg %p506
        %s508 = scalar_select %p507, 1, 0
        %v509 = vstv %s508
        %vm510 = vcmp.eq.s32.totalorder %v509, 1
        %vm511 = vmand %vm404, %vm510
        %vm512 = vmand %vm405, %vm510
        %vm513 = vmand %vm406, %vm510
        %v514 = vsel %vm511, 1, 0
        %v515 = vsel %vm512, 1, 0
        %v516 = vsel %vm513, 1, 0
        %vm517 = vcmp.eq.s32.totalorder %v514, 1
        %vm518 = vcmp.eq.s32.totalorder %v515, 1
        %vm519 = vcmp.eq.s32.totalorder %v516, 1
        %v520 = vsel %vm517, %v501, 0.0
        %v521 = vsel %vm518, %v502, 0.0
        %v522 = vsel %vm519, %v503, 0.0
        %523 = vst [vmem:[#allocation2] sm:$0xff] %v520
        %524 = vst [vmem:[#allocation2 + $0x8] sm:$0xff] %v521
        %525 = vst [vmem:[#allocation2 + $0x10] sm:$0xff] %v522
        %s526 = sadd.s32 %s341, 1
        %s527 = smul.u32 %s526, 24
        %s528 = scalar_lea.vmem %s301, %s527 [#allocation3]
        %v529 = vld [vmem:[%s528] sm:$0xff]
        %v530 = vld [vmem:[%s528 + $0x8] sm:$0xff]
        %v531 = vld [vmem:[%s528 + $0x10] sm:$0xff]
        %532 = vmatprep.subr.mxu0 0.0
        %533 = vmatpush1.msra.mxu0 %v342
        %534 = vmatprep.subr.mxu0 0.0
        %535 = vmatpush1.msra.mxu0 %v343
        %536 = vmatprep.subr.mxu0 0.0
        %537 = vmatpush1.msra.mxu0 %v344
        %538 = vmatprep.subr.mxu0 0.0
        %539 = vmatpush1.msra.mxu0 %v345
        %540 = vmatprep.subr.mxu0 0.0
        %541 = vmatpush1.msra.mxu0 %v346
        %542 = vmatprep.subr.mxu0 0.0
        %543 = vmatpush1.msra.mxu0 %v347
        %544 = vmatprep.subr.mxu0 0.0
        %545 = vmatpush1.msra.mxu0 %v348
        %546 = vmatprep.subr.mxu0 0.0
        %547 = vmatpush1.msra.mxu0 %v349
        %548 = vmatprep.subr.mxu0 0.0
        %549 = vmatpush1.msra.mxu0 %v350
        %550 = vmatprep.subr.mxu0 0.0
        %551 = vmatpush1.msra.mxu0 %v351
        %552 = vmatprep.subr.mxu0 0.0
        %553 = vmatpush1.msra.mxu0 %v352
        %554 = vmatprep.subr.mxu0 0.0
        %555 = vmatpush1.msra.mxu0 %v353
        %556 = vmatprep.subr.mxu0 0.0
        %557 = vmatpush1.msra.mxu0 %v354
        %558 = vmatprep.subr.mxu0 0.0
        %559 = vmatpush1.msra.mxu0 %v355
        %560 = vmatprep.subr.mxu0 0.0
        %561 = vmatpush1.msra.mxu0 %v356
        %562 = vmatprep.subr.mxu0 0.0
        %563 = vmatpush1.msra.mxu0 %v357
        %564 = vmatprep.subr.mxu0 0.0
        %565 = vmatpush1.msra.mxu0 0.0
        %566 = vmatprep.subr.mxu0 0.0
        %567 = vmatpush1.msra.mxu0 0.0
        %568 = vmatprep.subr.mxu0 0.0
        %569 = vmatpush1.msra.mxu0 0.0
        %570 = vmatprep.subr.mxu0 0.0
        %571 = vmatpush1.msra.mxu0 0.0
        %572 = vmatprep.subr.mxu0 0.0
        %573 = vmatpush1.msra.mxu0 0.0
        %574 = vmatprep.subr.mxu0 0.0
        %575 = vmatpush1.msra.mxu0 0.0
        %576 = vmatprep.subr.mxu0 0.0
        %577 = vmatpush1.msra.mxu0 0.0
        %578 = vmatprep.subr.mxu0 0.0
        %579 = vmatpush1.msra.mxu0 0.0
        %580 = vmatprep.subr.mxu0 0.0
        %581 = vmatpush1.msra.mxu0 0.0
        %582 = vmatprep.subr.mxu0 0.0
        %583 = vmatpush1.msra.mxu0 0.0
        %584 = vmatprep.subr.mxu0 0.0
        %585 = vmatpush1.msra.mxu0 0.0
        %586 = vmatprep.subr.mxu0 0.0
        %587 = vmatpush1.msra.mxu0 0.0
        %588 = vmatprep.subr.mxu0 0.0
        %589 = vmatpush1.msra.mxu0 0.0
        %590 = vmatprep.subr.mxu0 0.0
        %591 = vmatpush1.msra.mxu0 0.0
        %592 = vmatprep.subr.mxu0 0.0
        %593 = vmatpush1.msra.mxu0 0.0
        %594 = vmatprep.subr.mxu0 0.0
        %595 = vmatpush1.msra.mxu0 0.0
        %596 = vmatprep.mubr.f32.mxu0 0.0
        %597 = vmatmul.mubr.f32.gmra.mrb[0].mxu0 %v529
        %v598 = vpop.f32.mrb[0].mxu0
        %v599 = vadd.f32 %v416, %v598
        %v600 = vpop.f32.mrb[0].mxu0
        %601 = vmatprep.mubr.f32.mxu0 0.0
        %602 = vmatmul.mubr.f32.gmra.mrb[0].mxu0 %v530
        %v603 = vpop.f32.mrb[0].mxu0
        %v604 = vadd.f32 %v416, %v603
        %v605 = vpop.f32.mrb[0].mxu0
        %606 = vmatprep.mubr.f32.mxu0 0.0
        %607 = vmatmul.mubr.f32.gmra.mrb[0].mxu0 %v531
        %v608 = vpop.f32.mrb[0].mxu0
        %v609 = vadd.f32 %v416, %v608
        %v610 = vpop.f32.mrb[0].mxu0
        %611 = vdwg.mxu0
        %v612 = vmax.f32 %v599, 0.0
        %v613 = vmax.f32 %v604, 0.0
        %v614 = vmax.f32 %v609, 0.0
        %v615 = vmin.f32 %v612, 6.0
        %v616 = vmin.f32 %v613, 6.0
        %v617 = vmin.f32 %v614, 6.0
        %p618 = scmp.ge.s32.totalorder %s526, 1
        %p619 = scmp.le.s32.totalorder %s526, 16
        %p620 = pnand %p618, %p619
        %p621 = pneg %p620
        %s622 = scalar_select %p621, 1, 0
        %v623 = vstv %s622
        %vm624 = vcmp.eq.s32.totalorder %v623, 1
        %vm625 = vmand %vm404, %vm624
        %vm626 = vmand %vm405, %vm624
        %vm627 = vmand %vm406, %vm624
        %v628 = vsel %vm625, 1, 0
        %v629 = vsel %vm626, 1, 0
        %v630 = vsel %vm627, 1, 0
        %vm631 = vcmp.eq.s32.totalorder %v628, 1
        %vm632 = vcmp.eq.s32.totalorder %v629, 1
        %vm633 = vcmp.eq.s32.totalorder %v630, 1
        %v634 = vsel %vm631, %v615, 0.0
        %v635 = vsel %vm632, %v616, 0.0
        %v636 = vsel %vm633, %v617, 0.0
        %s637 = scalar_lea.vmem [#allocation2], 24
        %638 = vst [vmem:[%s637] sm:$0xff] %v634
        %639 = vst [vmem:[%s637 + $0x8] sm:$0xff] %v635
        %640 = vst [vmem:[%s637 + $0x10] sm:$0xff] %v636
        %s641 = sadd.s32 %s341, 2
        %s642 = smul.u32 %s641, 24
        %s643 = scalar_lea.vmem %s301, %s642 [#allocation3]
        %v644 = vld [vmem:[%s643] sm:$0xff]
        %v645 = vld [vmem:[%s643 + $0x8] sm:$0xff]
        %v646 = vld [vmem:[%s643 + $0x10] sm:$0xff]
        %647 = vmatprep.subr.mxu0 0.0
        %648 = vmatpush1.msra.mxu0 %v342
        %649 = vmatprep.subr.mxu0 0.0
        %650 = vmatpush1.msra.mxu0 %v343
        %651 = vmatprep.subr.mxu0 0.0
        %652 = vmatpush1.msra.mxu0 %v344
        %653 = vmatprep.subr.mxu0 0.0
        %654 = vmatpush1.msra.mxu0 %v345
        %655 = vmatprep.subr.mxu0 0.0
        %656 = vmatpush1.msra.mxu0 %v346
        %657 = vmatprep.subr.mxu0 0.0
        %658 = vmatpush1.msra.mxu0 %v347
        %659 = vmatprep.subr.mxu0 0.0
        %660 = vmatpush1.msra.mxu0 %v348
        %661 = vmatprep.subr.mxu0 0.0
        %662 = vmatpush1.msra.mxu0 %v349
        %663 = vmatprep.subr.mxu0 0.0
        %664 = vmatpush1.msra.mxu0 %v350
        %665 = vmatprep.subr.mxu0 0.0
        %666 = vmatpush1.msra.mxu0 %v351
        %667 = vmatprep.subr.mxu0 0.0
        %668 = vmatpush1.msra.mxu0 %v352
        %669 = vmatprep.subr.mxu0 0.0
        %670 = vmatpush1.msra.mxu0 %v353
        %671 = vmatprep.subr.mxu0 0.0
        %672 = vmatpush1.msra.mxu0 %v354
        %673 = vmatprep.subr.mxu0 0.0
        %674 = vmatpush1.msra.mxu0 %v355
        %675 = vmatprep.subr.mxu0 0.0
        %676 = vmatpush1.msra.mxu0 %v356
        %677 = vmatprep.subr.mxu0 0.0
        %678 = vmatpush1.msra.mxu0 %v357
        %679 = vmatprep.subr.mxu0 0.0
        %680 = vmatpush1.msra.mxu0 0.0
        %681 = vmatprep.subr.mxu0 0.0
        %682 = vmatpush1.msra.mxu0 0.0
        %683 = vmatprep.subr.mxu0 0.0
        %684 = vmatpush1.msra.mxu0 0.0
        %685 = vmatprep.subr.mxu0 0.0
        %686 = vmatpush1.msra.mxu0 0.0
        %687 = vmatprep.subr.mxu0 0.0
        %688 = vmatpush1.msra.mxu0 0.0
        %689 = vmatprep.subr.mxu0 0.0
        %690 = vmatpush1.msra.mxu0 0.0
        %691 = vmatprep.subr.mxu0 0.0
        %692 = vmatpush1.msra.mxu0 0.0
        %693 = vmatprep.subr.mxu0 0.0
        %694 = vmatpush1.msra.mxu0 0.0
        %695 = vmatprep.subr.mxu0 0.0
        %696 = vmatpush1.msra.mxu0 0.0
        %697 = vmatprep.subr.mxu0 0.0
        %698 = vmatpush1.msra.mxu0 0.0
        %699 = vmatprep.subr.mxu0 0.0
        %700 = vmatpush1.msra.mxu0 0.0
        %701 = vmatprep.subr.mxu0 0.0
        %702 = vmatpush1.msra.mxu0 0.0
        %703 = vmatprep.subr.mxu0 0.0
        %704 = vmatpush1.msra.mxu0 0.0
        %705 = vmatprep.subr.mxu0 0.0
        %706 = vmatpush1.msra.mxu0 0.0
        %707 = vmatprep.subr.mxu0 0.0
        %708 = vmatpush1.msra.mxu0 0.0
        %709 = vmatprep.subr.mxu0 0.0
        %710 = vmatpush1.msra.mxu0 0.0
        %711 = vmatprep.mubr.f32.mxu0 0.0
        %712 = vmatmul.mubr.f32.gmra.mrb[0].mxu0 %v644
        %v713 = vpop.f32.mrb[0].mxu0
        %v714 = vadd.f32 %v416, %v713
        %v715 = vpop.f32.mrb[0].mxu0
        %716 = vmatprep.mubr.f32.mxu0 0.0
        %717 = vmatmul.mubr.f32.gmra.mrb[0].mxu0 %v645
        %v718 = vpop.f32.mrb[0].mxu0
        %v719 = vadd.f32 %v416, %v718
        %v720 = vpop.f32.mrb[0].mxu0
        %721 = vmatprep.mubr.f32.mxu0 0.0
        %722 = vmatmul.mubr.f32.gmra.mrb[0].mxu0 %v646
        %v723 = vpop.f32.mrb[0].mxu0
        %v724 = vadd.f32 %v416, %v723
        %v725 = vpop.f32.mrb[0].mxu0
        %726 = vdwg.mxu0
        %v727 = vmax.f32 %v714, 0.0
        %v728 = vmax.f32 %v719, 0.0
        %v729 = vmax.f32 %v724, 0.0
        %v730 = vmin.f32 %v727, 6.0
        %v731 = vmin.f32 %v728, 6.0
        %v732 = vmin.f32 %v729, 6.0
        %p733 = scmp.ge.s32.totalorder %s641, 1
        %p734 = scmp.le.s32.totalorder %s641, 16
        %p735 = pnand %p733, %p734
        %p736 = pneg %p735
        %s737 = scalar_select %p736, 1, 0
        %v738 = vstv %s737
        %vm739 = vcmp.eq.s32.totalorder %v738, 1
        %vm740 = vmand %vm404, %vm739
        %vm741 = vmand %vm405, %vm739
        %vm742 = vmand %vm406, %vm739
        %v743 = vsel %vm740, 1, 0
        %v744 = vsel %vm741, 1, 0
        %v745 = vsel %vm742, 1, 0
        %vm746 = vcmp.eq.s32.totalorder %v743, 1
        %vm747 = vcmp.eq.s32.totalorder %v744, 1
        %vm748 = vcmp.eq.s32.totalorder %v745, 1
        %v749 = vsel %vm746, %v730, 0.0
        %v750 = vsel %vm747, %v731, 0.0
        %v751 = vsel %vm748, %v732, 0.0
        %s752 = scalar_lea.vmem [#allocation2], 48
        %753 = vst [vmem:[%s752] sm:$0xff] %v749
        %754 = vst [vmem:[%s752 + $0x8] sm:$0xff] %v750
        %755 = vst [vmem:[%s752 + $0x10] sm:$0xff] %v751
        %s756 = sadd.s32 %s341, 3
        %s757 = smul.u32 %s756, 24
        %s758 = scalar_lea.vmem %s301, %s757 [#allocation3]
        %v759 = vld [vmem:[%s758] sm:$0xff]
        %v760 = vld [vmem:[%s758 + $0x8] sm:$0xff]
        %v761 = vld [vmem:[%s758 + $0x10] sm:$0xff]
        %762 = vmatprep.subr.mxu0 0.0
        %763 = vmatpush1.msra.mxu0 %v342
        %764 = vmatprep.subr.mxu0 0.0
        %765 = vmatpush1.msra.mxu0 %v343
        %766 = vmatprep.subr.mxu0 0.0
        %767 = vmatpush1.msra.mxu0 %v344
        %768 = vmatprep.subr.mxu0 0.0
        %769 = vmatpush1.msra.mxu0 %v345
        %770 = vmatprep.subr.mxu0 0.0
        %771 = vmatpush1.msra.mxu0 %v346
        %772 = vmatprep.subr.mxu0 0.0
        %773 = vmatpush1.msra.mxu0 %v347
        %774 = vmatprep.subr.mxu0 0.0
        %775 = vmatpush1.msra.mxu0 %v348
        %776 = vmatprep.subr.mxu0 0.0
        %777 = vmatpush1.msra.mxu0 %v349
        %778 = vmatprep.subr.mxu0 0.0
        %779 = vmatpush1.msra.mxu0 %v350
        %780 = vmatprep.subr.mxu0 0.0
        %781 = vmatpush1.msra.mxu0 %v351
        %782 = vmatprep.subr.mxu0 0.0
        %783 = vmatpush1.msra.mxu0 %v352
        %784 = vmatprep.subr.mxu0 0.0
        %785 = vmatpush1.msra.mxu0 %v353
        %786 = vmatprep.subr.mxu0 0.0
        %787 = vmatpush1.msra.mxu0 %v354
        %788 = vmatprep.subr.mxu0 0.0
        %789 = vmatpush1.msra.mxu0 %v355
        %790 = vmatprep.subr.mxu0 0.0
        %791 = vmatpush1.msra.mxu0 %v356
        %792 = vmatprep.subr.mxu0 0.0
        %793 = vmatpush1.msra.mxu0 %v357
        %794 = vmatprep.subr.mxu0 0.0
        %795 = vmatpush1.msra.mxu0 0.0
        %796 = vmatprep.subr.mxu0 0.0
        %797 = vmatpush1.msra.mxu0 0.0
        %798 = vmatprep.subr.mxu0 0.0
        %799 = vmatpush1.msra.mxu0 0.0
        %800 = vmatprep.subr.mxu0 0.0
        %801 = vmatpush1.msra.mxu0 0.0
        %802 = vmatprep.subr.mxu0 0.0
        %803 = vmatpush1.msra.mxu0 0.0
        %804 = vmatprep.subr.mxu0 0.0
        %805 = vmatpush1.msra.mxu0 0.0
        %806 = vmatprep.subr.mxu0 0.0
        %807 = vmatpush1.msra.mxu0 0.0
        %808 = vmatprep.subr.mxu0 0.0
        %809 = vmatpush1.msra.mxu0 0.0
        %810 = vmatprep.subr.mxu0 0.0
        %811 = vmatpush1.msra.mxu0 0.0
        %812 = vmatprep.subr.mxu0 0.0
        %813 = vmatpush1.msra.mxu0 0.0
        %814 = vmatprep.subr.mxu0 0.0
        %815 = vmatpush1.msra.mxu0 0.0
        %816 = vmatprep.subr.mxu0 0.0
        %817 = vmatpush1.msra.mxu0 0.0
        %818 = vmatprep.subr.mxu0 0.0
        %819 = vmatpush1.msra.mxu0 0.0
        %820 = vmatprep.subr.mxu0 0.0
        %821 = vmatpush1.msra.mxu0 0.0
        %822 = vmatprep.subr.mxu0 0.0
        %823 = vmatpush1.msra.mxu0 0.0
        %824 = vmatprep.subr.mxu0 0.0
        %825 = vmatpush1.msra.mxu0 0.0
        %826 = vmatprep.mubr.f32.mxu0 0.0
        %827 = vmatmul.mubr.f32.gmra.mrb[0].mxu0 %v759
        %v828 = vpop.f32.mrb[0].mxu0
        %v829 = vadd.f32 %v416, %v828
        %v830 = vpop.f32.mrb[0].mxu0
        %831 = vmatprep.mubr.f32.mxu0 0.0
        %832 = vmatmul.mubr.f32.gmra.mrb[0].mxu0 %v760
        %v833 = vpop.f32.mrb[0].mxu0
        %v834 = vadd.f32 %v416, %v833
        %v835 = vpop.f32.mrb[0].mxu0
        %836 = vmatprep.mubr.f32.mxu0 0.0
        %837 = vmatmul.mubr.f32.gmra.mrb[0].mxu0 %v761
        %v838 = vpop.f32.mrb[0].mxu0
        %v839 = vadd.f32 %v416, %v838
        %v840 = vpop.f32.mrb[0].mxu0
        %841 = vdwg.mxu0
        %v842 = vmax.f32 %v829, 0.0
        %v843 = vmax.f32 %v834, 0.0
        %v844 = vmax.f32 %v839, 0.0
        %v845 = vmin.f32 %v842, 6.0
        %v846 = vmin.f32 %v843, 6.0
        %v847 = vmin.f32 %v844, 6.0
        %p848 = scmp.ge.s32.totalorder %s756, 1
        %p849 = scmp.le.s32.totalorder %s756, 16
        %p850 = pnand %p848, %p849
        %p851 = pneg %p850
        %s852 = scalar_select %p851, 1, 0
        %v853 = vstv %s852
        %vm854 = vcmp.eq.s32.totalorder %v853, 1
        %vm855 = vmand %vm404, %vm854
        %vm856 = vmand %vm405, %vm854
        %vm857 = vmand %vm406, %vm854
        %v858 = vsel %vm855, 1, 0
        %v859 = vsel %vm856, 1, 0
        %v860 = vsel %vm857, 1, 0
        %vm861 = vcmp.eq.s32.totalorder %v858, 1
        %vm862 = vcmp.eq.s32.totalorder %v859, 1
        %vm863 = vcmp.eq.s32.totalorder %v860, 1
        %v864 = vsel %vm861, %v845, 0.0
        %v865 = vsel %vm862, %v846, 0.0
        %v866 = vsel %vm863, %v847, 0.0
        %s867 = scalar_lea.vmem [#allocation2], 72
        %868 = vst [vmem:[%s867] sm:$0xff] %v864
        %869 = vst [vmem:[%s867 + $0x8] sm:$0xff] %v865
        %870 = vst [vmem:[%s867 + $0x10] sm:$0xff] %v866
        %s871 = sadd.s32 %s341, 4
        %s872 = smul.u32 %s871, 24
        %s873 = scalar_lea.vmem %s301, %s872 [#allocation3]
        %v874 = vld [vmem:[%s873] sm:$0xff]
        %v875 = vld [vmem:[%s873 + $0x8] sm:$0xff]
        %v876 = vld [vmem:[%s873 + $0x10] sm:$0xff]
        %877 = vmatprep.subr.mxu0 0.0
        %878 = vmatpush1.msra.mxu0 %v342
        %879 = vmatprep.subr.mxu0 0.0
        %880 = vmatpush1.msra.mxu0 %v343
        %881 = vmatprep.subr.mxu0 0.0
        %882 = vmatpush1.msra.mxu0 %v344
        %883 = vmatprep.subr.mxu0 0.0
        %884 = vmatpush1.msra.mxu0 %v345
        %885 = vmatprep.subr.mxu0 0.0
        %886 = vmatpush1.msra.mxu0 %v346
        %887 = vmatprep.subr.mxu0 0.0
        %888 = vmatpush1.msra.mxu0 %v347
        %889 = vmatprep.subr.mxu0 0.0
        %890 = vmatpush1.msra.mxu0 %v348
        %891 = vmatprep.subr.mxu0 0.0
        %892 = vmatpush1.msra.mxu0 %v349
        %893 = vmatprep.subr.mxu0 0.0
        %894 = vmatpush1.msra.mxu0 %v350
        %895 = vmatprep.subr.mxu0 0.0
        %896 = vmatpush1.msra.mxu0 %v351
        %897 = vmatprep.subr.mxu0 0.0
        %898 = vmatpush1.msra.mxu0 %v352
        %899 = vmatprep.subr.mxu0 0.0
        %900 = vmatpush1.msra.mxu0 %v353
        %901 = vmatprep.subr.mxu0 0.0
        %902 = vmatpush1.msra.mxu0 %v354
        %903 = vmatprep.subr.mxu0 0.0
        %904 = vmatpush1.msra.mxu0 %v355
        %905 = vmatprep.subr.mxu0 0.0
        %906 = vmatpush1.msra.mxu0 %v356
        %907 = vmatprep.subr.mxu0 0.0
        %908 = vmatpush1.msra.mxu0 %v357
        %909 = vmatprep.subr.mxu0 0.0
        %910 = vmatpush1.msra.mxu0 0.0
        %911 = vmatprep.subr.mxu0 0.0
        %912 = vmatpush1.msra.mxu0 0.0
        %913 = vmatprep.subr.mxu0 0.0
        %914 = vmatpush1.msra.mxu0 0.0
        %915 = vmatprep.subr.mxu0 0.0
        %916 = vmatpush1.msra.mxu0 0.0
        %917 = vmatprep.subr.mxu0 0.0
        %918 = vmatpush1.msra.mxu0 0.0
        %919 = vmatprep.subr.mxu0 0.0
        %920 = vmatpush1.msra.mxu0 0.0
        %921 = vmatprep.subr.mxu0 0.0
        %922 = vmatpush1.msra.mxu0 0.0
        %923 = vmatprep.subr.mxu0 0.0
        %924 = vmatpush1.msra.mxu0 0.0
        %925 = vmatprep.subr.mxu0 0.0
        %926 = vmatpush1.msra.mxu0 0.0
        %927 = vmatprep.subr.mxu0 0.0
        %928 = vmatpush1.msra.mxu0 0.0
        %929 = vmatprep.subr.mxu0 0.0
        %930 = vmatpush1.msra.mxu0 0.0
        %931 = vmatprep.subr.mxu0 0.0
        %932 = vmatpush1.msra.mxu0 0.0
        %933 = vmatprep.subr.mxu0 0.0
        %934 = vmatpush1.msra.mxu0 0.0
        %935 = vmatprep.subr.mxu0 0.0
        %936 = vmatpush1.msra.mxu0 0.0
        %937 = vmatprep.subr.mxu0 0.0
        %938 = vmatpush1.msra.mxu0 0.0
        %939 = vmatprep.subr.mxu0 0.0
        %940 = vmatpush1.msra.mxu0 0.0
        %941 = vmatprep.mubr.f32.mxu0 0.0
        %942 = vmatmul.mubr.f32.gmra.mrb[0].mxu0 %v874
        %v943 = vpop.f32.mrb[0].mxu0
        %v944 = vadd.f32 %v416, %v943
        %v945 = vpop.f32.mrb[0].mxu0
        %946 = vmatprep.mubr.f32.mxu0 0.0
        %947 = vmatmul.mubr.f32.gmra.mrb[0].mxu0 %v875
        %v948 = vpop.f32.mrb[0].mxu0
        %v949 = vadd.f32 %v416, %v948
        %v950 = vpop.f32.mrb[0].mxu0
        %951 = vmatprep.mubr.f32.mxu0 0.0
        %952 = vmatmul.mubr.f32.gmra.mrb[0].mxu0 %v876
        %v953 = vpop.f32.mrb[0].mxu0
        %v954 = vadd.f32 %v416, %v953
        %v955 = vpop.f32.mrb[0].mxu0
        %956 = vdwg.mxu0
        %v957 = vmax.f32 %v944, 0.0
        %v958 = vmax.f32 %v949, 0.0
        %v959 = vmax.f32 %v954, 0.0
        %v960 = vmin.f32 %v957, 6.0
        %v961 = vmin.f32 %v958, 6.0
        %v962 = vmin.f32 %v959, 6.0
        %p963 = scmp.ge.s32.totalorder %s871, 1
        %p964 = scmp.le.s32.totalorder %s871, 16
        %p965 = pnand %p963, %p964
        %p966 = pneg %p965
        %s967 = scalar_select %p966, 1, 0
        %v968 = vstv %s967
        %vm969 = vcmp.eq.s32.totalorder %v968, 1
        %vm970 = vmand %vm404, %vm969
        %vm971 = vmand %vm405, %vm969
        %vm972 = vmand %vm406, %vm969
        %v973 = vsel %vm970, 1, 0
        %v974 = vsel %vm971, 1, 0
        %v975 = vsel %vm972, 1, 0
        %vm976 = vcmp.eq.s32.totalorder %v973, 1
        %vm977 = vcmp.eq.s32.totalorder %v974, 1
        %vm978 = vcmp.eq.s32.totalorder %v975, 1
        %v979 = vsel %vm976, %v960, 0.0
        %v980 = vsel %vm977, %v961, 0.0
        %v981 = vsel %vm978, %v962, 0.0
        %s982 = scalar_lea.vmem [#allocation2], 96
        %983 = vst [vmem:[%s982] sm:$0xff] %v979
        %984 = vst [vmem:[%s982 + $0x8] sm:$0xff] %v980
        %985 = vst [vmem:[%s982 + $0x10] sm:$0xff] %v981
        %s986 = sadd.s32 %s341, 5
        %s987 = smul.u32 %s986, 24
        %s988 = scalar_lea.vmem %s301, %s987 [#allocation3]
        %v989 = vld [vmem:[%s988] sm:$0xff]
        %v990 = vld [vmem:[%s988 + $0x8] sm:$0xff]
        %v991 = vld [vmem:[%s988 + $0x10] sm:$0xff]
        %992 = vmatprep.subr.mxu0 0.0
        %993 = vmatpush1.msra.mxu0 %v342
        %994 = vmatprep.subr.mxu0 0.0
        %995 = vmatpush1.msra.mxu0 %v343
        %996 = vmatprep.subr.mxu0 0.0
        %997 = vmatpush1.msra.mxu0 %v344
        %998 = vmatprep.subr.mxu0 0.0
        %999 = vmatpush1.msra.mxu0 %v345
        %1000 = vmatprep.subr.mxu0 0.0
        %1001 = vmatpush1.msra.mxu0 %v346
        %1002 = vmatprep.subr.mxu0 0.0
        %1003 = vmatpush1.msra.mxu0 %v347
        %1004 = vmatprep.subr.mxu0 0.0
        %1005 = vmatpush1.msra.mxu0 %v348
        %1006 = vmatprep.subr.mxu0 0.0
        %1007 = vmatpush1.msra.mxu0 %v349
        %1008 = vmatprep.subr.mxu0 0.0
        %1009 = vmatpush1.msra.mxu0 %v350
        %1010 = vmatprep.subr.mxu0 0.0
        %1011 = vmatpush1.msra.mxu0 %v351
        %1012 = vmatprep.subr.mxu0 0.0
        %1013 = vmatpush1.msra.mxu0 %v352
        %1014 = vmatprep.subr.mxu0 0.0
        %1015 = vmatpush1.msra.mxu0 %v353
        %1016 = vmatprep.subr.mxu0 0.0
        %1017 = vmatpush1.msra.mxu0 %v354
        %1018 = vmatprep.subr.mxu0 0.0
        %1019 = vmatpush1.msra.mxu0 %v355
        %1020 = vmatprep.subr.mxu0 0.0
        %1021 = vmatpush1.msra.mxu0 %v356
        %1022 = vmatprep.subr.mxu0 0.0
        %1023 = vmatpush1.msra.mxu0 %v357
        %1024 = vmatprep.subr.mxu0 0.0
        %1025 = vmatpush1.msra.mxu0 0.0
        %1026 = vmatprep.subr.mxu0 0.0
        %1027 = vmatpush1.msra.mxu0 0.0
        %1028 = vmatprep.subr.mxu0 0.0
        %1029 = vmatpush1.msra.mxu0 0.0
        %1030 = vmatprep.subr.mxu0 0.0
        %1031 = vmatpush1.msra.mxu0 0.0
        %1032 = vmatprep.subr.mxu0 0.0
        %1033 = vmatpush1.msra.mxu0 0.0
        %1034 = vmatprep.subr.mxu0 0.0
        %1035 = vmatpush1.msra.mxu0 0.0
        %1036 = vmatprep.subr.mxu0 0.0
        %1037 = vmatpush1.msra.mxu0 0.0
        %1038 = vmatprep.subr.mxu0 0.0
        %1039 = vmatpush1.msra.mxu0 0.0
        %1040 = vmatprep.subr.mxu0 0.0
        %1041 = vmatpush1.msra.mxu0 0.0
        %1042 = vmatprep.subr.mxu0 0.0
        %1043 = vmatpush1.msra.mxu0 0.0
        %1044 = vmatprep.subr.mxu0 0.0
        %1045 = vmatpush1.msra.mxu0 0.0
        %1046 = vmatprep.subr.mxu0 0.0
        %1047 = vmatpush1.msra.mxu0 0.0
        %1048 = vmatprep.subr.mxu0 0.0
        %1049 = vmatpush1.msra.mxu0 0.0
        %1050 = vmatprep.subr.mxu0 0.0
        %1051 = vmatpush1.msra.mxu0 0.0
        %1052 = vmatprep.subr.mxu0 0.0
        %1053 = vmatpush1.msra.mxu0 0.0
        %1054 = vmatprep.subr.mxu0 0.0
        %1055 = vmatpush1.msra.mxu0 0.0
        %1056 = vmatprep.mubr.f32.mxu0 0.0
        %1057 = vmatmul.mubr.f32.gmra.mrb[0].mxu0 %v989
        %v1058 = vpop.f32.mrb[0].mxu0
        %v1059 = vadd.f32 %v416, %v1058
        %v1060 = vpop.f32.mrb[0].mxu0
        %1061 = vmatprep.mubr.f32.mxu0 0.0
        %1062 = vmatmul.mubr.f32.gmra.mrb[0].mxu0 %v990
        %v1063 = vpop.f32.mrb[0].mxu0
        %v1064 = vadd.f32 %v416, %v1063
        %v1065 = vpop.f32.mrb[0].mxu0
        %1066 = vmatprep.mubr.f32.mxu0 0.0
        %1067 = vmatmul.mubr.f32.gmra.mrb[0].mxu0 %v991
        %v1068 = vpop.f32.mrb[0].mxu0
        %v1069 = vadd.f32 %v416, %v1068
        %v1070 = vpop.f32.mrb[0].mxu0
        %1071 = vdwg.mxu0
        %v1072 = vmax.f32 %v1059, 0.0
        %v1073 = vmax.f32 %v1064, 0.0
        %v1074 = vmax.f32 %v1069, 0.0
        %v1075 = vmin.f32 %v1072, 6.0
        %v1076 = vmin.f32 %v1073, 6.0
        %v1077 = vmin.f32 %v1074, 6.0
        %p1078 = scmp.ge.s32.totalorder %s986, 1
        %p1079 = scmp.le.s32.totalorder %s986, 16
        %p1080 = pnand %p1078, %p1079
        %p1081 = pneg %p1080
        %s1082 = scalar_select %p1081, 1, 0
        %v1083 = vstv %s1082
        %vm1084 = vcmp.eq.s32.totalorder %v1083, 1
        %vm1085 = vmand %vm404, %vm1084
        %vm1086 = vmand %vm405, %vm1084
        %vm1087 = vmand %vm406, %vm1084
        %v1088 = vsel %vm1085, 1, 0
        %v1089 = vsel %vm1086, 1, 0
        %v1090 = vsel %vm1087, 1, 0
        %vm1091 = vcmp.eq.s32.totalorder %v1088, 1
        %vm1092 = vcmp.eq.s32.totalorder %v1089, 1
        %vm1093 = vcmp.eq.s32.totalorder %v1090, 1
        %v1094 = vsel %vm1091, %v1075, 0.0
        %v1095 = vsel %vm1092, %v1076, 0.0
        %v1096 = vsel %vm1093, %v1077, 0.0
        %s1097 = scalar_lea.vmem [#allocation2], 120
        %1098 = vst [vmem:[%s1097] sm:$0xff] %v1094
        %1099 = vst [vmem:[%s1097 + $0x8] sm:$0xff] %v1095
        %1100 = vst [vmem:[%s1097 + $0x10] sm:$0xff] %v1096
        %s1101 = sadd.s32 %s341, 6
        %s1102 = smul.u32 %s1101, 24
        %s1103 = scalar_lea.vmem %s301, %s1102 [#allocation3]
        %v1104 = vld [vmem:[%s1103] sm:$0xff]
        %v1105 = vld [vmem:[%s1103 + $0x8] sm:$0xff]
        %v1106 = vld [vmem:[%s1103 + $0x10] sm:$0xff]
        %1107 = vmatprep.subr.mxu0 0.0
        %1108 = vmatpush1.msra.mxu0 %v342
        %1109 = vmatprep.subr.mxu0 0.0
        %1110 = vmatpush1.msra.mxu0 %v343
        %1111 = vmatprep.subr.mxu0 0.0
        %1112 = vmatpush1.msra.mxu0 %v344
        %1113 = vmatprep.subr.mxu0 0.0
        %1114 = vmatpush1.msra.mxu0 %v345
        %1115 = vmatprep.subr.mxu0 0.0
        %1116 = vmatpush1.msra.mxu0 %v346
        %1117 = vmatprep.subr.mxu0 0.0
        %1118 = vmatpush1.msra.mxu0 %v347
        %1119 = vmatprep.subr.mxu0 0.0
        %1120 = vmatpush1.msra.mxu0 %v348
        %1121 = vmatprep.subr.mxu0 0.0
        %1122 = vmatpush1.msra.mxu0 %v349
        %1123 = vmatprep.subr.mxu0 0.0
        %1124 = vmatpush1.msra.mxu0 %v350
        %1125 = vmatprep.subr.mxu0 0.0
        %1126 = vmatpush1.msra.mxu0 %v351
        %1127 = vmatprep.subr.mxu0 0.0
        %1128 = vmatpush1.msra.mxu0 %v352
        %1129 = vmatprep.subr.mxu0 0.0
        %1130 = vmatpush1.msra.mxu0 %v353
        %1131 = vmatprep.subr.mxu0 0.0
        %1132 = vmatpush1.msra.mxu0 %v354
        %1133 = vmatprep.subr.mxu0 0.0
        %1134 = vmatpush1.msra.mxu0 %v355
        %1135 = vmatprep.subr.mxu0 0.0
        %1136 = vmatpush1.msra.mxu0 %v356
        %1137 = vmatprep.subr.mxu0 0.0
        %1138 = vmatpush1.msra.mxu0 %v357
        %1139 = vmatprep.subr.mxu0 0.0
        %1140 = vmatpush1.msra.mxu0 0.0
        %1141 = vmatprep.subr.mxu0 0.0
        %1142 = vmatpush1.msra.mxu0 0.0
        %1143 = vmatprep.subr.mxu0 0.0
        %1144 = vmatpush1.msra.mxu0 0.0
        %1145 = vmatprep.subr.mxu0 0.0
        %1146 = vmatpush1.msra.mxu0 0.0
        %1147 = vmatprep.subr.mxu0 0.0
        %1148 = vmatpush1.msra.mxu0 0.0
        %1149 = vmatprep.subr.mxu0 0.0
        %1150 = vmatpush1.msra.mxu0 0.0
        %1151 = vmatprep.subr.mxu0 0.0
        %1152 = vmatpush1.msra.mxu0 0.0
        %1153 = vmatprep.subr.mxu0 0.0
        %1154 = vmatpush1.msra.mxu0 0.0
        %1155 = vmatprep.subr.mxu0 0.0
        %1156 = vmatpush1.msra.mxu0 0.0
        %1157 = vmatprep.subr.mxu0 0.0
        %1158 = vmatpush1.msra.mxu0 0.0
        %1159 = vmatprep.subr.mxu0 0.0
        %1160 = vmatpush1.msra.mxu0 0.0
        %1161 = vmatprep.subr.mxu0 0.0
        %1162 = vmatpush1.msra.mxu0 0.0
        %1163 = vmatprep.subr.mxu0 0.0
        %1164 = vmatpush1.msra.mxu0 0.0
        %1165 = vmatprep.subr.mxu0 0.0
        %1166 = vmatpush1.msra.mxu0 0.0
        %1167 = vmatprep.subr.mxu0 0.0
        %1168 = vmatpush1.msra.mxu0 0.0
        %1169 = vmatprep.subr.mxu0 0.0
        %1170 = vmatpush1.msra.mxu0 0.0
        %1171 = vmatprep.mubr.f32.mxu0 0.0
        %1172 = vmatmul.mubr.f32.gmra.mrb[0].mxu0 %v1104
        %v1173 = vpop.f32.mrb[0].mxu0
        %v1174 = vadd.f32 %v416, %v1173
        %v1175 = vpop.f32.mrb[0].mxu0
        %1176 = vmatprep.mubr.f32.mxu0 0.0
        %1177 = vmatmul.mubr.f32.gmra.mrb[0].mxu0 %v1105
        %v1178 = vpop.f32.mrb[0].mxu0
        %v1179 = vadd.f32 %v416, %v1178
        %v1180 = vpop.f32.mrb[0].mxu0
        %1181 = vmatprep.mubr.f32.mxu0 0.0
        %1182 = vmatmul.mubr.f32.gmra.mrb[0].mxu0 %v1106
        %v1183 = vpop.f32.mrb[0].mxu0
        %v1184 = vadd.f32 %v416, %v1183
        %v1185 = vpop.f32.mrb[0].mxu0
        %1186 = vdwg.mxu0
        %v1187 = vmax.f32 %v1174, 0.0
        %v1188 = vmax.f32 %v1179, 0.0
        %v1189 = vmax.f32 %v1184, 0.0
        %v1190 = vmin.f32 %v1187, 6.0
        %v1191 = vmin.f32 %v1188, 6.0
        %v1192 = vmin.f32 %v1189, 6.0
        %p1193 = scmp.ge.s32.totalorder %s1101, 1
        %p1194 = scmp.le.s32.totalorder %s1101, 16
        %p1195 = pnand %p1193, %p1194
        %p1196 = pneg %p1195
        %s1197 = scalar_select %p1196, 1, 0
        %v1198 = vstv %s1197
        %vm1199 = vcmp.eq.s32.totalorder %v1198, 1
        %vm1200 = vmand %vm404, %vm1199
        %vm1201 = vmand %vm405, %vm1199
        %vm1202 = vmand %vm406, %vm1199
        %v1203 = vsel %vm1200, 1, 0
        %v1204 = vsel %vm1201, 1, 0
        %v1205 = vsel %vm1202, 1, 0
        %vm1206 = vcmp.eq.s32.totalorder %v1203, 1
        %vm1207 = vcmp.eq.s32.totalorder %v1204, 1
        %vm1208 = vcmp.eq.s32.totalorder %v1205, 1
        %v1209 = vsel %vm1206, %v1190, 0.0
        %v1210 = vsel %vm1207, %v1191, 0.0
        %v1211 = vsel %vm1208, %v1192, 0.0
        %s1212 = scalar_lea.vmem [#allocation2], 144
        %1213 = vst [vmem:[%s1212] sm:$0xff] %v1209
        %1214 = vst [vmem:[%s1212 + $0x8] sm:$0xff] %v1210
        %1215 = vst [vmem:[%s1212 + $0x10] sm:$0xff] %v1211
        %s1216 = sadd.s32 %s341, 7
        %s1217 = smul.u32 %s1216, 24
        %s1218 = scalar_lea.vmem %s301, %s1217 [#allocation3]
        %v1219 = vld [vmem:[%s1218] sm:$0xff]
        %v1220 = vld [vmem:[%s1218 + $0x8] sm:$0xff]
        %v1221 = vld [vmem:[%s1218 + $0x10] sm:$0xff]
        %1222 = vmatprep.subr.mxu0 0.0
        %1223 = vmatpush1.msra.mxu0 %v342
        %1224 = vmatprep.subr.mxu0 0.0
        %1225 = vmatpush1.msra.mxu0 %v343
        %1226 = vmatprep.subr.mxu0 0.0
        %1227 = vmatpush1.msra.mxu0 %v344
        %1228 = vmatprep.subr.mxu0 0.0
        %1229 = vmatpush1.msra.mxu0 %v345
        %1230 = vmatprep.subr.mxu0 0.0
        %1231 = vmatpush1.msra.mxu0 %v346
        %1232 = vmatprep.subr.mxu0 0.0
        %1233 = vmatpush1.msra.mxu0 %v347
        %1234 = vmatprep.subr.mxu0 0.0
        %1235 = vmatpush1.msra.mxu0 %v348
        %1236 = vmatprep.subr.mxu0 0.0
        %1237 = vmatpush1.msra.mxu0 %v349
        %1238 = vmatprep.subr.mxu0 0.0
        %1239 = vmatpush1.msra.mxu0 %v350
        %1240 = vmatprep.subr.mxu0 0.0
        %1241 = vmatpush1.msra.mxu0 %v351
        %1242 = vmatprep.subr.mxu0 0.0
        %1243 = vmatpush1.msra.mxu0 %v352
        %1244 = vmatprep.subr.mxu0 0.0
        %1245 = vmatpush1.msra.mxu0 %v353
        %1246 = vmatprep.subr.mxu0 0.0
        %1247 = vmatpush1.msra.mxu0 %v354
        %1248 = vmatprep.subr.mxu0 0.0
        %1249 = vmatpush1.msra.mxu0 %v355
        %1250 = vmatprep.subr.mxu0 0.0
        %1251 = vmatpush1.msra.mxu0 %v356
        %1252 = vmatprep.subr.mxu0 0.0
        %1253 = vmatpush1.msra.mxu0 %v357
        %1254 = vmatprep.subr.mxu0 0.0
        %1255 = vmatpush1.msra.mxu0 0.0
        %1256 = vmatprep.subr.mxu0 0.0
        %1257 = vmatpush1.msra.mxu0 0.0
        %1258 = vmatprep.subr.mxu0 0.0
        %1259 = vmatpush1.msra.mxu0 0.0
        %1260 = vmatprep.subr.mxu0 0.0
        %1261 = vmatpush1.msra.mxu0 0.0
        %1262 = vmatprep.subr.mxu0 0.0
        %1263 = vmatpush1.msra.mxu0 0.0
        %1264 = vmatprep.subr.mxu0 0.0
        %1265 = vmatpush1.msra.mxu0 0.0
        %1266 = vmatprep.subr.mxu0 0.0
        %1267 = vmatpush1.msra.mxu0 0.0
        %1268 = vmatprep.subr.mxu0 0.0
        %1269 = vmatpush1.msra.mxu0 0.0
        %1270 = vmatprep.subr.mxu0 0.0
        %1271 = vmatpush1.msra.mxu0 0.0
        %1272 = vmatprep.subr.mxu0 0.0
        %1273 = vmatpush1.msra.mxu0 0.0
        %1274 = vmatprep.subr.mxu0 0.0
        %1275 = vmatpush1.msra.mxu0 0.0
        %1276 = vmatprep.subr.mxu0 0.0
        %1277 = vmatpush1.msra.mxu0 0.0
        %1278 = vmatprep.subr.mxu0 0.0
        %1279 = vmatpush1.msra.mxu0 0.0
        %1280 = vmatprep.subr.mxu0 0.0
        %1281 = vmatpush1.msra.mxu0 0.0
        %1282 = vmatprep.subr.mxu0 0.0
        %1283 = vmatpush1.msra.mxu0 0.0
        %1284 = vmatprep.subr.mxu0 0.0
        %1285 = vmatpush1.msra.mxu0 0.0
        %1286 = vmatprep.mubr.f32.mxu0 0.0
        %1287 = vmatmul.mubr.f32.gmra.mrb[0].mxu0 %v1219
        %v1288 = vpop.f32.mrb[0].mxu0
        %v1289 = vadd.f32 %v416, %v1288
        %v1290 = vpop.f32.mrb[0].mxu0
        %1291 = vmatprep.mubr.f32.mxu0 0.0
        %1292 = vmatmul.mubr.f32.gmra.mrb[0].mxu0 %v1220
        %v1293 = vpop.f32.mrb[0].mxu0
        %v1294 = vadd.f32 %v416, %v1293
        %v1295 = vpop.f32.mrb[0].mxu0
        %1296 = vmatprep.mubr.f32.mxu0 0.0
        %1297 = vmatmul.mubr.f32.gmra.mrb[0].mxu0 %v1221
        %v1298 = vpop.f32.mrb[0].mxu0
        %v1299 = vadd.f32 %v416, %v1298
        %v1300 = vpop.f32.mrb[0].mxu0
        %1301 = vdwg.mxu0
        %v1302 = vmax.f32 %v1289, 0.0
        %v1303 = vmax.f32 %v1294, 0.0
        %v1304 = vmax.f32 %v1299, 0.0
        %v1305 = vmin.f32 %v1302, 6.0
        %v1306 = vmin.f32 %v1303, 6.0
        %v1307 = vmin.f32 %v1304, 6.0
        %p1308 = scmp.ge.s32.totalorder %s1216, 1
        %p1309 = scmp.le.s32.totalorder %s1216, 16
        %p1310 = pnand %p1308, %p1309
        %p1311 = pneg %p1310
        %s1312 = scalar_select %p1311, 1, 0
        %v1313 = vstv %s1312
        %vm1314 = vcmp.eq.s32.totalorder %v1313, 1
        %vm1315 = vmand %vm404, %vm1314
        %vm1316 = vmand %vm405, %vm1314
        %vm1317 = vmand %vm406, %vm1314
        %v1318 = vsel %vm1315, 1, 0
        %v1319 = vsel %vm1316, 1, 0
        %v1320 = vsel %vm1317, 1, 0
        %vm1321 = vcmp.eq.s32.totalorder %v1318, 1
        %vm1322 = vcmp.eq.s32.totalorder %v1319, 1
        %vm1323 = vcmp.eq.s32.totalorder %v1320, 1
        %v1324 = vsel %vm1321, %v1305, 0.0
        %v1325 = vsel %vm1322, %v1306, 0.0
        %v1326 = vsel %vm1323, %v1307, 0.0
        %s1327 = scalar_lea.vmem [#allocation2], 168
        %1328 = vst [vmem:[%s1327] sm:$0xff] %v1324
        %1329 = vst [vmem:[%s1327 + $0x8] sm:$0xff] %v1325
        %1330 = vst [vmem:[%s1327 + $0x10] sm:$0xff] %v1326
        %s1331 = sadd.s32 %s341, 8
        %s1332 = smul.u32 %s1331, 24
        %s1333 = scalar_lea.vmem %s301, %s1332 [#allocation3]
        %v1334 = vld [vmem:[%s1333] sm:$0xff]
        %v1335 = vld [vmem:[%s1333 + $0x8] sm:$0xff]
        %v1336 = vld [vmem:[%s1333 + $0x10] sm:$0xff]
        %1337 = vmatprep.subr.mxu0 0.0
        %1338 = vmatpush1.msra.mxu0 %v342
        %1339 = vmatprep.subr.mxu0 0.0
        %1340 = vmatpush1.msra.mxu0 %v343
        %1341 = vmatprep.subr.mxu0 0.0
        %1342 = vmatpush1.msra.mxu0 %v344
        %1343 = vmatprep.subr.mxu0 0.0
        %1344 = vmatpush1.msra.mxu0 %v345
        %1345 = vmatprep.subr.mxu0 0.0
        %1346 = vmatpush1.msra.mxu0 %v346
        %1347 = vmatprep.subr.mxu0 0.0
        %1348 = vmatpush1.msra.mxu0 %v347
        %1349 = vmatprep.subr.mxu0 0.0
        %1350 = vmatpush1.msra.mxu0 %v348
        %1351 = vmatprep.subr.mxu0 0.0
        %1352 = vmatpush1.msra.mxu0 %v349
        %1353 = vmatprep.subr.mxu0 0.0
        %1354 = vmatpush1.msra.mxu0 %v350
        %1355 = vmatprep.subr.mxu0 0.0
        %1356 = vmatpush1.msra.mxu0 %v351
        %1357 = vmatprep.subr.mxu0 0.0
        %1358 = vmatpush1.msra.mxu0 %v352
        %1359 = vmatprep.subr.mxu0 0.0
        %1360 = vmatpush1.msra.mxu0 %v353
        %1361 = vmatprep.subr.mxu0 0.0
        %1362 = vmatpush1.msra.mxu0 %v354
        %1363 = vmatprep.subr.mxu0 0.0
        %1364 = vmatpush1.msra.mxu0 %v355
        %1365 = vmatprep.subr.mxu0 0.0
        %1366 = vmatpush1.msra.mxu0 %v356
        %1367 = vmatprep.subr.mxu0 0.0
        %1368 = vmatpush1.msra.mxu0 %v357
        %1369 = vmatprep.subr.mxu0 0.0
        %1370 = vmatpush1.msra.mxu0 0.0
        %1371 = vmatprep.subr.mxu0 0.0
        %1372 = vmatpush1.msra.mxu0 0.0
        %1373 = vmatprep.subr.mxu0 0.0
        %1374 = vmatpush1.msra.mxu0 0.0
        %1375 = vmatprep.subr.mxu0 0.0
        %1376 = vmatpush1.msra.mxu0 0.0
        %1377 = vmatprep.subr.mxu0 0.0
        %1378 = vmatpush1.msra.mxu0 0.0
        %1379 = vmatprep.subr.mxu0 0.0
        %1380 = vmatpush1.msra.mxu0 0.0
        %1381 = vmatprep.subr.mxu0 0.0
        %1382 = vmatpush1.msra.mxu0 0.0
        %1383 = vmatprep.subr.mxu0 0.0
        %1384 = vmatpush1.msra.mxu0 0.0
        %1385 = vmatprep.subr.mxu0 0.0
        %1386 = vmatpush1.msra.mxu0 0.0
        %1387 = vmatprep.subr.mxu0 0.0
        %1388 = vmatpush1.msra.mxu0 0.0
        %1389 = vmatprep.subr.mxu0 0.0
        %1390 = vmatpush1.msra.mxu0 0.0
        %1391 = vmatprep.subr.mxu0 0.0
        %1392 = vmatpush1.msra.mxu0 0.0
        %1393 = vmatprep.subr.mxu0 0.0
        %1394 = vmatpush1.msra.mxu0 0.0
        %1395 = vmatprep.subr.mxu0 0.0
        %1396 = vmatpush1.msra.mxu0 0.0
        %1397 = vmatprep.subr.mxu0 0.0
        %1398 = vmatpush1.msra.mxu0 0.0
        %1399 = vmatprep.subr.mxu0 0.0
        %1400 = vmatpush1.msra.mxu0 0.0
        %1401 = vmatprep.mubr.f32.mxu0 0.0
        %1402 = vmatmul.mubr.f32.gmra.mrb[0].mxu0 %v1334
        %v1403 = vpop.f32.mrb[0].mxu0
        %v1404 = vadd.f32 %v416, %v1403
        %v1405 = vpop.f32.mrb[0].mxu0
        %1406 = vmatprep.mubr.f32.mxu0 0.0
        %1407 = vmatmul.mubr.f32.gmra.mrb[0].mxu0 %v1335
        %v1408 = vpop.f32.mrb[0].mxu0
        %v1409 = vadd.f32 %v416, %v1408
        %v1410 = vpop.f32.mrb[0].mxu0
        %1411 = vmatprep.mubr.f32.mxu0 0.0
        %1412 = vmatmul.mubr.f32.gmra.mrb[0].mxu0 %v1336
        %v1413 = vpop.f32.mrb[0].mxu0
        %v1414 = vadd.f32 %v416, %v1413
        %v1415 = vpop.f32.mrb[0].mxu0
        %1416 = vdwg.mxu0
        %v1417 = vmax.f32 %v1404, 0.0
        %v1418 = vmax.f32 %v1409, 0.0
        %v1419 = vmax.f32 %v1414, 0.0
        %v1420 = vmin.f32 %v1417, 6.0
        %v1421 = vmin.f32 %v1418, 6.0
        %v1422 = vmin.f32 %v1419, 6.0
        %p1423 = scmp.ge.s32.totalorder %s1331, 1
        %p1424 = scmp.le.s32.totalorder %s1331, 16
        %p1425 = pnand %p1423, %p1424
        %p1426 = pneg %p1425
        %s1427 = scalar_select %p1426, 1, 0
        %v1428 = vstv %s1427
        %vm1429 = vcmp.eq.s32.totalorder %v1428, 1
        %vm1430 = vmand %vm404, %vm1429
        %vm1431 = vmand %vm405, %vm1429
        %vm1432 = vmand %vm406, %vm1429
        %v1433 = vsel %vm1430, 1, 0
        %v1434 = vsel %vm1431, 1, 0
        %v1435 = vsel %vm1432, 1, 0
        %vm1436 = vcmp.eq.s32.totalorder %v1433, 1
        %vm1437 = vcmp.eq.s32.totalorder %v1434, 1
        %vm1438 = vcmp.eq.s32.totalorder %v1435, 1
        %v1439 = vsel %vm1436, %v1420, 0.0
        %v1440 = vsel %vm1437, %v1421, 0.0
        %v1441 = vsel %vm1438, %v1422, 0.0
        %s1442 = scalar_lea.vmem [#allocation2], 192
        %1443 = vst [vmem:[%s1442] sm:$0xff] %v1439
        %1444 = vst [vmem:[%s1442 + $0x8] sm:$0xff] %v1440
        %1445 = vst [vmem:[%s1442 + $0x10] sm:$0xff] %v1441
        %s1446 = sadd.s32 %s341, 9
        %s1447 = smul.u32 %s1446, 24
        %s1448 = scalar_lea.vmem %s301, %s1447 [#allocation3]
        %v1449 = vld [vmem:[%s1448] sm:$0xff]
        %v1450 = vld [vmem:[%s1448 + $0x8] sm:$0xff]
        %v1451 = vld [vmem:[%s1448 + $0x10] sm:$0xff]
        %1452 = vmatprep.subr.mxu0 0.0
        %1453 = vmatpush1.msra.mxu0 %v342
        %1454 = vmatprep.subr.mxu0 0.0
        %1455 = vmatpush1.msra.mxu0 %v343
        %1456 = vmatprep.subr.mxu0 0.0
        %1457 = vmatpush1.msra.mxu0 %v344
        %1458 = vmatprep.subr.mxu0 0.0
        %1459 = vmatpush1.msra.mxu0 %v345
        %1460 = vmatprep.subr.mxu0 0.0
        %1461 = vmatpush1.msra.mxu0 %v346
        %1462 = vmatprep.subr.mxu0 0.0
        %1463 = vmatpush1.msra.mxu0 %v347
        %1464 = vmatprep.subr.mxu0 0.0
        %1465 = vmatpush1.msra.mxu0 %v348
        %1466 = vmatprep.subr.mxu0 0.0
        %1467 = vmatpush1.msra.mxu0 %v349
        %1468 = vmatprep.subr.mxu0 0.0
        %1469 = vmatpush1.msra.mxu0 %v350
        %1470 = vmatprep.subr.mxu0 0.0
        %1471 = vmatpush1.msra.mxu0 %v351
        %1472 = vmatprep.subr.mxu0 0.0
        %1473 = vmatpush1.msra.mxu0 %v352
        %1474 = vmatprep.subr.mxu0 0.0
        %1475 = vmatpush1.msra.mxu0 %v353
        %1476 = vmatprep.subr.mxu0 0.0
        %1477 = vmatpush1.msra.mxu0 %v354
        %1478 = vmatprep.subr.mxu0 0.0
        %1479 = vmatpush1.msra.mxu0 %v355
        %1480 = vmatprep.subr.mxu0 0.0
        %1481 = vmatpush1.msra.mxu0 %v356
        %1482 = vmatprep.subr.mxu0 0.0
        %1483 = vmatpush1.msra.mxu0 %v357
        %1484 = vmatprep.subr.mxu0 0.0
        %1485 = vmatpush1.msra.mxu0 0.0
        %1486 = vmatprep.subr.mxu0 0.0
        %1487 = vmatpush1.msra.mxu0 0.0
        %1488 = vmatprep.subr.mxu0 0.0
        %1489 = vmatpush1.msra.mxu0 0.0
        %1490 = vmatprep.subr.mxu0 0.0
        %1491 = vmatpush1.msra.mxu0 0.0
        %1492 = vmatprep.subr.mxu0 0.0
        %1493 = vmatpush1.msra.mxu0 0.0
        %1494 = vmatprep.subr.mxu0 0.0
        %1495 = vmatpush1.msra.mxu0 0.0
        %1496 = vmatprep.subr.mxu0 0.0
        %1497 = vmatpush1.msra.mxu0 0.0
        %1498 = vmatprep.subr.mxu0 0.0
        %1499 = vmatpush1.msra.mxu0 0.0
        %1500 = vmatprep.subr.mxu0 0.0
        %1501 = vmatpush1.msra.mxu0 0.0
        %1502 = vmatprep.subr.mxu0 0.0
        %1503 = vmatpush1.msra.mxu0 0.0
        %1504 = vmatprep.subr.mxu0 0.0
        %1505 = vmatpush1.msra.mxu0 0.0
        %1506 = vmatprep.subr.mxu0 0.0
        %1507 = vmatpush1.msra.mxu0 0.0
        %1508 = vmatprep.subr.mxu0 0.0
        %1509 = vmatpush1.msra.mxu0 0.0
        %1510 = vmatprep.subr.mxu0 0.0
        %1511 = vmatpush1.msra.mxu0 0.0
        %1512 = vmatprep.subr.mxu0 0.0
        %1513 = vmatpush1.msra.mxu0 0.0
        %1514 = vmatprep.subr.mxu0 0.0
        %1515 = vmatpush1.msra.mxu0 0.0
        %1516 = vmatprep.mubr.f32.mxu0 0.0
        %1517 = vmatmul.mubr.f32.gmra.mrb[0].mxu0 %v1449
        %v1518 = vpop.f32.mrb[0].mxu0
        %v1519 = vadd.f32 %v416, %v1518
        %v1520 = vpop.f32.mrb[0].mxu0
        %1521 = vmatprep.mubr.f32.mxu0 0.0
        %1522 = vmatmul.mubr.f32.gmra.mrb[0].mxu0 %v1450
        %v1523 = vpop.f32.mrb[0].mxu0
        %v1524 = vadd.f32 %v416, %v1523
        %v1525 = vpop.f32.mrb[0].mxu0
        %1526 = vmatprep.mubr.f32.mxu0 0.0
        %1527 = vmatmul.mubr.f32.gmra.mrb[0].mxu0 %v1451
        %v1528 = vpop.f32.mrb[0].mxu0
        %v1529 = vadd.f32 %v416, %v1528
        %v1530 = vpop.f32.mrb[0].mxu0
        %1531 = vdwg.mxu0
        %v1532 = vmax.f32 %v1519, 0.0
        %v1533 = vmax.f32 %v1524, 0.0
        %v1534 = vmax.f32 %v1529, 0.0
        %v1535 = vmin.f32 %v1532, 6.0
        %v1536 = vmin.f32 %v1533, 6.0
        %v1537 = vmin.f32 %v1534, 6.0
        %p1538 = scmp.ge.s32.totalorder %s1446, 1
        %p1539 = scmp.le.s32.totalorder %s1446, 16
        %p1540 = pnand %p1538, %p1539
        %p1541 = pneg %p1540
        %s1542 = scalar_select %p1541, 1, 0
        %v1543 = vstv %s1542
        %vm1544 = vcmp.eq.s32.totalorder %v1543, 1
        %vm1545 = vmand %vm404, %vm1544
        %vm1546 = vmand %vm405, %vm1544
        %vm1547 = vmand %vm406, %vm1544
        %v1548 = vsel %vm1545, 1, 0
        %v1549 = vsel %vm1546, 1, 0
        %v1550 = vsel %vm1547, 1, 0
        %vm1551 = vcmp.eq.s32.totalorder %v1548, 1
        %vm1552 = vcmp.eq.s32.totalorder %v1549, 1
        %vm1553 = vcmp.eq.s32.totalorder %v1550, 1
        %v1554 = vsel %vm1551, %v1535, 0.0
        %v1555 = vsel %vm1552, %v1536, 0.0
        %v1556 = vsel %vm1553, %v1537, 0.0
        %s1557 = scalar_lea.vmem [#allocation2], 216
        %1558 = vst [vmem:[%s1557] sm:$0xff] %v1554
        %1559 = vst [vmem:[%s1557 + $0x8] sm:$0xff] %v1555
        %1560 = vst [vmem:[%s1557 + $0x10] sm:$0xff] %v1556
        %v1561 = vld [vmem:[#allocation2] sm:$0xff]
        %v1562 = vld [vmem:[#allocation2 + $0x8] sm:$0xff]
        %v1563 = vld [vmem:[#allocation2 + $0x10] sm:$0xff]
        %v1565 = vlaneseq
        %v1566 = vshrl.u32 %v1565, 7
        %v1567 = vsub.s32 0, %v1566
        %v1568 = vrot.slane %v377, %v1567
        %v1570 = vmul.f32 %v1561, %v1568
        %v1571 = vmul.f32 %v1562, %v1568
        %v1572 = vadd.f32 %v1570, 0.0
        %v1573 = vadd.f32 %v1571, 0.0
        %v1575 = vlaneseq
        %v1576 = vshrl.u32 %v1575, 7
        %v1577 = vsub.s32 0, %v1576
        %v1578 = vrot.slane %v379, %v1577
        %v1580 = vmul.f32 %v1561, %v1578
        %v1581 = vmul.f32 %v1562, %v1578
        %v1582 = vmul.f32 %v1563, %v1578
        %vm1586 = vcmask 1046528
        %v1587 = vrot.slane %v1580, 1
        %v1588 = vrot.slane %v1581, 1
        %v1589 = vsel %vm1586, %v1587, %v1588
        %v1590 = vrot.slane %v1582, 1
        %v1591 = vsel %vm1586, %v1588, %v1590
        %v1594 = vadd.f32 %v1572, %v1589
        %v1595 = vadd.f32 %v1573, %v1591
        %v1597 = vlaneseq
        %v1598 = vshrl.u32 %v1597, 7
        %v1599 = vsub.s32 0, %v1598
        %v1600 = vrot.slane %v381, %v1599
        %v1602 = vmul.f32 %v1561, %v1600
        %v1603 = vmul.f32 %v1562, %v1600
        %v1604 = vmul.f32 %v1563, %v1600
        %vm1608 = vcmask 1045504
        %v1609 = vrot.slane %v1602, 2
        %v1610 = vrot.slane %v1603, 2
        %v1611 = vsel %vm1608, %v1609, %v1610
        %v1612 = vrot.slane %v1604, 2
        %v1613 = vsel %vm1608, %v1610, %v1612
        %v1616 = vadd.f32 %v1594, %v1611
        %v1617 = vadd.f32 %v1595, %v1613
        %v1618 = vld [vmem:[%s637] sm:$0xff]
        %v1619 = vld [vmem:[%s637 + $0x8] sm:$0xff]
        %v1620 = vld [vmem:[%s637 + $0x10] sm:$0xff]
        %v1622 = vlaneseq
        %v1623 = vshrl.u32 %v1622, 7
        %v1624 = vsub.s32 0, %v1623
        %v1625 = vrot.slane %v383, %v1624
        %v1627 = vmul.f32 %v1618, %v1625
        %v1628 = vmul.f32 %v1619, %v1625
        %v1629 = vadd.f32 %v1616, %v1627
        %v1630 = vadd.f32 %v1617, %v1628
        %v1632 = vlaneseq
        %v1633 = vshrl.u32 %v1632, 7
        %v1634 = vsub.s32 0, %v1633
        %v1635 = vrot.slane %v385, %v1634
        %v1637 = vmul.f32 %v1618, %v1635
        %v1638 = vmul.f32 %v1619, %v1635
        %v1639 = vmul.f32 %v1620, %v1635
        %v1643 = vrot.slane %v1637, 1
        %v1644 = vrot.slane %v1638, 1
        %v1645 = vsel %vm1586, %v1643, %v1644
        %v1646 = vrot.slane %v1639, 1
        %v1647 = vsel %vm1586, %v1644, %v1646
        %v1650 = vadd.f32 %v1629, %v1645
        %v1651 = vadd.f32 %v1630, %v1647
        %v1653 = vlaneseq
        %v1654 = vshrl.u32 %v1653, 7
        %v1655 = vsub.s32 0, %v1654
        %v1656 = vrot.slane %v387, %v1655
        %v1658 = vmul.f32 %v1618, %v1656
        %v1659 = vmul.f32 %v1619, %v1656
        %v1660 = vmul.f32 %v1620, %v1656
        %v1664 = vrot.slane %v1658, 2
        %v1665 = vrot.slane %v1659, 2
        %v1666 = vsel %vm1608, %v1664, %v1665
        %v1667 = vrot.slane %v1660, 2
        %v1668 = vsel %vm1608, %v1665, %v1667
        %v1671 = vadd.f32 %v1650, %v1666
        %v1672 = vadd.f32 %v1651, %v1668
        %v1673 = vld [vmem:[%s752] sm:$0xff]
        %v1674 = vld [vmem:[%s752 + $0x8] sm:$0xff]
        %v1675 = vld [vmem:[%s752 + $0x10] sm:$0xff]
        %v1677 = vlaneseq
        %v1678 = vshrl.u32 %v1677, 7
        %v1679 = vsub.s32 0, %v1678
        %v1680 = vrot.slane %v389, %v1679
        %v1682 = vmul.f32 %v1673, %v1680
        %v1683 = vmul.f32 %v1674, %v1680
        %v1684 = vadd.f32 %v1671, %v1682
        %v1685 = vadd.f32 %v1672, %v1683
        %v1687 = vlaneseq
        %v1688 = vshrl.u32 %v1687, 7
        %v1689 = vsub.s32 0, %v1688
        %v1690 = vrot.slane %v391, %v1689
        %v1692 = vmul.f32 %v1673, %v1690
        %v1693 = vmul.f32 %v1674, %v1690
        %v1694 = vmul.f32 %v1675, %v1690
        %v1698 = vrot.slane %v1692, 1
        %v1699 = vrot.slane %v1693, 1
        %v1700 = vsel %vm1586, %v1698, %v1699
        %v1701 = vrot.slane %v1694, 1
        %v1702 = vsel %vm1586, %v1699, %v1701
        %v1705 = vadd.f32 %v1684, %v1700
        %v1706 = vadd.f32 %v1685, %v1702
        %v1708 = vlaneseq
        %v1709 = vshrl.u32 %v1708, 7
        %v1710 = vsub.s32 0, %v1709
        %v1711 = vrot.slane %v393, %v1710
        %v1713 = vmul.f32 %v1673, %v1711
        %v1714 = vmul.f32 %v1674, %v1711
        %v1715 = vmul.f32 %v1675, %v1711
        %v1719 = vrot.slane %v1713, 2
        %v1720 = vrot.slane %v1714, 2
        %v1721 = vsel %vm1608, %v1719, %v1720
        %v1722 = vrot.slane %v1715, 2
        %v1723 = vsel %vm1608, %v1720, %v1722
        %v1726 = vadd.f32 %v1705, %v1721
        %v1727 = vadd.f32 %v1706, %v1723
        %v1729 = vlaneseq
        %v1730 = vshrl.u32 %v1729, 7
        %v1731 = vsub.s32 0, %v1730
        %v1732 = vrot.slane %v359, %v1731
        %v1734 = vadd.f32 %v1726, %v1732
        %v1735 = vadd.f32 %v1727, %v1732
        %v1736 = vmax.f32 %v1734, 0.0
        %v1737 = vmax.f32 %v1735, 0.0
        %v1738 = vmin.f32 %v1736, 6.0
        %v1739 = vmin.f32 %v1737, 6.0
        %v1741 = vlaneseq
        %v1742 = vshrl.u32 %v1741, 7
        %v1743 = vsub.s32 0, %v1742
        %v1744 = vrot.slane %v376, %v1743
        %1746 = vmatprep.subr.mxu0 0.0
        %1747 = vmatpush1.msra.mxu0 %v360
        %1748 = vmatprep.subr.mxu0 0.0
        %1749 = vmatpush1.msra.mxu0 %v361
        %1750 = vmatprep.subr.mxu0 0.0
        %1751 = vmatpush1.msra.mxu0 %v362
        %1752 = vmatprep.subr.mxu0 0.0
        %1753 = vmatpush1.msra.mxu0 %v363
        %1754 = vmatprep.subr.mxu0 0.0
        %1755 = vmatpush1.msra.mxu0 %v364
        %1756 = vmatprep.subr.mxu0 0.0
        %1757 = vmatpush1.msra.mxu0 %v365
        %1758 = vmatprep.subr.mxu0 0.0
        %1759 = vmatpush1.msra.mxu0 %v366
        %1760 = vmatprep.subr.mxu0 0.0
        %1761 = vmatpush1.msra.mxu0 %v367
        %1762 = vmatprep.subr.mxu0 0.0
        %1763 = vmatpush1.msra.mxu0 %v368
        %1764 = vmatprep.subr.mxu0 0.0
        %1765 = vmatpush1.msra.mxu0 %v369
        %1766 = vmatprep.subr.mxu0 0.0
        %1767 = vmatpush1.msra.mxu0 %v370
        %1768 = vmatprep.subr.mxu0 0.0
        %1769 = vmatpush1.msra.mxu0 %v371
        %1770 = vmatprep.subr.mxu0 0.0
        %1771 = vmatpush1.msra.mxu0 %v372
        %1772 = vmatprep.subr.mxu0 0.0
        %1773 = vmatpush1.msra.mxu0 %v373
        %1774 = vmatprep.subr.mxu0 0.0
        %1775 = vmatpush1.msra.mxu0 %v374
        %1776 = vmatprep.subr.mxu0 0.0
        %1777 = vmatpush1.msra.mxu0 %v375
        %1778 = vmatprep.subr.mxu0 0.0
        %1779 = vmatpush1.msra.mxu0 0.0
        %1780 = vmatprep.subr.mxu0 0.0
        %1781 = vmatpush1.msra.mxu0 0.0
        %1782 = vmatprep.subr.mxu0 0.0
        %1783 = vmatpush1.msra.mxu0 0.0
        %1784 = vmatprep.subr.mxu0 0.0
        %1785 = vmatpush1.msra.mxu0 0.0
        %1786 = vmatprep.subr.mxu0 0.0
        %1787 = vmatpush1.msra.mxu0 0.0
        %1788 = vmatprep.subr.mxu0 0.0
        %1789 = vmatpush1.msra.mxu0 0.0
        %1790 = vmatprep.subr.mxu0 0.0
        %1791 = vmatpush1.msra.mxu0 0.0
        %1792 = vmatprep.subr.mxu0 0.0
        %1793 = vmatpush1.msra.mxu0 0.0
        %1794 = vmatprep.subr.mxu0 0.0
        %1795 = vmatpush1.msra.mxu0 0.0
        %1796 = vmatprep.subr.mxu0 0.0
        %1797 = vmatpush1.msra.mxu0 0.0
        %1798 = vmatprep.subr.mxu0 0.0
        %1799 = vmatpush1.msra.mxu0 0.0
        %1800 = vmatprep.subr.mxu0 0.0
        %1801 = vmatpush1.msra.mxu0 0.0
        %1802 = vmatprep.subr.mxu0 0.0
        %1803 = vmatpush1.msra.mxu0 0.0
        %1804 = vmatprep.subr.mxu0 0.0
        %1805 = vmatpush1.msra.mxu0 0.0
        %1806 = vmatprep.subr.mxu0 0.0
        %1807 = vmatpush1.msra.mxu0 0.0
        %1808 = vmatprep.subr.mxu0 0.0
        %1809 = vmatpush1.msra.mxu0 0.0
        %1810 = vmatprep.mubr.f32.mxu0 0.0
        %1811 = vmatmul.mubr.f32.gmra.mrb[0].mxu0 %v1738
        %v1812 = vpop.f32.mrb[0].mxu0
        %v1813 = vadd.f32 %v1744, %v1812
        %v1814 = vpop.f32.mrb[0].mxu0
        %1815 = vmatprep.mubr.f32.mxu0 0.0
        %1816 = vmatmul.mubr.f32.gmra.mrb[0].mxu0 %v1739
        %v1817 = vpop.f32.mrb[0].mxu0
        %v1818 = vadd.f32 %v1744, %v1817
        %v1819 = vpop.f32.mrb[0].mxu0
        %1820 = vdwg.mxu0
        %v1821 = vld [vmem:[%s528 + $0x1] sm:$0xff]
        %v1822 = vld [vmem:[%s528 + $0x9] sm:$0xff]
        %v1823 = vadd.f32 %v1813, %v1821
        %v1824 = vadd.f32 %v1818, %v1822
        %1825 = vst [vmem:[%s339] sm:$0xff] %v1823
        %1826 = vst [vmem:[%s339 + $0x8] sm:$0xff] %v1824
        %v1827 = vld [vmem:[%s637] sm:$0xff]
        %v1828 = vld [vmem:[%s637 + $0x8] sm:$0xff]
        %v1829 = vld [vmem:[%s637 + $0x10] sm:$0xff]
        %v1830 = vmul.f32 %v1827, %v1568
        %v1831 = vmul.f32 %v1828, %v1568
        %v1832 = vadd.f32 %v1830, 0.0
        %v1833 = vadd.f32 %v1831, 0.0
        %v1834 = vmul.f32 %v1827, %v1578
        %v1835 = vmul.f32 %v1828, %v1578
        %v1836 = vmul.f32 %v1829, %v1578
        %v1840 = vrot.slane %v1834, 1
        %v1841 = vrot.slane %v1835, 1
        %v1842 = vsel %vm1586, %v1840, %v1841
        %v1843 = vrot.slane %v1836, 1
        %v1844 = vsel %vm1586, %v1841, %v1843
        %v1847 = vadd.f32 %v1832, %v1842
        %v1848 = vadd.f32 %v1833, %v1844
        %v1849 = vmul.f32 %v1827, %v1600
        %v1850 = vmul.f32 %v1828, %v1600
        %v1851 = vmul.f32 %v1829, %v1600
        %v1855 = vrot.slane %v1849, 2
        %v1856 = vrot.slane %v1850, 2
        %v1857 = vsel %vm1608, %v1855, %v1856
        %v1858 = vrot.slane %v1851, 2
        %v1859 = vsel %vm1608, %v1856, %v1858
        %v1862 = vadd.f32 %v1847, %v1857
        %v1863 = vadd.f32 %v1848, %v1859
        %v1864 = vld [vmem:[%s752] sm:$0xff]
        %v1865 = vld [vmem:[%s752 + $0x8] sm:$0xff]
        %v1866 = vld [vmem:[%s752 + $0x10] sm:$0xff]
        %v1867 = vmul.f32 %v1864, %v1625
        %v1868 = vmul.f32 %v1865, %v1625
        %v1869 = vadd.f32 %v1862, %v1867
        %v1870 = vadd.f32 %v1863, %v1868
        %v1871 = vmul.f32 %v1864, %v1635
        %v1872 = vmul.f32 %v1865, %v1635
        %v1873 = vmul.f32 %v1866, %v1635
        %v1877 = vrot.slane %v1871, 1
        %v1878 = vrot.slane %v1872, 1
        %v1879 = vsel %vm1586, %v1877, %v1878
        %v1880 = vrot.slane %v1873, 1
        %v1881 = vsel %vm1586, %v1878, %v1880
        %v1884 = vadd.f32 %v1869, %v1879
        %v1885 = vadd.f32 %v1870, %v1881
        %v1886 = vmul.f32 %v1864, %v1656
        %v1887 = vmul.f32 %v1865, %v1656
        %v1888 = vmul.f32 %v1866, %v1656
        %v1892 = vrot.slane %v1886, 2
        %v1893 = vrot.slane %v1887, 2
        %v1894 = vsel %vm1608, %v1892, %v1893
        %v1895 = vrot.slane %v1888, 2
        %v1896 = vsel %vm1608, %v1893, %v1895
        %v1899 = vadd.f32 %v1884, %v1894
        %v1900 = vadd.f32 %v1885, %v1896
        %v1901 = vld [vmem:[%s867] sm:$0xff]
        %v1902 = vld [vmem:[%s867 + $0x8] sm:$0xff]
        %v1903 = vld [vmem:[%s867 + $0x10] sm:$0xff]
        %v1904 = vmul.f32 %v1901, %v1680
        %v1905 = vmul.f32 %v1902, %v1680
        %v1906 = vadd.f32 %v1899, %v1904
        %v1907 = vadd.f32 %v1900, %v1905
        %v1908 = vmul.f32 %v1901, %v1690
        %v1909 = vmul.f32 %v1902, %v1690
        %v1910 = vmul.f32 %v1903, %v1690
        %v1914 = vrot.slane %v1908, 1
        %v1915 = vrot.slane %v1909, 1
        %v1916 = vsel %vm1586, %v1914, %v1915
        %v1917 = vrot.slane %v1910, 1
        %v1918 = vsel %vm1586, %v1915, %v1917
        %v1921 = vadd.f32 %v1906, %v1916
        %v1922 = vadd.f32 %v1907, %v1918
        %v1923 = vmul.f32 %v1901, %v1711
        %v1924 = vmul.f32 %v1902, %v1711
        %v1925 = vmul.f32 %v1903, %v1711
        %v1929 = vrot.slane %v1923, 2
        %v1930 = vrot.slane %v1924, 2
        %v1931 = vsel %vm1608, %v1929, %v1930
        %v1932 = vrot.slane %v1925, 2
        %v1933 = vsel %vm1608, %v1930, %v1932
        %v1936 = vadd.f32 %v1921, %v1931
        %v1937 = vadd.f32 %v1922, %v1933
        %v1938 = vadd.f32 %v1936, %v1732
        %v1939 = vadd.f32 %v1937, %v1732
        %v1940 = vmax.f32 %v1938, 0.0
        %v1941 = vmax.f32 %v1939, 0.0
        %v1942 = vmin.f32 %v1940, 6.0
        %v1943 = vmin.f32 %v1941, 6.0
        %1944 = vmatprep.subr.mxu0 0.0
        %1945 = vmatpush1.msra.mxu0 %v360
        %1946 = vmatprep.subr.mxu0 0.0
        %1947 = vmatpush1.msra.mxu0 %v361
        %1948 = vmatprep.subr.mxu0 0.0
        %1949 = vmatpush1.msra.mxu0 %v362
        %1950 = vmatprep.subr.mxu0 0.0
        %1951 = vmatpush1.msra.mxu0 %v363
        %1952 = vmatprep.subr.mxu0 0.0
        %1953 = vmatpush1.msra.mxu0 %v364
        %1954 = vmatprep.subr.mxu0 0.0
        %1955 = vmatpush1.msra.mxu0 %v365
        %1956 = vmatprep.subr.mxu0 0.0
        %1957 = vmatpush1.msra.mxu0 %v366
        %1958 = vmatprep.subr.mxu0 0.0
        %1959 = vmatpush1.msra.mxu0 %v367
        %1960 = vmatprep.subr.mxu0 0.0
        %1961 = vmatpush1.msra.mxu0 %v368
        %1962 = vmatprep.subr.mxu0 0.0
        %1963 = vmatpush1.msra.mxu0 %v369
        %1964 = vmatprep.subr.mxu0 0.0
        %1965 = vmatpush1.msra.mxu0 %v370
        %1966 = vmatprep.subr.mxu0 0.0
        %1967 = vmatpush1.msra.mxu0 %v371
        %1968 = vmatprep.subr.mxu0 0.0
        %1969 = vmatpush1.msra.mxu0 %v372
        %1970 = vmatprep.subr.mxu0 0.0
        %1971 = vmatpush1.msra.mxu0 %v373
        %1972 = vmatprep.subr.mxu0 0.0
        %1973 = vmatpush1.msra.mxu0 %v374
        %1974 = vmatprep.subr.mxu0 0.0
        %1975 = vmatpush1.msra.mxu0 %v375
        %1976 = vmatprep.subr.mxu0 0.0
        %1977 = vmatpush1.msra.mxu0 0.0
        %1978 = vmatprep.subr.mxu0 0.0
        %1979 = vmatpush1.msra.mxu0 0.0
        %1980 = vmatprep.subr.mxu0 0.0
        %1981 = vmatpush1.msra.mxu0 0.0
        %1982 = vmatprep.subr.mxu0 0.0
        %1983 = vmatpush1.msra.mxu0 0.0
        %1984 = vmatprep.subr.mxu0 0.0
        %1985 = vmatpush1.msra.mxu0 0.0
        %1986 = vmatprep.subr.mxu0 0.0
        %1987 = vmatpush1.msra.mxu0 0.0
        %1988 = vmatprep.subr.mxu0 0.0
        %1989 = vmatpush1.msra.mxu0 0.0
        %1990 = vmatprep.subr.mxu0 0.0
        %1991 = vmatpush1.msra.mxu0 0.0
        %1992 = vmatprep.subr.mxu0 0.0
        %1993 = vmatpush1.msra.mxu0 0.0
        %1994 = vmatprep.subr.mxu0 0.0
        %1995 = vmatpush1.msra.mxu0 0.0
        %1996 = vmatprep.subr.mxu0 0.0
        %1997 = vmatpush1.msra.mxu0 0.0
        %1998 = vmatprep.subr.mxu0 0.0
        %1999 = vmatpush1.msra.mxu0 0.0
        %2000 = vmatprep.subr.mxu0 0.0
        %2001 = vmatpush1.msra.mxu0 0.0
        %2002 = vmatprep.subr.mxu0 0.0
        %2003 = vmatpush1.msra.mxu0 0.0
        %2004 = vmatprep.subr.mxu0 0.0
        %2005 = vmatpush1.msra.mxu0 0.0
        %2006 = vmatprep.subr.mxu0 0.0
        %2007 = vmatpush1.msra.mxu0 0.0
        %2008 = vmatprep.mubr.f32.mxu0 0.0
        %2009 = vmatmul.mubr.f32.gmra.mrb[0].mxu0 %v1942
        %v2010 = vpop.f32.mrb[0].mxu0
        %v2011 = vadd.f32 %v1744, %v2010
        %v2012 = vpop.f32.mrb[0].mxu0
        %2013 = vmatprep.mubr.f32.mxu0 0.0
        %2014 = vmatmul.mubr.f32.gmra.mrb[0].mxu0 %v1943
        %v2015 = vpop.f32.mrb[0].mxu0
        %v2016 = vadd.f32 %v1744, %v2015
        %v2017 = vpop.f32.mrb[0].mxu0
        %2018 = vdwg.mxu0
        %v2019 = vld [vmem:[%s643 + $0x1] sm:$0xff]
        %v2020 = vld [vmem:[%s643 + $0x9] sm:$0xff]
        %v2021 = vadd.f32 %v2011, %v2019
        %v2022 = vadd.f32 %v2016, %v2020
        %s2023 = scalar_lea.vmem %s339, 16 [#allocation9]
        %2024 = vst [vmem:[%s2023] sm:$0xff] %v2021
        %2025 = vst [vmem:[%s2023 + $0x8] sm:$0xff] %v2022
        %v2026 = vld [vmem:[%s752] sm:$0xff]
        %v2027 = vld [vmem:[%s752 + $0x8] sm:$0xff]
        %v2028 = vld [vmem:[%s752 + $0x10] sm:$0xff]
        %v2029 = vmul.f32 %v2026, %v1568
        %v2030 = vmul.f32 %v2027, %v1568
        %v2031 = vadd.f32 %v2029, 0.0
        %v2032 = vadd.f32 %v2030, 0.0
        %v2033 = vmul.f32 %v2026, %v1578
        %v2034 = vmul.f32 %v2027, %v1578
        %v2035 = vmul.f32 %v2028, %v1578
        %v2039 = vrot.slane %v2033, 1
        %v2040 = vrot.slane %v2034, 1
        %v2041 = vsel %vm1586, %v2039, %v2040
        %v2042 = vrot.slane %v2035, 1
        %v2043 = vsel %vm1586, %v2040, %v2042
        %v2046 = vadd.f32 %v2031, %v2041
        %v2047 = vadd.f32 %v2032, %v2043
        %v2048 = vmul.f32 %v2026, %v1600
        %v2049 = vmul.f32 %v2027, %v1600
        %v2050 = vmul.f32 %v2028, %v1600
        %v2054 = vrot.slane %v2048, 2
        %v2055 = vrot.slane %v2049, 2
        %v2056 = vsel %vm1608, %v2054, %v2055
        %v2057 = vrot.slane %v2050, 2
        %v2058 = vsel %vm1608, %v2055, %v2057
        %v2061 = vadd.f32 %v2046, %v2056
        %v2062 = vadd.f32 %v2047, %v2058
        %v2063 = vld [vmem:[%s867] sm:$0xff]
        %v2064 = vld [vmem:[%s867 + $0x8] sm:$0xff]
        %v2065 = vld [vmem:[%s867 + $0x10] sm:$0xff]
        %v2066 = vmul.f32 %v2063, %v1625
        %v2067 = vmul.f32 %v2064, %v1625
        %v2068 = vadd.f32 %v2061, %v2066
        %v2069 = vadd.f32 %v2062, %v2067
        %v2070 = vmul.f32 %v2063, %v1635
        %v2071 = vmul.f32 %v2064, %v1635
        %v2072 = vmul.f32 %v2065, %v1635
        %v2076 = vrot.slane %v2070, 1
        %v2077 = vrot.slane %v2071, 1
        %v2078 = vsel %vm1586, %v2076, %v2077
        %v2079 = vrot.slane %v2072, 1
        %v2080 = vsel %vm1586, %v2077, %v2079
        %v2083 = vadd.f32 %v2068, %v2078
        %v2084 = vadd.f32 %v2069, %v2080
        %v2085 = vmul.f32 %v2063, %v1656
        %v2086 = vmul.f32 %v2064, %v1656
        %v2087 = vmul.f32 %v2065, %v1656
        %v2091 = vrot.slane %v2085, 2
        %v2092 = vrot.slane %v2086, 2
        %v2093 = vsel %vm1608, %v2091, %v2092
        %v2094 = vrot.slane %v2087, 2
        %v2095 = vsel %vm1608, %v2092, %v2094
        %v2098 = vadd.f32 %v2083, %v2093
        %v2099 = vadd.f32 %v2084, %v2095
        %v2100 = vld [vmem:[%s982] sm:$0xff]
        %v2101 = vld [vmem:[%s982 + $0x8] sm:$0xff]
        %v2102 = vld [vmem:[%s982 + $0x10] sm:$0xff]
        %v2103 = vmul.f32 %v2100, %v1680
        %v2104 = vmul.f32 %v2101, %v1680
        %v2105 = vadd.f32 %v2098, %v2103
        %v2106 = vadd.f32 %v2099, %v2104
        %v2107 = vmul.f32 %v2100, %v1690
        %v2108 = vmul.f32 %v2101, %v1690
        %v2109 = vmul.f32 %v2102, %v1690
        %v2113 = vrot.slane %v2107, 1
        %v2114 = vrot.slane %v2108, 1
        %v2115 = vsel %vm1586, %v2113, %v2114
        %v2116 = vrot.slane %v2109, 1
        %v2117 = vsel %vm1586, %v2114, %v2116
        %v2120 = vadd.f32 %v2105, %v2115
        %v2121 = vadd.f32 %v2106, %v2117
        %v2122 = vmul.f32 %v2100, %v1711
        %v2123 = vmul.f32 %v2101, %v1711
        %v2124 = vmul.f32 %v2102, %v1711
        %v2128 = vrot.slane %v2122, 2
        %v2129 = vrot.slane %v2123, 2
        %v2130 = vsel %vm1608, %v2128, %v2129
        %v2131 = vrot.slane %v2124, 2
        %v2132 = vsel %vm1608, %v2129, %v2131
        %v2135 = vadd.f32 %v2120, %v2130
        %v2136 = vadd.f32 %v2121, %v2132
        %v2137 = vadd.f32 %v2135, %v1732
        %v2138 = vadd.f32 %v2136, %v1732
        %v2139 = vmax.f32 %v2137, 0.0
        %v2140 = vmax.f32 %v2138, 0.0
        %v2141 = vmin.f32 %v2139, 6.0
        %v2142 = vmin.f32 %v2140, 6.0
        %2143 = vmatprep.subr.mxu0 0.0
        %2144 = vmatpush1.msra.mxu0 %v360
        %2145 = vmatprep.subr.mxu0 0.0
        %2146 = vmatpush1.msra.mxu0 %v361
        %2147 = vmatprep.subr.mxu0 0.0
        %2148 = vmatpush1.msra.mxu0 %v362
        %2149 = vmatprep.subr.mxu0 0.0
        %2150 = vmatpush1.msra.mxu0 %v363
        %2151 = vmatprep.subr.mxu0 0.0
        %2152 = vmatpush1.msra.mxu0 %v364
        %2153 = vmatprep.subr.mxu0 0.0
        %2154 = vmatpush1.msra.mxu0 %v365
        %2155 = vmatprep.subr.mxu0 0.0
        %2156 = vmatpush1.msra.mxu0 %v366
        %2157 = vmatprep.subr.mxu0 0.0
        %2158 = vmatpush1.msra.mxu0 %v367
        %2159 = vmatprep.subr.mxu0 0.0
        %2160 = vmatpush1.msra.mxu0 %v368
        %2161 = vmatprep.subr.mxu0 0.0
        %2162 = vmatpush1.msra.mxu0 %v369
        %2163 = vmatprep.subr.mxu0 0.0
        %2164 = vmatpush1.msra.mxu0 %v370
        %2165 = vmatprep.subr.mxu0 0.0
        %2166 = vmatpush1.msra.mxu0 %v371
        %2167 = vmatprep.subr.mxu0 0.0
        %2168 = vmatpush1.msra.mxu0 %v372
        %2169 = vmatprep.subr.mxu0 0.0
        %2170 = vmatpush1.msra.mxu0 %v373
        %2171 = vmatprep.subr.mxu0 0.0
        %2172 = vmatpush1.msra.mxu0 %v374
        %2173 = vmatprep.subr.mxu0 0.0
        %2174 = vmatpush1.msra.mxu0 %v375
        %2175 = vmatprep.subr.mxu0 0.0
        %2176 = vmatpush1.msra.mxu0 0.0
        %2177 = vmatprep.subr.mxu0 0.0
        %2178 = vmatpush1.msra.mxu0 0.0
        %2179 = vmatprep.subr.mxu0 0.0
        %2180 = vmatpush1.msra.mxu0 0.0
        %2181 = vmatprep.subr.mxu0 0.0
        %2182 = vmatpush1.msra.mxu0 0.0
        %2183 = vmatprep.subr.mxu0 0.0
        %2184 = vmatpush1.msra.mxu0 0.0
        %2185 = vmatprep.subr.mxu0 0.0
        %2186 = vmatpush1.msra.mxu0 0.0
        %2187 = vmatprep.subr.mxu0 0.0
        %2188 = vmatpush1.msra.mxu0 0.0
        %2189 = vmatprep.subr.mxu0 0.0
        %2190 = vmatpush1.msra.mxu0 0.0
        %2191 = vmatprep.subr.mxu0 0.0
        %2192 = vmatpush1.msra.mxu0 0.0
        %2193 = vmatprep.subr.mxu0 0.0
        %2194 = vmatpush1.msra.mxu0 0.0
        %2195 = vmatprep.subr.mxu0 0.0
        %2196 = vmatpush1.msra.mxu0 0.0
        %2197 = vmatprep.subr.mxu0 0.0
        %2198 = vmatpush1.msra.mxu0 0.0
        %2199 = vmatprep.subr.mxu0 0.0
        %2200 = vmatpush1.msra.mxu0 0.0
        %2201 = vmatprep.subr.mxu0 0.0
        %2202 = vmatpush1.msra.mxu0 0.0
        %2203 = vmatprep.subr.mxu0 0.0
        %2204 = vmatpush1.msra.mxu0 0.0
        %2205 = vmatprep.subr.mxu0 0.0
        %2206 = vmatpush1.msra.mxu0 0.0
        %2207 = vmatprep.mubr.f32.mxu0 0.0
        %2208 = vmatmul.mubr.f32.gmra.mrb[0].mxu0 %v2141
        %v2209 = vpop.f32.mrb[0].mxu0
        %v2210 = vadd.f32 %v1744, %v2209
        %v2211 = vpop.f32.mrb[0].mxu0
        %2212 = vmatprep.mubr.f32.mxu0 0.0
        %2213 = vmatmul.mubr.f32.gmra.mrb[0].mxu0 %v2142
        %v2214 = vpop.f32.mrb[0].mxu0
        %v2215 = vadd.f32 %v1744, %v2214
        %v2216 = vpop.f32.mrb[0].mxu0
        %2217 = vdwg.mxu0
        %v2218 = vld [vmem:[%s758 + $0x1] sm:$0xff]
        %v2219 = vld [vmem:[%s758 + $0x9] sm:$0xff]
        %v2220 = vadd.f32 %v2210, %v2218
        %v2221 = vadd.f32 %v2215, %v2219
        %s2222 = scalar_lea.vmem %s339, 32 [#allocation9]
        %2223 = vst [vmem:[%s2222] sm:$0xff] %v2220
        %2224 = vst [vmem:[%s2222 + $0x8] sm:$0xff] %v2221
        %v2225 = vld [vmem:[%s867] sm:$0xff]
        %v2226 = vld [vmem:[%s867 + $0x8] sm:$0xff]
        %v2227 = vld [vmem:[%s867 + $0x10] sm:$0xff]
        %v2228 = vmul.f32 %v2225, %v1568
        %v2229 = vmul.f32 %v2226, %v1568
        %v2230 = vadd.f32 %v2228, 0.0
        %v2231 = vadd.f32 %v2229, 0.0
        %v2232 = vmul.f32 %v2225, %v1578
        %v2233 = vmul.f32 %v2226, %v1578
        %v2234 = vmul.f32 %v2227, %v1578
        %v2238 = vrot.slane %v2232, 1
        %v2239 = vrot.slane %v2233, 1
        %v2240 = vsel %vm1586, %v2238, %v2239
        %v2241 = vrot.slane %v2234, 1
        %v2242 = vsel %vm1586, %v2239, %v2241
        %v2245 = vadd.f32 %v2230, %v2240
        %v2246 = vadd.f32 %v2231, %v2242
        %v2247 = vmul.f32 %v2225, %v1600
        %v2248 = vmul.f32 %v2226, %v1600
        %v2249 = vmul.f32 %v2227, %v1600
        %v2253 = vrot.slane %v2247, 2
        %v2254 = vrot.slane %v2248, 2
        %v2255 = vsel %vm1608, %v2253, %v2254
        %v2256 = vrot.slane %v2249, 2
        %v2257 = vsel %vm1608, %v2254, %v2256
        %v2260 = vadd.f32 %v2245, %v2255
        %v2261 = vadd.f32 %v2246, %v2257
        %v2262 = vld [vmem:[%s982] sm:$0xff]
        %v2263 = vld [vmem:[%s982 + $0x8] sm:$0xff]
        %v2264 = vld [vmem:[%s982 + $0x10] sm:$0xff]
        %v2265 = vmul.f32 %v2262, %v1625
        %v2266 = vmul.f32 %v2263, %v1625
        %v2267 = vadd.f32 %v2260, %v2265
        %v2268 = vadd.f32 %v2261, %v2266
        %v2269 = vmul.f32 %v2262, %v1635
        %v2270 = vmul.f32 %v2263, %v1635
        %v2271 = vmul.f32 %v2264, %v1635
        %v2275 = vrot.slane %v2269, 1
        %v2276 = vrot.slane %v2270, 1
        %v2277 = vsel %vm1586, %v2275, %v2276
        %v2278 = vrot.slane %v2271, 1
        %v2279 = vsel %vm1586, %v2276, %v2278
        %v2282 = vadd.f32 %v2267, %v2277
        %v2283 = vadd.f32 %v2268, %v2279
        %v2284 = vmul.f32 %v2262, %v1656
        %v2285 = vmul.f32 %v2263, %v1656
        %v2286 = vmul.f32 %v2264, %v1656
        %v2290 = vrot.slane %v2284, 2
        %v2291 = vrot.slane %v2285, 2
        %v2292 = vsel %vm1608, %v2290, %v2291
        %v2293 = vrot.slane %v2286, 2
        %v2294 = vsel %vm1608, %v2291, %v2293
        %v2297 = vadd.f32 %v2282, %v2292
        %v2298 = vadd.f32 %v2283, %v2294
        %v2299 = vld [vmem:[%s1097] sm:$0xff]
        %v2300 = vld [vmem:[%s1097 + $0x8] sm:$0xff]
        %v2301 = vld [vmem:[%s1097 + $0x10] sm:$0xff]
        %v2302 = vmul.f32 %v2299, %v1680
        %v2303 = vmul.f32 %v2300, %v1680
        %v2304 = vadd.f32 %v2297, %v2302
        %v2305 = vadd.f32 %v2298, %v2303
        %v2306 = vmul.f32 %v2299, %v1690
        %v2307 = vmul.f32 %v2300, %v1690
        %v2308 = vmul.f32 %v2301, %v1690
        %v2312 = vrot.slane %v2306, 1
        %v2313 = vrot.slane %v2307, 1
        %v2314 = vsel %vm1586, %v2312, %v2313
        %v2315 = vrot.slane %v2308, 1
        %v2316 = vsel %vm1586, %v2313, %v2315
        %v2319 = vadd.f32 %v2304, %v2314
        %v2320 = vadd.f32 %v2305, %v2316
        %v2321 = vmul.f32 %v2299, %v1711
        %v2322 = vmul.f32 %v2300, %v1711
        %v2323 = vmul.f32 %v2301, %v1711
        %v2327 = vrot.slane %v2321, 2
        %v2328 = vrot.slane %v2322, 2
        %v2329 = vsel %vm1608, %v2327, %v2328
        %v2330 = vrot.slane %v2323, 2
        %v2331 = vsel %vm1608, %v2328, %v2330
        %v2334 = vadd.f32 %v2319, %v2329
        %v2335 = vadd.f32 %v2320, %v2331
        %v2336 = vadd.f32 %v2334, %v1732
        %v2337 = vadd.f32 %v2335, %v1732
        %v2338 = vmax.f32 %v2336, 0.0
        %v2339 = vmax.f32 %v2337, 0.0
        %v2340 = vmin.f32 %v2338, 6.0
        %v2341 = vmin.f32 %v2339, 6.0
        %2342 = vmatprep.subr.mxu0 0.0
        %2343 = vmatpush1.msra.mxu0 %v360
        %2344 = vmatprep.subr.mxu0 0.0
        %2345 = vmatpush1.msra.mxu0 %v361
        %2346 = vmatprep.subr.mxu0 0.0
        %2347 = vmatpush1.msra.mxu0 %v362
        %2348 = vmatprep.subr.mxu0 0.0
        %2349 = vmatpush1.msra.mxu0 %v363
        %2350 = vmatprep.subr.mxu0 0.0
        %2351 = vmatpush1.msra.mxu0 %v364
        %2352 = vmatprep.subr.mxu0 0.0
        %2353 = vmatpush1.msra.mxu0 %v365
        %2354 = vmatprep.subr.mxu0 0.0
        %2355 = vmatpush1.msra.mxu0 %v366
        %2356 = vmatprep.subr.mxu0 0.0
        %2357 = vmatpush1.msra.mxu0 %v367
        %2358 = vmatprep.subr.mxu0 0.0
        %2359 = vmatpush1.msra.mxu0 %v368
        %2360 = vmatprep.subr.mxu0 0.0
        %2361 = vmatpush1.msra.mxu0 %v369
        %2362 = vmatprep.subr.mxu0 0.0
        %2363 = vmatpush1.msra.mxu0 %v370
        %2364 = vmatprep.subr.mxu0 0.0
        %2365 = vmatpush1.msra.mxu0 %v371
        %2366 = vmatprep.subr.mxu0 0.0
        %2367 = vmatpush1.msra.mxu0 %v372
        %2368 = vmatprep.subr.mxu0 0.0
        %2369 = vmatpush1.msra.mxu0 %v373
        %2370 = vmatprep.subr.mxu0 0.0
        %2371 = vmatpush1.msra.mxu0 %v374
        %2372 = vmatprep.subr.mxu0 0.0
        %2373 = vmatpush1.msra.mxu0 %v375
        %2374 = vmatprep.subr.mxu0 0.0
        %2375 = vmatpush1.msra.mxu0 0.0
        %2376 = vmatprep.subr.mxu0 0.0
        %2377 = vmatpush1.msra.mxu0 0.0
        %2378 = vmatprep.subr.mxu0 0.0
        %2379 = vmatpush1.msra.mxu0 0.0
        %2380 = vmatprep.subr.mxu0 0.0
        %2381 = vmatpush1.msra.mxu0 0.0
        %2382 = vmatprep.subr.mxu0 0.0
        %2383 = vmatpush1.msra.mxu0 0.0
        %2384 = vmatprep.subr.mxu0 0.0
        %2385 = vmatpush1.msra.mxu0 0.0
        %2386 = vmatprep.subr.mxu0 0.0
        %2387 = vmatpush1.msra.mxu0 0.0
        %2388 = vmatprep.subr.mxu0 0.0
        %2389 = vmatpush1.msra.mxu0 0.0
        %2390 = vmatprep.subr.mxu0 0.0
        %2391 = vmatpush1.msra.mxu0 0.0
        %2392 = vmatprep.subr.mxu0 0.0
        %2393 = vmatpush1.msra.mxu0 0.0
        %2394 = vmatprep.subr.mxu0 0.0
        %2395 = vmatpush1.msra.mxu0 0.0
        %2396 = vmatprep.subr.mxu0 0.0
        %2397 = vmatpush1.msra.mxu0 0.0
        %2398 = vmatprep.subr.mxu0 0.0
        %2399 = vmatpush1.msra.mxu0 0.0
        %2400 = vmatprep.subr.mxu0 0.0
        %2401 = vmatpush1.msra.mxu0 0.0
        %2402 = vmatprep.subr.mxu0 0.0
        %2403 = vmatpush1.msra.mxu0 0.0
        %2404 = vmatprep.subr.mxu0 0.0
        %2405 = vmatpush1.msra.mxu0 0.0
        %2406 = vmatprep.mubr.f32.mxu0 0.0
        %2407 = vmatmul.mubr.f32.gmra.mrb[0].mxu0 %v2340
        %v2408 = vpop.f32.mrb[0].mxu0
        %v2409 = vadd.f32 %v1744, %v2408
        %v2410 = vpop.f32.mrb[0].mxu0
        %2411 = vmatprep.mubr.f32.mxu0 0.0
        %2412 = vmatmul.mubr.f32.gmra.mrb[0].mxu0 %v2341
        %v2413 = vpop.f32.mrb[0].mxu0
        %v2414 = vadd.f32 %v1744, %v2413
        %v2415 = vpop.f32.mrb[0].mxu0
        %2416 = vdwg.mxu0
        %v2417 = vld [vmem:[%s873 + $0x1] sm:$0xff]
        %v2418 = vld [vmem:[%s873 + $0x9] sm:$0xff]
        %v2419 = vadd.f32 %v2409, %v2417
        %v2420 = vadd.f32 %v2414, %v2418
        %s2421 = scalar_lea.vmem %s339, 48 [#allocation9]
        %2422 = vst [vmem:[%s2421] sm:$0xff] %v2419
        %2423 = vst [vmem:[%s2421 + $0x8] sm:$0xff] %v2420
        %v2424 = vld [vmem:[%s982] sm:$0xff]
        %v2425 = vld [vmem:[%s982 + $0x8] sm:$0xff]
        %v2426 = vld [vmem:[%s982 + $0x10] sm:$0xff]
        %v2427 = vmul.f32 %v2424, %v1568
        %v2428 = vmul.f32 %v2425, %v1568
        %v2429 = vadd.f32 %v2427, 0.0
        %v2430 = vadd.f32 %v2428, 0.0
        %v2431 = vmul.f32 %v2424, %v1578
        %v2432 = vmul.f32 %v2425, %v1578
        %v2433 = vmul.f32 %v2426, %v1578
        %v2437 = vrot.slane %v2431, 1
        %v2438 = vrot.slane %v2432, 1
        %v2439 = vsel %vm1586, %v2437, %v2438
        %v2440 = vrot.slane %v2433, 1
        %v2441 = vsel %vm1586, %v2438, %v2440
        %v2444 = vadd.f32 %v2429, %v2439
        %v2445 = vadd.f32 %v2430, %v2441
        %v2446 = vmul.f32 %v2424, %v1600
        %v2447 = vmul.f32 %v2425, %v1600
        %v2448 = vmul.f32 %v2426, %v1600
        %v2452 = vrot.slane %v2446, 2
        %v2453 = vrot.slane %v2447, 2
        %v2454 = vsel %vm1608, %v2452, %v2453
        %v2455 = vrot.slane %v2448, 2
        %v2456 = vsel %vm1608, %v2453, %v2455
        %v2459 = vadd.f32 %v2444, %v2454
        %v2460 = vadd.f32 %v2445, %v2456
        %v2461 = vld [vmem:[%s1097] sm:$0xff]
        %v2462 = vld [vmem:[%s1097 + $0x8] sm:$0xff]
        %v2463 = vld [vmem:[%s1097 + $0x10] sm:$0xff]
        %v2464 = vmul.f32 %v2461, %v1625
        %v2465 = vmul.f32 %v2462, %v1625
        %v2466 = vadd.f32 %v2459, %v2464
        %v2467 = vadd.f32 %v2460, %v2465
        %v2468 = vmul.f32 %v2461, %v1635
        %v2469 = vmul.f32 %v2462, %v1635
        %v2470 = vmul.f32 %v2463, %v1635
        %v2474 = vrot.slane %v2468, 1
        %v2475 = vrot.slane %v2469, 1
        %v2476 = vsel %vm1586, %v2474, %v2475
        %v2477 = vrot.slane %v2470, 1
        %v2478 = vsel %vm1586, %v2475, %v2477
        %v2481 = vadd.f32 %v2466, %v2476
        %v2482 = vadd.f32 %v2467, %v2478
        %v2483 = vmul.f32 %v2461, %v1656
        %v2484 = vmul.f32 %v2462, %v1656
        %v2485 = vmul.f32 %v2463, %v1656
        %v2489 = vrot.slane %v2483, 2
        %v2490 = vrot.slane %v2484, 2
        %v2491 = vsel %vm1608, %v2489, %v2490
        %v2492 = vrot.slane %v2485, 2
        %v2493 = vsel %vm1608, %v2490, %v2492
        %v2496 = vadd.f32 %v2481, %v2491
        %v2497 = vadd.f32 %v2482, %v2493
        %v2498 = vld [vmem:[%s1212] sm:$0xff]
        %v2499 = vld [vmem:[%s1212 + $0x8] sm:$0xff]
        %v2500 = vld [vmem:[%s1212 + $0x10] sm:$0xff]
        %v2501 = vmul.f32 %v2498, %v1680
        %v2502 = vmul.f32 %v2499, %v1680
        %v2503 = vadd.f32 %v2496, %v2501
        %v2504 = vadd.f32 %v2497, %v2502
        %v2505 = vmul.f32 %v2498, %v1690
        %v2506 = vmul.f32 %v2499, %v1690
        %v2507 = vmul.f32 %v2500, %v1690
        %v2511 = vrot.slane %v2505, 1
        %v2512 = vrot.slane %v2506, 1
        %v2513 = vsel %vm1586, %v2511, %v2512
        %v2514 = vrot.slane %v2507, 1
        %v2515 = vsel %vm1586, %v2512, %v2514
        %v2518 = vadd.f32 %v2503, %v2513
        %v2519 = vadd.f32 %v2504, %v2515
        %v2520 = vmul.f32 %v2498, %v1711
        %v2521 = vmul.f32 %v2499, %v1711
        %v2522 = vmul.f32 %v2500, %v1711
        %v2526 = vrot.slane %v2520, 2
        %v2527 = vrot.slane %v2521, 2
        %v2528 = vsel %vm1608, %v2526, %v2527
        %v2529 = vrot.slane %v2522, 2
        %v2530 = vsel %vm1608, %v2527, %v2529
        %v2533 = vadd.f32 %v2518, %v2528
        %v2534 = vadd.f32 %v2519, %v2530
        %v2535 = vadd.f32 %v2533, %v1732
        %v2536 = vadd.f32 %v2534, %v1732
        %v2537 = vmax.f32 %v2535, 0.0
        %v2538 = vmax.f32 %v2536, 0.0
        %v2539 = vmin.f32 %v2537, 6.0
        %v2540 = vmin.f32 %v2538, 6.0
        %2541 = vmatprep.subr.mxu0 0.0
        %2542 = vmatpush1.msra.mxu0 %v360
        %2543 = vmatprep.subr.mxu0 0.0
        %2544 = vmatpush1.msra.mxu0 %v361
        %2545 = vmatprep.subr.mxu0 0.0
        %2546 = vmatpush1.msra.mxu0 %v362
        %2547 = vmatprep.subr.mxu0 0.0
        %2548 = vmatpush1.msra.mxu0 %v363
        %2549 = vmatprep.subr.mxu0 0.0
        %2550 = vmatpush1.msra.mxu0 %v364
        %2551 = vmatprep.subr.mxu0 0.0
        %2552 = vmatpush1.msra.mxu0 %v365
        %2553 = vmatprep.subr.mxu0 0.0
        %2554 = vmatpush1.msra.mxu0 %v366
        %2555 = vmatprep.subr.mxu0 0.0
        %2556 = vmatpush1.msra.mxu0 %v367
        %2557 = vmatprep.subr.mxu0 0.0
        %2558 = vmatpush1.msra.mxu0 %v368
        %2559 = vmatprep.subr.mxu0 0.0
        %2560 = vmatpush1.msra.mxu0 %v369
        %2561 = vmatprep.subr.mxu0 0.0
        %2562 = vmatpush1.msra.mxu0 %v370
        %2563 = vmatprep.subr.mxu0 0.0
        %2564 = vmatpush1.msra.mxu0 %v371
        %2565 = vmatprep.subr.mxu0 0.0
        %2566 = vmatpush1.msra.mxu0 %v372
        %2567 = vmatprep.subr.mxu0 0.0
        %2568 = vmatpush1.msra.mxu0 %v373
        %2569 = vmatprep.subr.mxu0 0.0
        %2570 = vmatpush1.msra.mxu0 %v374
        %2571 = vmatprep.subr.mxu0 0.0
        %2572 = vmatpush1.msra.mxu0 %v375
        %2573 = vmatprep.subr.mxu0 0.0
        %2574 = vmatpush1.msra.mxu0 0.0
        %2575 = vmatprep.subr.mxu0 0.0
        %2576 = vmatpush1.msra.mxu0 0.0
        %2577 = vmatprep.subr.mxu0 0.0
        %2578 = vmatpush1.msra.mxu0 0.0
        %2579 = vmatprep.subr.mxu0 0.0
        %2580 = vmatpush1.msra.mxu0 0.0
        %2581 = vmatprep.subr.mxu0 0.0
        %2582 = vmatpush1.msra.mxu0 0.0
        %2583 = vmatprep.subr.mxu0 0.0
        %2584 = vmatpush1.msra.mxu0 0.0
        %2585 = vmatprep.subr.mxu0 0.0
        %2586 = vmatpush1.msra.mxu0 0.0
        %2587 = vmatprep.subr.mxu0 0.0
        %2588 = vmatpush1.msra.mxu0 0.0
        %2589 = vmatprep.subr.mxu0 0.0
        %2590 = vmatpush1.msra.mxu0 0.0
        %2591 = vmatprep.subr.mxu0 0.0
        %2592 = vmatpush1.msra.mxu0 0.0
        %2593 = vmatprep.subr.mxu0 0.0
        %2594 = vmatpush1.msra.mxu0 0.0
        %2595 = vmatprep.subr.mxu0 0.0
        %2596 = vmatpush1.msra.mxu0 0.0
        %2597 = vmatprep.subr.mxu0 0.0
        %2598 = vmatpush1.msra.mxu0 0.0
        %2599 = vmatprep.subr.mxu0 0.0
        %2600 = vmatpush1.msra.mxu0 0.0
        %2601 = vmatprep.subr.mxu0 0.0
        %2602 = vmatpush1.msra.mxu0 0.0
        %2603 = vmatprep.subr.mxu0 0.0
        %2604 = vmatpush1.msra.mxu0 0.0
        %2605 = vmatprep.mubr.f32.mxu0 0.0
        %2606 = vmatmul.mubr.f32.gmra.mrb[0].mxu0 %v2539
        %v2607 = vpop.f32.mrb[0].mxu0
        %v2608 = vadd.f32 %v1744, %v2607
        %v2609 = vpop.f32.mrb[0].mxu0
        %2610 = vmatprep.mubr.f32.mxu0 0.0
        %2611 = vmatmul.mubr.f32.gmra.mrb[0].mxu0 %v2540
        %v2612 = vpop.f32.mrb[0].mxu0
        %v2613 = vadd.f32 %v1744, %v2612
        %v2614 = vpop.f32.mrb[0].mxu0
        %2615 = vdwg.mxu0
        %v2616 = vld [vmem:[%s988 + $0x1] sm:$0xff]
        %v2617 = vld [vmem:[%s988 + $0x9] sm:$0xff]
        %v2618 = vadd.f32 %v2608, %v2616
        %v2619 = vadd.f32 %v2613, %v2617
        %s2620 = scalar_lea.vmem %s339, 64 [#allocation9]
        %2621 = vst [vmem:[%s2620] sm:$0xff] %v2618
        %2622 = vst [vmem:[%s2620 + $0x8] sm:$0xff] %v2619
        %v2623 = vld [vmem:[%s1097] sm:$0xff]
        %v2624 = vld [vmem:[%s1097 + $0x8] sm:$0xff]
        %v2625 = vld [vmem:[%s1097 + $0x10] sm:$0xff]
        %v2626 = vmul.f32 %v2623, %v1568
        %v2627 = vmul.f32 %v2624, %v1568
        %v2628 = vadd.f32 %v2626, 0.0
        %v2629 = vadd.f32 %v2627, 0.0
        %v2630 = vmul.f32 %v2623, %v1578
        %v2631 = vmul.f32 %v2624, %v1578
        %v2632 = vmul.f32 %v2625, %v1578
        %v2636 = vrot.slane %v2630, 1
        %v2637 = vrot.slane %v2631, 1
        %v2638 = vsel %vm1586, %v2636, %v2637
        %v2639 = vrot.slane %v2632, 1
        %v2640 = vsel %vm1586, %v2637, %v2639
        %v2643 = vadd.f32 %v2628, %v2638
        %v2644 = vadd.f32 %v2629, %v2640
        %v2645 = vmul.f32 %v2623, %v1600
        %v2646 = vmul.f32 %v2624, %v1600
        %v2647 = vmul.f32 %v2625, %v1600
        %v2651 = vrot.slane %v2645, 2
        %v2652 = vrot.slane %v2646, 2
        %v2653 = vsel %vm1608, %v2651, %v2652
        %v2654 = vrot.slane %v2647, 2
        %v2655 = vsel %vm1608, %v2652, %v2654
        %v2658 = vadd.f32 %v2643, %v2653
        %v2659 = vadd.f32 %v2644, %v2655
        %v2660 = vld [vmem:[%s1212] sm:$0xff]
        %v2661 = vld [vmem:[%s1212 + $0x8] sm:$0xff]
        %v2662 = vld [vmem:[%s1212 + $0x10] sm:$0xff]
        %v2663 = vmul.f32 %v2660, %v1625
        %v2664 = vmul.f32 %v2661, %v1625
        %v2665 = vadd.f32 %v2658, %v2663
        %v2666 = vadd.f32 %v2659, %v2664
        %v2667 = vmul.f32 %v2660, %v1635
        %v2668 = vmul.f32 %v2661, %v1635
        %v2669 = vmul.f32 %v2662, %v1635
        %v2673 = vrot.slane %v2667, 1
        %v2674 = vrot.slane %v2668, 1
        %v2675 = vsel %vm1586, %v2673, %v2674
        %v2676 = vrot.slane %v2669, 1
        %v2677 = vsel %vm1586, %v2674, %v2676
        %v2680 = vadd.f32 %v2665, %v2675
        %v2681 = vadd.f32 %v2666, %v2677
        %v2682 = vmul.f32 %v2660, %v1656
        %v2683 = vmul.f32 %v2661, %v1656
        %v2684 = vmul.f32 %v2662, %v1656
        %v2688 = vrot.slane %v2682, 2
        %v2689 = vrot.slane %v2683, 2
        %v2690 = vsel %vm1608, %v2688, %v2689
        %v2691 = vrot.slane %v2684, 2
        %v2692 = vsel %vm1608, %v2689, %v2691
        %v2695 = vadd.f32 %v2680, %v2690
        %v2696 = vadd.f32 %v2681, %v2692
        %v2697 = vld [vmem:[%s1327] sm:$0xff]
        %v2698 = vld [vmem:[%s1327 + $0x8] sm:$0xff]
        %v2699 = vld [vmem:[%s1327 + $0x10] sm:$0xff]
        %v2700 = vmul.f32 %v2697, %v1680
        %v2701 = vmul.f32 %v2698, %v1680
        %v2702 = vadd.f32 %v2695, %v2700
        %v2703 = vadd.f32 %v2696, %v2701
        %v2704 = vmul.f32 %v2697, %v1690
        %v2705 = vmul.f32 %v2698, %v1690
        %v2706 = vmul.f32 %v2699, %v1690
        %v2710 = vrot.slane %v2704, 1
        %v2711 = vrot.slane %v2705, 1
        %v2712 = vsel %vm1586, %v2710, %v2711
        %v2713 = vrot.slane %v2706, 1
        %v2714 = vsel %vm1586, %v2711, %v2713
        %v2717 = vadd.f32 %v2702, %v2712
        %v2718 = vadd.f32 %v2703, %v2714
        %v2719 = vmul.f32 %v2697, %v1711
        %v2720 = vmul.f32 %v2698, %v1711
        %v2721 = vmul.f32 %v2699, %v1711
        %v2725 = vrot.slane %v2719, 2
        %v2726 = vrot.slane %v2720, 2
        %v2727 = vsel %vm1608, %v2725, %v2726
        %v2728 = vrot.slane %v2721, 2
        %v2729 = vsel %vm1608, %v2726, %v2728
        %v2732 = vadd.f32 %v2717, %v2727
        %v2733 = vadd.f32 %v2718, %v2729
        %v2734 = vadd.f32 %v2732, %v1732
        %v2735 = vadd.f32 %v2733, %v1732
        %v2736 = vmax.f32 %v2734, 0.0
        %v2737 = vmax.f32 %v2735, 0.0
        %v2738 = vmin.f32 %v2736, 6.0
        %v2739 = vmin.f32 %v2737, 6.0
        %2740 = vmatprep.subr.mxu0 0.0
        %2741 = vmatpush1.msra.mxu0 %v360
        %2742 = vmatprep.subr.mxu0 0.0
        %2743 = vmatpush1.msra.mxu0 %v361
        %2744 = vmatprep.subr.mxu0 0.0
        %2745 = vmatpush1.msra.mxu0 %v362
        %2746 = vmatprep.subr.mxu0 0.0
        %2747 = vmatpush1.msra.mxu0 %v363
        %2748 = vmatprep.subr.mxu0 0.0
        %2749 = vmatpush1.msra.mxu0 %v364
        %2750 = vmatprep.subr.mxu0 0.0
        %2751 = vmatpush1.msra.mxu0 %v365
        %2752 = vmatprep.subr.mxu0 0.0
        %2753 = vmatpush1.msra.mxu0 %v366
        %2754 = vmatprep.subr.mxu0 0.0
        %2755 = vmatpush1.msra.mxu0 %v367
        %2756 = vmatprep.subr.mxu0 0.0
        %2757 = vmatpush1.msra.mxu0 %v368
        %2758 = vmatprep.subr.mxu0 0.0
        %2759 = vmatpush1.msra.mxu0 %v369
        %2760 = vmatprep.subr.mxu0 0.0
        %2761 = vmatpush1.msra.mxu0 %v370
        %2762 = vmatprep.subr.mxu0 0.0
        %2763 = vmatpush1.msra.mxu0 %v371
        %2764 = vmatprep.subr.mxu0 0.0
        %2765 = vmatpush1.msra.mxu0 %v372
        %2766 = vmatprep.subr.mxu0 0.0
        %2767 = vmatpush1.msra.mxu0 %v373
        %2768 = vmatprep.subr.mxu0 0.0
        %2769 = vmatpush1.msra.mxu0 %v374
        %2770 = vmatprep.subr.mxu0 0.0
        %2771 = vmatpush1.msra.mxu0 %v375
        %2772 = vmatprep.subr.mxu0 0.0
        %2773 = vmatpush1.msra.mxu0 0.0
        %2774 = vmatprep.subr.mxu0 0.0
        %2775 = vmatpush1.msra.mxu0 0.0
        %2776 = vmatprep.subr.mxu0 0.0
        %2777 = vmatpush1.msra.mxu0 0.0
        %2778 = vmatprep.subr.mxu0 0.0
        %2779 = vmatpush1.msra.mxu0 0.0
        %2780 = vmatprep.subr.mxu0 0.0
        %2781 = vmatpush1.msra.mxu0 0.0
        %2782 = vmatprep.subr.mxu0 0.0
        %2783 = vmatpush1.msra.mxu0 0.0
        %2784 = vmatprep.subr.mxu0 0.0
        %2785 = vmatpush1.msra.mxu0 0.0
        %2786 = vmatprep.subr.mxu0 0.0
        %2787 = vmatpush1.msra.mxu0 0.0
        %2788 = vmatprep.subr.mxu0 0.0
        %2789 = vmatpush1.msra.mxu0 0.0
        %2790 = vmatprep.subr.mxu0 0.0
        %2791 = vmatpush1.msra.mxu0 0.0
        %2792 = vmatprep.subr.mxu0 0.0
        %2793 = vmatpush1.msra.mxu0 0.0
        %2794 = vmatprep.subr.mxu0 0.0
        %2795 = vmatpush1.msra.mxu0 0.0
        %2796 = vmatprep.subr.mxu0 0.0
        %2797 = vmatpush1.msra.mxu0 0.0
        %2798 = vmatprep.subr.mxu0 0.0
        %2799 = vmatpush1.msra.mxu0 0.0
        %2800 = vmatprep.subr.mxu0 0.0
        %2801 = vmatpush1.msra.mxu0 0.0
        %2802 = vmatprep.subr.mxu0 0.0
        %2803 = vmatpush1.msra.mxu0 0.0
        %2804 = vmatprep.mubr.f32.mxu0 0.0
        %2805 = vmatmul.mubr.f32.gmra.mrb[0].mxu0 %v2738
        %v2806 = vpop.f32.mrb[0].mxu0
        %v2807 = vadd.f32 %v1744, %v2806
        %v2808 = vpop.f32.mrb[0].mxu0
        %2809 = vmatprep.mubr.f32.mxu0 0.0
        %2810 = vmatmul.mubr.f32.gmra.mrb[0].mxu0 %v2739
        %v2811 = vpop.f32.mrb[0].mxu0
        %v2812 = vadd.f32 %v1744, %v2811
        %v2813 = vpop.f32.mrb[0].mxu0
        %2814 = vdwg.mxu0
        %v2815 = vld [vmem:[%s1103 + $0x1] sm:$0xff]
        %v2816 = vld [vmem:[%s1103 + $0x9] sm:$0xff]
        %v2817 = vadd.f32 %v2807, %v2815
        %v2818 = vadd.f32 %v2812, %v2816
        %s2819 = scalar_lea.vmem %s339, 80 [#allocation9]
        %2820 = vst [vmem:[%s2819] sm:$0xff] %v2817
        %2821 = vst [vmem:[%s2819 + $0x8] sm:$0xff] %v2818
        %v2822 = vld [vmem:[%s1212] sm:$0xff]
        %v2823 = vld [vmem:[%s1212 + $0x8] sm:$0xff]
        %v2824 = vld [vmem:[%s1212 + $0x10] sm:$0xff]
        %v2825 = vmul.f32 %v2822, %v1568
        %v2826 = vmul.f32 %v2823, %v1568
        %v2827 = vadd.f32 %v2825, 0.0
        %v2828 = vadd.f32 %v2826, 0.0
        %v2829 = vmul.f32 %v2822, %v1578
        %v2830 = vmul.f32 %v2823, %v1578
        %v2831 = vmul.f32 %v2824, %v1578
        %v2835 = vrot.slane %v2829, 1
        %v2836 = vrot.slane %v2830, 1
        %v2837 = vsel %vm1586, %v2835, %v2836
        %v2838 = vrot.slane %v2831, 1
        %v2839 = vsel %vm1586, %v2836, %v2838
        %v2842 = vadd.f32 %v2827, %v2837
        %v2843 = vadd.f32 %v2828, %v2839
        %v2844 = vmul.f32 %v2822, %v1600
        %v2845 = vmul.f32 %v2823, %v1600
        %v2846 = vmul.f32 %v2824, %v1600
        %v2850 = vrot.slane %v2844, 2
        %v2851 = vrot.slane %v2845, 2
        %v2852 = vsel %vm1608, %v2850, %v2851
        %v2853 = vrot.slane %v2846, 2
        %v2854 = vsel %vm1608, %v2851, %v2853
        %v2857 = vadd.f32 %v2842, %v2852
        %v2858 = vadd.f32 %v2843, %v2854
        %v2859 = vld [vmem:[%s1327] sm:$0xff]
        %v2860 = vld [vmem:[%s1327 + $0x8] sm:$0xff]
        %v2861 = vld [vmem:[%s1327 + $0x10] sm:$0xff]
        %v2862 = vmul.f32 %v2859, %v1625
        %v2863 = vmul.f32 %v2860, %v1625
        %v2864 = vadd.f32 %v2857, %v2862
        %v2865 = vadd.f32 %v2858, %v2863
        %v2866 = vmul.f32 %v2859, %v1635
        %v2867 = vmul.f32 %v2860, %v1635
        %v2868 = vmul.f32 %v2861, %v1635
        %v2872 = vrot.slane %v2866, 1
        %v2873 = vrot.slane %v2867, 1
        %v2874 = vsel %vm1586, %v2872, %v2873
        %v2875 = vrot.slane %v2868, 1
        %v2876 = vsel %vm1586, %v2873, %v2875
        %v2879 = vadd.f32 %v2864, %v2874
        %v2880 = vadd.f32 %v2865, %v2876
        %v2881 = vmul.f32 %v2859, %v1656
        %v2882 = vmul.f32 %v2860, %v1656
        %v2883 = vmul.f32 %v2861, %v1656
        %v2887 = vrot.slane %v2881, 2
        %v2888 = vrot.slane %v2882, 2
        %v2889 = vsel %vm1608, %v2887, %v2888
        %v2890 = vrot.slane %v2883, 2
        %v2891 = vsel %vm1608, %v2888, %v2890
        %v2894 = vadd.f32 %v2879, %v2889
        %v2895 = vadd.f32 %v2880, %v2891
        %v2896 = vld [vmem:[%s1442] sm:$0xff]
        %v2897 = vld [vmem:[%s1442 + $0x8] sm:$0xff]
        %v2898 = vld [vmem:[%s1442 + $0x10] sm:$0xff]
        %v2899 = vmul.f32 %v2896, %v1680
        %v2900 = vmul.f32 %v2897, %v1680
        %v2901 = vadd.f32 %v2894, %v2899
        %v2902 = vadd.f32 %v2895, %v2900
        %v2903 = vmul.f32 %v2896, %v1690
        %v2904 = vmul.f32 %v2897, %v1690
        %v2905 = vmul.f32 %v2898, %v1690
        %v2909 = vrot.slane %v2903, 1
        %v2910 = vrot.slane %v2904, 1
        %v2911 = vsel %vm1586, %v2909, %v2910
        %v2912 = vrot.slane %v2905, 1
        %v2913 = vsel %vm1586, %v2910, %v2912
        %v2916 = vadd.f32 %v2901, %v2911
        %v2917 = vadd.f32 %v2902, %v2913
        %v2918 = vmul.f32 %v2896, %v1711
        %v2919 = vmul.f32 %v2897, %v1711
        %v2920 = vmul.f32 %v2898, %v1711
        %v2924 = vrot.slane %v2918, 2
        %v2925 = vrot.slane %v2919, 2
        %v2926 = vsel %vm1608, %v2924, %v2925
        %v2927 = vrot.slane %v2920, 2
        %v2928 = vsel %vm1608, %v2925, %v2927
        %v2931 = vadd.f32 %v2916, %v2926
        %v2932 = vadd.f32 %v2917, %v2928
        %v2933 = vadd.f32 %v2931, %v1732
        %v2934 = vadd.f32 %v2932, %v1732
        %v2935 = vmax.f32 %v2933, 0.0
        %v2936 = vmax.f32 %v2934, 0.0
        %v2937 = vmin.f32 %v2935, 6.0
        %v2938 = vmin.f32 %v2936, 6.0
        %2939 = vmatprep.subr.mxu0 0.0
        %2940 = vmatpush1.msra.mxu0 %v360
        %2941 = vmatprep.subr.mxu0 0.0
        %2942 = vmatpush1.msra.mxu0 %v361
        %2943 = vmatprep.subr.mxu0 0.0
        %2944 = vmatpush1.msra.mxu0 %v362
        %2945 = vmatprep.subr.mxu0 0.0
        %2946 = vmatpush1.msra.mxu0 %v363
        %2947 = vmatprep.subr.mxu0 0.0
        %2948 = vmatpush1.msra.mxu0 %v364
        %2949 = vmatprep.subr.mxu0 0.0
        %2950 = vmatpush1.msra.mxu0 %v365
        %2951 = vmatprep.subr.mxu0 0.0
        %2952 = vmatpush1.msra.mxu0 %v366
        %2953 = vmatprep.subr.mxu0 0.0
        %2954 = vmatpush1.msra.mxu0 %v367
        %2955 = vmatprep.subr.mxu0 0.0
        %2956 = vmatpush1.msra.mxu0 %v368
        %2957 = vmatprep.subr.mxu0 0.0
        %2958 = vmatpush1.msra.mxu0 %v369
        %2959 = vmatprep.subr.mxu0 0.0
        %2960 = vmatpush1.msra.mxu0 %v370
        %2961 = vmatprep.subr.mxu0 0.0
        %2962 = vmatpush1.msra.mxu0 %v371
        %2963 = vmatprep.subr.mxu0 0.0
        %2964 = vmatpush1.msra.mxu0 %v372
        %2965 = vmatprep.subr.mxu0 0.0
        %2966 = vmatpush1.msra.mxu0 %v373
        %2967 = vmatprep.subr.mxu0 0.0
        %2968 = vmatpush1.msra.mxu0 %v374
        %2969 = vmatprep.subr.mxu0 0.0
        %2970 = vmatpush1.msra.mxu0 %v375
        %2971 = vmatprep.subr.mxu0 0.0
        %2972 = vmatpush1.msra.mxu0 0.0
        %2973 = vmatprep.subr.mxu0 0.0
        %2974 = vmatpush1.msra.mxu0 0.0
        %2975 = vmatprep.subr.mxu0 0.0
        %2976 = vmatpush1.msra.mxu0 0.0
        %2977 = vmatprep.subr.mxu0 0.0
        %2978 = vmatpush1.msra.mxu0 0.0
        %2979 = vmatprep.subr.mxu0 0.0
        %2980 = vmatpush1.msra.mxu0 0.0
        %2981 = vmatprep.subr.mxu0 0.0
        %2982 = vmatpush1.msra.mxu0 0.0
        %2983 = vmatprep.subr.mxu0 0.0
        %2984 = vmatpush1.msra.mxu0 0.0
        %2985 = vmatprep.subr.mxu0 0.0
        %2986 = vmatpush1.msra.mxu0 0.0
        %2987 = vmatprep.subr.mxu0 0.0
        %2988 = vmatpush1.msra.mxu0 0.0
        %2989 = vmatprep.subr.mxu0 0.0
        %2990 = vmatpush1.msra.mxu0 0.0
        %2991 = vmatprep.subr.mxu0 0.0
        %2992 = vmatpush1.msra.mxu0 0.0
        %2993 = vmatprep.subr.mxu0 0.0
        %2994 = vmatpush1.msra.mxu0 0.0
        %2995 = vmatprep.subr.mxu0 0.0
        %2996 = vmatpush1.msra.mxu0 0.0
        %2997 = vmatprep.subr.mxu0 0.0
        %2998 = vmatpush1.msra.mxu0 0.0
        %2999 = vmatprep.subr.mxu0 0.0
        %3000 = vmatpush1.msra.mxu0 0.0
        %3001 = vmatprep.subr.mxu0 0.0
        %3002 = vmatpush1.msra.mxu0 0.0
        %3003 = vmatprep.mubr.f32.mxu0 0.0
        %3004 = vmatmul.mubr.f32.gmra.mrb[0].mxu0 %v2937
        %v3005 = vpop.f32.mrb[0].mxu0
        %v3006 = vadd.f32 %v1744, %v3005
        %v3007 = vpop.f32.mrb[0].mxu0
        %3008 = vmatprep.mubr.f32.mxu0 0.0
        %3009 = vmatmul.mubr.f32.gmra.mrb[0].mxu0 %v2938
        %v3010 = vpop.f32.mrb[0].mxu0
        %v3011 = vadd.f32 %v1744, %v3010
        %v3012 = vpop.f32.mrb[0].mxu0
        %3013 = vdwg.mxu0
        %v3014 = vld [vmem:[%s1218 + $0x1] sm:$0xff]
        %v3015 = vld [vmem:[%s1218 + $0x9] sm:$0xff]
        %v3016 = vadd.f32 %v3006, %v3014
        %v3017 = vadd.f32 %v3011, %v3015
        %s3018 = scalar_lea.vmem %s339, 96 [#allocation9]
        %3019 = vst [vmem:[%s3018] sm:$0xff] %v3016
        %3020 = vst [vmem:[%s3018 + $0x8] sm:$0xff] %v3017
        %v3021 = vld [vmem:[%s1327] sm:$0xff]
        %v3022 = vld [vmem:[%s1327 + $0x8] sm:$0xff]
        %v3023 = vld [vmem:[%s1327 + $0x10] sm:$0xff]
        %v3024 = vmul.f32 %v3021, %v1568
        %v3025 = vmul.f32 %v3022, %v1568
        %v3026 = vadd.f32 %v3024, 0.0
        %v3027 = vadd.f32 %v3025, 0.0
        %v3028 = vmul.f32 %v3021, %v1578
        %v3029 = vmul.f32 %v3022, %v1578
        %v3030 = vmul.f32 %v3023, %v1578
        %v3034 = vrot.slane %v3028, 1
        %v3035 = vrot.slane %v3029, 1
        %v3036 = vsel %vm1586, %v3034, %v3035
        %v3037 = vrot.slane %v3030, 1
        %v3038 = vsel %vm1586, %v3035, %v3037
        %v3041 = vadd.f32 %v3026, %v3036
        %v3042 = vadd.f32 %v3027, %v3038
        %v3043 = vmul.f32 %v3021, %v1600
        %v3044 = vmul.f32 %v3022, %v1600
        %v3045 = vmul.f32 %v3023, %v1600
        %v3049 = vrot.slane %v3043, 2
        %v3050 = vrot.slane %v3044, 2
        %v3051 = vsel %vm1608, %v3049, %v3050
        %v3052 = vrot.slane %v3045, 2
        %v3053 = vsel %vm1608, %v3050, %v3052
        %v3056 = vadd.f32 %v3041, %v3051
        %v3057 = vadd.f32 %v3042, %v3053
        %v3058 = vld [vmem:[%s1442] sm:$0xff]
        %v3059 = vld [vmem:[%s1442 + $0x8] sm:$0xff]
        %v3060 = vld [vmem:[%s1442 + $0x10] sm:$0xff]
        %v3061 = vmul.f32 %v3058, %v1625
        %v3062 = vmul.f32 %v3059, %v1625
        %v3063 = vadd.f32 %v3056, %v3061
        %v3064 = vadd.f32 %v3057, %v3062
        %v3065 = vmul.f32 %v3058, %v1635
        %v3066 = vmul.f32 %v3059, %v1635
        %v3067 = vmul.f32 %v3060, %v1635
        %v3071 = vrot.slane %v3065, 1
        %v3072 = vrot.slane %v3066, 1
        %v3073 = vsel %vm1586, %v3071, %v3072
        %v3074 = vrot.slane %v3067, 1
        %v3075 = vsel %vm1586, %v3072, %v3074
        %v3078 = vadd.f32 %v3063, %v3073
        %v3079 = vadd.f32 %v3064, %v3075
        %v3080 = vmul.f32 %v3058, %v1656
        %v3081 = vmul.f32 %v3059, %v1656
        %v3082 = vmul.f32 %v3060, %v1656
        %v3086 = vrot.slane %v3080, 2
        %v3087 = vrot.slane %v3081, 2
        %v3088 = vsel %vm1608, %v3086, %v3087
        %v3089 = vrot.slane %v3082, 2
        %v3090 = vsel %vm1608, %v3087, %v3089
        %v3093 = vadd.f32 %v3078, %v3088
        %v3094 = vadd.f32 %v3079, %v3090
        %v3095 = vld [vmem:[%s1557] sm:$0xff]
        %v3096 = vld [vmem:[%s1557 + $0x8] sm:$0xff]
        %v3097 = vld [vmem:[%s1557 + $0x10] sm:$0xff]
        %v3098 = vmul.f32 %v3095, %v1680
        %v3099 = vmul.f32 %v3096, %v1680
        %v3100 = vadd.f32 %v3093, %v3098
        %v3101 = vadd.f32 %v3094, %v3099
        %v3102 = vmul.f32 %v3095, %v1690
        %v3103 = vmul.f32 %v3096, %v1690
        %v3104 = vmul.f32 %v3097, %v1690
        %v3108 = vrot.slane %v3102, 1
        %v3109 = vrot.slane %v3103, 1
        %v3110 = vsel %vm1586, %v3108, %v3109
        %v3111 = vrot.slane %v3104, 1
        %v3112 = vsel %vm1586, %v3109, %v3111
        %v3115 = vadd.f32 %v3100, %v3110
        %v3116 = vadd.f32 %v3101, %v3112
        %v3117 = vmul.f32 %v3095, %v1711
        %v3118 = vmul.f32 %v3096, %v1711
        %v3119 = vmul.f32 %v3097, %v1711
        %v3123 = vrot.slane %v3117, 2
        %v3124 = vrot.slane %v3118, 2
        %v3125 = vsel %vm1608, %v3123, %v3124
        %v3126 = vrot.slane %v3119, 2
        %v3127 = vsel %vm1608, %v3124, %v3126
        %v3130 = vadd.f32 %v3115, %v3125
        %v3131 = vadd.f32 %v3116, %v3127
        %v3132 = vadd.f32 %v3130, %v1732
        %v3133 = vadd.f32 %v3131, %v1732
        %v3134 = vmax.f32 %v3132, 0.0
        %v3135 = vmax.f32 %v3133, 0.0
        %v3136 = vmin.f32 %v3134, 6.0
        %v3137 = vmin.f32 %v3135, 6.0
        %3138 = vmatprep.subr.mxu0 0.0
        %3139 = vmatpush1.msra.mxu0 %v360
        %3140 = vmatprep.subr.mxu0 0.0
        %3141 = vmatpush1.msra.mxu0 %v361
        %3142 = vmatprep.subr.mxu0 0.0
        %3143 = vmatpush1.msra.mxu0 %v362
        %3144 = vmatprep.subr.mxu0 0.0
        %3145 = vmatpush1.msra.mxu0 %v363
        %3146 = vmatprep.subr.mxu0 0.0
        %3147 = vmatpush1.msra.mxu0 %v364
        %3148 = vmatprep.subr.mxu0 0.0
        %3149 = vmatpush1.msra.mxu0 %v365
        %3150 = vmatprep.subr.mxu0 0.0
        %3151 = vmatpush1.msra.mxu0 %v366
        %3152 = vmatprep.subr.mxu0 0.0
        %3153 = vmatpush1.msra.mxu0 %v367
        %3154 = vmatprep.subr.mxu0 0.0
        %3155 = vmatpush1.msra.mxu0 %v368
        %3156 = vmatprep.subr.mxu0 0.0
        %3157 = vmatpush1.msra.mxu0 %v369
        %3158 = vmatprep.subr.mxu0 0.0
        %3159 = vmatpush1.msra.mxu0 %v370
        %3160 = vmatprep.subr.mxu0 0.0
        %3161 = vmatpush1.msra.mxu0 %v371
        %3162 = vmatprep.subr.mxu0 0.0
        %3163 = vmatpush1.msra.mxu0 %v372
        %3164 = vmatprep.subr.mxu0 0.0
        %3165 = vmatpush1.msra.mxu0 %v373
        %3166 = vmatprep.subr.mxu0 0.0
        %3167 = vmatpush1.msra.mxu0 %v374
        %3168 = vmatprep.subr.mxu0 0.0
        %3169 = vmatpush1.msra.mxu0 %v375
        %3170 = vmatprep.subr.mxu0 0.0
        %3171 = vmatpush1.msra.mxu0 0.0
        %3172 = vmatprep.subr.mxu0 0.0
        %3173 = vmatpush1.msra.mxu0 0.0
        %3174 = vmatprep.subr.mxu0 0.0
        %3175 = vmatpush1.msra.mxu0 0.0
        %3176 = vmatprep.subr.mxu0 0.0
        %3177 = vmatpush1.msra.mxu0 0.0
        %3178 = vmatprep.subr.mxu0 0.0
        %3179 = vmatpush1.msra.mxu0 0.0
        %3180 = vmatprep.subr.mxu0 0.0
        %3181 = vmatpush1.msra.mxu0 0.0
        %3182 = vmatprep.subr.mxu0 0.0
        %3183 = vmatpush1.msra.mxu0 0.0
        %3184 = vmatprep.subr.mxu0 0.0
        %3185 = vmatpush1.msra.mxu0 0.0
        %3186 = vmatprep.subr.mxu0 0.0
        %3187 = vmatpush1.msra.mxu0 0.0
        %3188 = vmatprep.subr.mxu0 0.0
        %3189 = vmatpush1.msra.mxu0 0.0
        %3190 = vmatprep.subr.mxu0 0.0
        %3191 = vmatpush1.msra.mxu0 0.0
        %3192 = vmatprep.subr.mxu0 0.0
        %3193 = vmatpush1.msra.mxu0 0.0
        %3194 = vmatprep.subr.mxu0 0.0
        %3195 = vmatpush1.msra.mxu0 0.0
        %3196 = vmatprep.subr.mxu0 0.0
        %3197 = vmatpush1.msra.mxu0 0.0
        %3198 = vmatprep.subr.mxu0 0.0
        %3199 = vmatpush1.msra.mxu0 0.0
        %3200 = vmatprep.subr.mxu0 0.0
        %3201 = vmatpush1.msra.mxu0 0.0
        %3202 = vmatprep.mubr.f32.mxu0 0.0
        %3203 = vmatmul.mubr.f32.gmra.mrb[0].mxu0 %v3136
        %v3204 = vpop.f32.mrb[0].mxu0
        %v3205 = vadd.f32 %v1744, %v3204
        %v3206 = vpop.f32.mrb[0].mxu0
        %3207 = vmatprep.mubr.f32.mxu0 0.0
        %3208 = vmatmul.mubr.f32.gmra.mrb[0].mxu0 %v3137
        %v3209 = vpop.f32.mrb[0].mxu0
        %v3210 = vadd.f32 %v1744, %v3209
        %v3211 = vpop.f32.mrb[0].mxu0
        %3212 = vdwg.mxu0
        %v3213 = vld [vmem:[%s1333 + $0x1] sm:$0xff]
        %v3214 = vld [vmem:[%s1333 + $0x9] sm:$0xff]
        %v3215 = vadd.f32 %v3205, %v3213
        %v3216 = vadd.f32 %v3210, %v3214
        %s3217 = scalar_lea.vmem %s339, 112 [#allocation9]
        %3218 = vst [vmem:[%s3217] sm:$0xff] %v3215
        %3219 = vst [vmem:[%s3217 + $0x8] sm:$0xff] %v3216
        %s3220 = sand.u32 %s199, 1
        %s3221 = scalar_lea.sflag [#allocation5], %s3220
        %s3222 = sand.u32 %s199, 1
        %s3223 = smul.addr %s3222, 128
        %s3224 = scalar_lea.vmem [#allocation9], %s3223
        // Predicated region
        $region61: #{tpu_custom_call.1} parent=47 // pred_check
          %p3225 = pneg %p209
        $region62: #{tpu_custom_call.1} parent=47 // pred_check_branch
          %3227 = sbr.rel (%p3225) target = $region64
        $region63: #{tpu_custom_call.1} parent=47 // pred_region
          %s3228 = smul.u32 8, %s30
          %s3230 = ssub.s32 2048, 2048
          %3231 = vsyncadd %s3221, %s3230
          %s3232 = smul.addr %s3228, 2
          %s3233 = smul.addr %s29, 32
          %s3234 = sadd.s32 %s3232, %s3233
          %s3235 = smul.addr %s3234, 128
          %s3236 = scalar_lea.hbm %s7, %s3235
          %s3237 = sshll.u32 %s3224, 4
          %s3238 = int_to_ptr.vmem [resolvable:$true] %s3237
          %3243 = dma.vmem_to_hbm [thread:$0]  %s3238, 2048, %s3236, %s3221, 128, 128, 8
        $region64: #{tpu_custom_call.1} parent=47 // pred_fallthru
          _
      $region48: #{tpu_custom_call.1} parent=5 // pred_fallthru
        _
      %p3244 = scmp.le.s32.totalorder 2, %s20
      // Predicated region
      $region65: #{tpu_custom_call.1} parent=5 // pred_check
        %p3245 = pneg %p3244
      $region66: #{tpu_custom_call.1} parent=5 // pred_check_branch
        %3247 = sbr.rel (%p3245) target = $region68
      $region67: #{tpu_custom_call.1} parent=5 // pred_region
        %s3248 = ssub.s32 %s20, 2
        // Predicated region
        $region69: #{tpu_custom_call.1} parent=67 // pred_check
          %p3249 = pneg %p215
        $region70: #{tpu_custom_call.1} parent=67 // pred_check_branch
          %3251 = sbr.rel (%p3249) target = $region72
        $region71: #{tpu_custom_call.1} parent=67 // pred_region
          %s3252 = sand.u32 %s200, 1
          %s3253 = scalar_lea.sflag [#allocation5], %s3252
          %s3254 = sand.u32 %s200, 1
          %s3255 = smul.addr %s3254, 128
          %s3256 = scalar_lea.vmem [#allocation9], %s3255
          %3257 = dma.done %s3253, 2048
        $region72: #{tpu_custom_call.1} parent=67 // pred_fallthru
          _
      $region68: #{tpu_custom_call.1} parent=5 // pred_fallthru
        _
    $region6: #{tpu_custom_call.1} parent=1 // loop_footer
      %s24 = sadd.s32 1, %s20
    $region7: #{tpu_custom_call.1} parent=1 // loop_footer_branch
      %19 = sbr.rel target = $region3
    $region8: #{tpu_custom_call.1} parent=1 // loop_exit
      _
    %3258 = vsyncpa [#allocation4], 1
    %s3259 = scalar_lea.sflag [#allocation4], 1
    %3260 = vsyncpa %s3259, 1
    %3261 = vsyncpa [#allocation7], 1
    %3262 = vsyncpa [#allocation5], 1
    %s3263 = scalar_lea.sflag [#allocation5], 1
    %3264 = vsyncpa %s3263, 1

</llo_original>
